<compile_context>
chip_gen: v7x
topology: tpu7x:2x2x1
jax: 0.10.0
libtpu: 0.0.40
codegen_flags: <defaults>
</compile_context>

<pallas_src>
import functools
import math

import jax
import jax.numpy as jnp
from jax.experimental import pallas as pl
from jax.experimental.pallas import tpu as pltpu


def _layernorm(x, w, b, eps=1e-6):
    # x: (T, E) f32, w/b: (1, E) f32 -- statistics in f32.  Module uses nn.LayerNorm(eps=1e-06).
    mean = jnp.mean(x, axis=-1, keepdims=True)
    var = jnp.mean((x - mean) ** 2, axis=-1, keepdims=True)
    return (x - mean) * jax.lax.rsqrt(var + eps) * w + b


def encoder_kernel(xq_ref, xkv_ref,
                   wqkv_ref, bqkv_ref, wo_ref, bo_ref,
                   ln1w_ref, ln1b_ref, w1_ref, b1_ref, w2_ref, b2_ref,
                   ln2w_ref, ln2b_ref,
                   out_ref, q_scr, kv_scr, attn_scr, *, num_heads):
    TQ, E = xq_ref.shape              # query tile
    S = xkv_ref.shape[0]              # full sequence
    D = E // num_heads
    scale = 1.0 / math.sqrt(D)

    # ---- Fused Q/K/V projection: once per batch row (first q-tile). ----
    # One lane-dense (S,E)@(E,3E) bf16 MXU matmul; pre-scaled Q and K|V are cached in
    # lane-dense bf16 VMEM scratch (no lane padding) and reused by the remaining q-tiles.
    @pl.when(pl.program_id(1) == 0)
    def _():
        qkv = jnp.dot(xkv_ref[...], wqkv_ref[...],
                      preferred_element_type=jnp.float32) + bqkv_ref[...]        # (S, 3E) f32
        q_scr[...] = (qkv[:, :E] * scale).astype(jnp.bfloat16)                   # scaled Q
        kv_scr[...] = qkv[:, E:].astype(jnp.bfloat16)                            # K | V

    x_q = xq_ref[...]                                       # (TQ, E) f32 residual path
    q0 = pl.multiple_of(pl.program_id(1) * TQ, TQ)
    q_tile = q_scr[pl.ds(q0, TQ), :]                        # (TQ, E) bf16, pre-scaled

    # ---- Multi-head self-attention ----
    # Per-head scores via dot_general (no explicit K transpose), unnormalized softmax with
    # deferred normalization on the (TQ,D) result, per-head outputs written lane-offset into
    # attn_scr, then ONE fused (TQ,E)@(E,E) output projection after the loop.
    for h in range(num_heads):   # static unroll; TODO(synk): lax.fori_loop(unroll=True) if heads>=8
        lo = h * D
        q_h = q_tile[:, lo:lo + D]                                               # (TQ, D) bf16
        k_h = kv_scr[:, lo:lo + D]                                               # (S, D)  bf16
        v_h = kv_scr[:, E + lo:E + lo + D]                                       # (S, D)  bf16
        s = jax.lax.dot_general(q_h, k_h, (((1,), (1,)), ((), ())),
                                preferred_element_type=jnp.float32)              # (TQ, S) f32
        s = s - jnp.max(s, axis=-1, keepdims=True)                               # f32 stats
        p = jnp.exp(s)
        denom = jnp.sum(p, axis=-1, keepdims=True)                               # (TQ, 1)
        o_h = jnp.dot(p.astype(jnp.bfloat16), v_h,
                      preferred_element_type=jnp.float32)                        # (TQ, D) f32
        o_h = o_h * pl.reciprocal(denom, approx=True)                            # deferred norm
        attn_scr[:, lo:lo + D] = o_h.astype(jnp.bfloat16)

    attn = jnp.dot(attn_scr[...], wo_ref[...],
                   preferred_element_type=jnp.float32) + bo_ref[...]             # (TQ, E) f32

    # dropout1: identity at inference
    out1 = _layernorm(x_q + attn, ln1w_ref[...], ln1b_ref[...])

    # ---- Feed-forward ----
    h1 = jnp.dot(out1.astype(jnp.bfloat16), w1_ref[...],
                 preferred_element_type=jnp.float32) + b1_ref[...]
    h1 = jnp.maximum(h1, 0.0)
    ffn = jnp.dot(h1.astype(jnp.bfloat16), w2_ref[...],
                  preferred_element_type=jnp.float32) + b2_ref[...]

    # dropout2: identity at inference
    out_ref[...] = _layernorm(out1 + ffn, ln2w_ref[...], ln2b_ref[...]).astype(out_ref.dtype)


def _choose_tq(S):
    # Prefer large, 16-aligned tiles (keeps MXU M-dim full and dynamic row slices tile-aligned);
    # otherwise fall back to the whole sequence (single q-tile, no dynamic slicing at all).
    for cand in (256, 128, 64, 32, 16):
        if S % cand == 0:
            return cand
    return S


def transformer_encoder(x, params, num_heads, tq=None):
    B, S, E = x.shape
    F = params["w1"].shape[1]
    assert E % num_heads == 0, "embed_dim must be divisible by num_heads"
    assert E % 128 == 0, "embed_dim must be lane-aligned (multiple of 128)"
    if tq is None:
        tq = _choose_tq(S)
    assert S % tq == 0
    n_q = S // tq

    bf = lambda a: a.astype(jnp.bfloat16)
    # Fused, lane-dense MXU weight layouts (prepared on the host).
    wqkv = bf(jnp.concatenate([params["wq"], params["wk"], params["wv"]], axis=1))   # (E, 3E) bf16
    bqkv = jnp.concatenate([params["bq"], params["bk"], params["bv"]])[None, :]      # (1, 3E) f32
    wo, bo = bf(params["wo"]), params["bo"][None, :]                                 # (E, E) bf16
    w1, b1 = bf(params["w1"]), params["b1"][None, :]
    w2, b2 = bf(params["w2"]), params["b2"][None, :]
    ln1w, ln1b = params["ln1w"][None, :], params["ln1b"][None, :]
    ln2w, ln2b = params["ln2w"][None, :], params["ln2b"][None, :]
    x_kv = bf(x)          # bf16 K/V/Q-projection source (halves that VMEM buffer + HBM read)

    consts = (wqkv, bqkv, wo, bo, ln1w, ln1b, w1, b1, w2, b2, ln2w, ln2b)

    # ---- VMEM budget (lane-dense scratch => no hidden lane padding to account for) ----
    bf16_b, f32_b = 2, 4
    weight_bytes = bf16_b * (4 * E * E + 2 * E * F) + f32_b * (9 * E + F)
    io_bytes = 2 * f32_b * 2 * tq * E + bf16_b * S * E          # dbuf q/out tiles + 1x bf16 x_kv
    scratch_bytes = bf16_b * (3 * S * E + tq * E)                # Q + K|V + attn scratch
    work_bytes = f32_b * (3 * S * E + tq * S + tq * F + 8 * tq * E)
    try:
        cap = int(getattr(pltpu.get_tpu_info(), "vmem_capacity_bytes", 64 * 1024 * 1024))
    except Exception:
        cap = 64 * 1024 * 1024
    cap = (cap * 85) // 100      # leave headroom for compiler-internal scratch / semaphores

    flops = 2 * B * S * (4 * E * E + 2 * E * F) + 4 * B * S * S * E
    cost = pl.CostEstimate(
        flops=flops,
        transcendentals=B * num_heads * S * S,
        bytes_accessed=weight_bytes + B * S * E * (f32_b + bf16_b) + B * S * E * f32_b)

    kernel = functools.partial(encoder_kernel, num_heads=num_heads)
    out_shape = jax.ShapeDtypeStruct((B, S, E), jnp.float32)

    def run(single_buffer_consts):
        def const_spec(a):
            nd = a.ndim
            idx = lambda *_: (0,) * nd
            if single_buffer_consts:
                return pl.BlockSpec(a.shape, idx, pipeline_mode=pl.Buffered(1))
            return pl.BlockSpec(a.shape, idx)

        xkv_idx = lambda b_, q_: (b_, 0, 0)
        if single_buffer_consts:
            xkv_spec = pl.BlockSpec((pl.Squeezed(), S, E), xkv_idx,
                                    pipeline_mode=pl.Buffered(1))
        else:
            xkv_spec = pl.BlockSpec((pl.Squeezed(), S, E), xkv_idx)

        in_specs = ([pl.BlockSpec((pl.Squeezed(), tq, E), lambda b_, q_: (b_, q_, 0)),  # f32 q tile
                     xkv_spec]                                                           # bf16 full row
                    + [const_spec(a) for a in consts])
        out_spec = pl.BlockSpec((pl.Squeezed(), tq, E), lambda b_, q_: (b_, q_, 0))

        needed = ((1 if single_buffer_consts else 2) * weight_bytes
                  + io_bytes + scratch_bytes + work_bytes)
        vmem_limit = int(min(max(needed * 5 // 4, 32 * 1024 * 1024), cap))

        return pl.pallas_call(
            kernel,
            out_shape=out_shape,
            grid=(B, n_q),
            in_specs=in_specs,
            out_specs=out_spec,
            scratch_shapes=[pltpu.VMEM((S, E), jnp.bfloat16),        # pre-scaled Q (lane-dense)
                            pltpu.VMEM((S, 2 * E), jnp.bfloat16),    # K | V       (lane-dense)
                            pltpu.VMEM((tq, E), jnp.bfloat16)],      # per-head attn out (pre out-proj)
            compiler_params=pltpu.CompilerParams(
                dimension_semantics=("parallel", "arbitrary"),
                vmem_limit_bytes=vmem_limit),
            cost_estimate=cost,
        )(x, x_kv, *consts)

    if hasattr(pl, "Buffered"):
        try:
            return run(True)           # single-buffered constant operands (preferred)
        except Exception:
            pass                       # fall back to default double-buffering
    return run(False)


def init_params(key, embed_dim, num_heads, ff_dim):
    ks = jax.random.split(key, 12)
    E, F = embed_dim, ff_dim
    s_e = 1.0 / math.sqrt(E)
    s_f = 1.0 / math.sqrt(F)
    u = lambda k, shape, s: jax.random.uniform(k, shape, jnp.float32, -s, s)
    # Weights stored transposed for the x @ W convention.
    return {
        "wq": u(ks[0], (E, E), s_e), "bq": u(ks[1], (E,), s_e),
        "wk": u(ks[2], (E, E), s_e), "bk": u(ks[3], (E,), s_e),
        "wv": u(ks[4], (E, E), s_e), "bv": u(ks[5], (E,), s_e),
        "wo": u(ks[6], (E, E), s_e), "bo": u(ks[7], (E,), s_e),
        "ln1w": jnp.ones((E,), jnp.float32), "ln1b": jnp.zeros((E,), jnp.float32),
        "w1": u(ks[8], (E, F), s_e), "b1": u(ks[9], (F,), s_e),
        "w2": u(ks[10], (F, E), s_f), "b2": u(ks[11], (E,), s_f),
        "ln2w": jnp.ones((E,), jnp.float32), "ln2b": jnp.zeros((E,), jnp.float32),
    }


def reference_encoder(x, p, num_heads):
    # Pure-JAX reference mirroring the kernel's bf16-input / f32-accumulate matmuls.
    B, S, E = x.shape
    D = E // num_heads
    f32 = jnp.float32
    bf = lambda a: a.astype(jnp.bfloat16)

    def ln(y, w, b):
        m = jnp.mean(y, axis=-1, keepdims=True)
        v = jnp.mean((y - m) ** 2, axis=-1, keepdims=True)
        return (y - m) * jax.lax.rsqrt(v + 1e-6) * w + b

    xb = bf(x)
    q = jnp.einsum("bse,ef->bsf", xb, bf(p["wq"]), preferred_element_type=f32) + p["bq"]
    k = jnp.einsum("bse,ef->bsf", xb, bf(p["wk"]), preferred_element_type=f32) + p["bk"]
    v = jnp.einsum("bse,ef->bsf", xb, bf(p["wv"]), preferred_element_type=f32) + p["bv"]
    q = q * (1.0 / math.sqrt(D))
    qh = bf(q).reshape(B, S, num_heads, D)
    kh = bf(k).reshape(B, S, num_heads, D)
    vh = bf(v).reshape(B, S, num_heads, D)
    s = jnp.einsum("bqhd,bkhd->bhqk", qh, kh, preferred_element_type=f32)
    a = jax.nn.softmax(s, axis=-1)
    o = jnp.einsum("bhqk,bkhd->bqhd", bf(a), vh, preferred_element_type=f32).reshape(B, S, E)
    attn = jnp.einsum("bse,ef->bsf", bf(o), bf(p["wo"]), preferred_element_type=f32) + p["bo"]
    out1 = ln(x + attn, p["ln1w"], p["ln1b"])
    h1 = jnp.maximum(
        jnp.einsum("bse,ef->bsf", bf(out1), bf(p["w1"]), preferred_element_type=f32) + p["b1"],
        0.0)
    ffn = jnp.einsum("bsf,fe->bse", bf(h1), bf(p["w2"]), preferred_element_type=f32) + p["b2"]
    return ln(out1 + ffn, p["ln2w"], p["ln2b"])


if __name__ == "__main__":
    # Small but (8,128)-aligned shapes: B=2, seq=16, embed=128, heads=4, ff=256.
    B, S, E, H, F = 2, 16, 128, 4, 256
    key = jax.random.PRNGKey(0)
    kx, kp = jax.random.split(key)
    x = jax.random.normal(kx, (B, S, E), jnp.float32)
    params = init_params(kp, E, H, F)

    out = transformer_encoder(x, params, H)
    out = jax.block_until_ready(out)

    ref = reference_encoder(x, params, H)
    assert out.shape == (B, S, E)
    err = float(jnp.max(jnp.abs(out - ref)))
    assert err < 2e-2, f"max abs err {err}"
    print("KERNEL_OK")
</pallas_src>

<mosaic_0001>
module attributes {stable_mosaic.version = 11 : i64} {
  func.func @encoder_kernel(%arg0: i32, %arg1: i32, %arg2: memref<1x16x128xf32, #tpu.memory_space<vmem>>, %arg3: memref<1x16x128xbf16, #tpu.memory_space<vmem>>, %arg4: memref<128x384xbf16, #tpu.memory_space<vmem>>, %arg5: memref<1x384xf32, #tpu.memory_space<vmem>>, %arg6: memref<128x128xbf16, #tpu.memory_space<vmem>>, %arg7: memref<1x128xf32, #tpu.memory_space<vmem>>, %arg8: memref<1x128xf32, #tpu.memory_space<vmem>>, %arg9: memref<1x128xf32, #tpu.memory_space<vmem>>, %arg10: memref<128x256xbf16, #tpu.memory_space<vmem>>, %arg11: memref<1x256xf32, #tpu.memory_space<vmem>>, %arg12: memref<256x128xbf16, #tpu.memory_space<vmem>>, %arg13: memref<1x128xf32, #tpu.memory_space<vmem>>, %arg14: memref<1x128xf32, #tpu.memory_space<vmem>>, %arg15: memref<1x128xf32, #tpu.memory_space<vmem>>, %arg16: memref<1x16x128xf32, #tpu.memory_space<vmem>>, %arg17: memref<16x128xbf16, #tpu.memory_space<vmem>>, %arg18: memref<16x256xbf16, #tpu.memory_space<vmem>>, %arg19: memref<16x128xbf16, #tpu.memory_space<vmem>>) attributes {dimension_semantics = [#tpu.dimension_semantics<parallel>, #tpu.dimension_semantics<arbitrary>], iteration_bounds = array<i64: 2, 1>, scalar_prefetch = 0 : i64, scratch_operands = 3 : i64, tpu.core_type = #tpu.core_type<tc>, window_params = [{transform_indices = @transform_0, window_bounds = array<i64: 1, 16, 128>}, {pipeline_mode = #tpu.pipeline_mode<synchronous>, transform_indices = @transform_1, window_bounds = array<i64: 1, 16, 128>}, {pipeline_mode = #tpu.pipeline_mode<synchronous>, transform_indices = @transform_2, window_bounds = array<i64: 128, 384>}, {pipeline_mode = #tpu.pipeline_mode<synchronous>, transform_indices = @transform_3, window_bounds = array<i64: 1, 384>}, {pipeline_mode = #tpu.pipeline_mode<synchronous>, transform_indices = @transform_4, window_bounds = array<i64: 128, 128>}, {pipeline_mode = #tpu.pipeline_mode<synchronous>, transform_indices = @transform_5, window_bounds = array<i64: 1, 128>}, {pipeline_mode = #tpu.pipeline_mode<synchronous>, transform_indices = @transform_6, window_bounds = array<i64: 1, 128>}, {pipeline_mode = #tpu.pipeline_mode<synchronous>, transform_indices = @transform_7, window_bounds = array<i64: 1, 128>}, {pipeline_mode = #tpu.pipeline_mode<synchronous>, transform_indices = @transform_8, window_bounds = array<i64: 128, 256>}, {pipeline_mode = #tpu.pipeline_mode<synchronous>, transform_indices = @transform_9, window_bounds = array<i64: 1, 256>}, {pipeline_mode = #tpu.pipeline_mode<synchronous>, transform_indices = @transform_10, window_bounds = array<i64: 256, 128>}, {pipeline_mode = #tpu.pipeline_mode<synchronous>, transform_indices = @transform_11, window_bounds = array<i64: 1, 128>}, {pipeline_mode = #tpu.pipeline_mode<synchronous>, transform_indices = @transform_12, window_bounds = array<i64: 1, 128>}, {pipeline_mode = #tpu.pipeline_mode<synchronous>, transform_indices = @transform_13, window_bounds = array<i64: 1, 128>}, {transform_indices = @transform_14, window_bounds = array<i64: 1, 16, 128>}]} {
    %c0_i32 = arith.constant 0 : i32
    %0 = arith.cmpi eq, %arg1, %c0_i32 : i32
    %1 = arith.extui %0 : i1 to i32
    %c0_i32_0 = arith.constant 0 : i32
    %2 = arith.cmpi ne, %1, %c0_i32_0 : i32
    scf.if %2 {
      %c0_75 = arith.constant 0 : index
      %c0_76 = arith.constant 0 : index
      %c0_77 = arith.constant 0 : index
      %154 = vector.load %arg3[%c0_75, %c0_76, %c0_77] : memref<1x16x128xbf16, #tpu.memory_space<vmem>>, vector<1x16x128xbf16>
      %155 = vector.shape_cast %154 : vector<1x16x128xbf16> to vector<16x128xbf16>
      %c0_78 = arith.constant 0 : index
      %c0_79 = arith.constant 0 : index
      %156 = vector.load %arg4[%c0_78, %c0_79] : memref<128x384xbf16, #tpu.memory_space<vmem>>, vector<128x384xbf16>
      %cst_80 = arith.constant dense<0.000000e+00> : vector<16x384xf32>
      %157 = tpu.matmul %155, %156, %cst_80 {dimension_numbers = #tpu.dot_dimension_numbers<[1], [0], [0], [1], [0, 0, 1, 1], [], []>} : vector<16x128xbf16>, vector<128x384xbf16>, vector<16x384xf32> -> vector<16x384xf32>
      %c0_81 = arith.constant 0 : index
      %c0_82 = arith.constant 0 : index
      %158 = vector.load %arg5[%c0_81, %c0_82] : memref<1x384xf32, #tpu.memory_space<vmem>>, vector<1x384xf32>
      %159 = vector.broadcast %158 : vector<1x384xf32> to vector<16x384xf32>
      %160 = arith.addf %157, %159 : vector<16x384xf32>
      %161 = vector.extract_strided_slice %160 {offsets = [0, 0], sizes = [16, 128], strides = [1, 1]} : vector<16x384xf32> to vector<16x128xf32>
      %cst_83 = arith.constant 0.176776692 : f32
      %162 = vector.broadcast %cst_83 : f32 to vector<16x128xf32>
      %163 = arith.mulf %161, %162 : vector<16x128xf32>
      %164 = arith.truncf %163 : vector<16x128xf32> to vector<16x128xbf16>
      %c0_84 = arith.constant 0 : index
      %c0_85 = arith.constant 0 : index
      %165 = vector.load %arg17[%c0_84, %c0_85] : memref<16x128xbf16, #tpu.memory_space<vmem>>, vector<16x128xbf16>
      tpu.vector_store %arg17[%c0_84, %c0_85], %164 {strides = array<i32>} : memref<16x128xbf16, #tpu.memory_space<vmem>>, vector<16x128xbf16>,
      %166 = vector.extract_strided_slice %160 {offsets = [0, 128], sizes = [16, 256], strides = [1, 1]} : vector<16x384xf32> to vector<16x256xf32>
      %167 = arith.truncf %166 : vector<16x256xf32> to vector<16x256xbf16>
      %c0_86 = arith.constant 0 : index
      %c0_87 = arith.constant 0 : index
      %168 = vector.load %arg18[%c0_86, %c0_87] : memref<16x256xbf16, #tpu.memory_space<vmem>>, vector<16x256xbf16>
      tpu.vector_store %arg18[%c0_86, %c0_87], %167 {strides = array<i32>} : memref<16x256xbf16, #tpu.memory_space<vmem>>, vector<16x256xbf16>,
    } else {
    }
    %c0 = arith.constant 0 : index
    %c0_1 = arith.constant 0 : index
    %c0_2 = arith.constant 0 : index
    %3 = vector.load %arg2[%c0, %c0_1, %c0_2] : memref<1x16x128xf32, #tpu.memory_space<vmem>>, vector<1x16x128xf32>
    %4 = vector.shape_cast %3 : vector<1x16x128xf32> to vector<16x128xf32>
    %c16_i32 = arith.constant 16 : i32
    %5 = arith.muli %arg1, %c16_i32 : i32
    %6 = tpu.assume_multiple %5, 16 : i32
    %7 = arith.index_cast %6 : i32 to index
    %c0_3 = arith.constant 0 : index
    %8 = vector.load %arg17[%7, %c0_3] : memref<16x128xbf16, #tpu.memory_space<vmem>>, vector<16x128xbf16>
    %9 = vector.extract_strided_slice %8 {offsets = [0, 0], sizes = [16, 32], strides = [1, 1]} : vector<16x128xbf16> to vector<16x32xbf16>
    %c0_4 = arith.constant 0 : index
    %c0_5 = arith.constant 0 : index
    %10 = vector.load %arg18[%c0_4, %c0_5] : memref<16x256xbf16, #tpu.memory_space<vmem>>, vector<16x32xbf16>
    %c0_6 = arith.constant 0 : index
    %c128 = arith.constant 128 : index
    %11 = vector.load %arg18[%c0_6, %c128] : memref<16x256xbf16, #tpu.memory_space<vmem>>, vector<16x32xbf16>
    %cst = arith.constant dense<0.000000e+00> : vector<16x16xf32>
    %12 = tpu.matmul %9, %10, %cst {dimension_numbers = #tpu.dot_dimension_numbers<[1], [1], [0], [0], [0, 0, 1, 0], [], []>} : vector<16x32xbf16>, vector<16x32xbf16>, vector<16x16xf32> -> vector<16x16xf32>
    %cst_7 = arith.constant dense<0xFF800000> : vector<16xf32>
    %13 = vector.multi_reduction <maximumf>, %12, %cst_7 [1] : vector<16x16xf32> to vector<16xf32>
    %14 = vector.shape_cast %13 : vector<16xf32> to vector<16x1xf32>
    %15 = vector.broadcast %14 : vector<16x1xf32> to vector<16x16xf32>
    %16 = arith.subf %12, %15 : vector<16x16xf32>
    %17 = math.exp %16 : vector<16x16xf32>
    %cst_8 = arith.constant dense<0.000000e+00> : vector<16xf32>
    %18 = vector.multi_reduction <add>, %17, %cst_8 [1] : vector<16x16xf32> to vector<16xf32>
    %19 = vector.shape_cast %18 : vector<16xf32> to vector<16x1xf32>
    %20 = arith.truncf %17 : vector<16x16xf32> to vector<16x16xbf16>
    %cst_9 = arith.constant dense<0.000000e+00> : vector<16x32xf32>
    %21 = tpu.matmul %20, %11, %cst_9 {dimension_numbers = #tpu.dot_dimension_numbers<[1], [0], [0], [1], [0, 0, 1, 1], [], []>} : vector<16x16xbf16>, vector<16x32xbf16>, vector<16x32xf32> -> vector<16x32xf32>
    %22 = tpu.reciprocal %19 {approx = true} : vector<16x1xf32> -> vector<16x1xf32>
    %23 = vector.broadcast %22 : vector<16x1xf32> to vector<16x32xf32>
    %24 = arith.mulf %21, %23 : vector<16x32xf32>
    %25 = arith.truncf %24 : vector<16x32xf32> to vector<16x32xbf16>
    %c0_10 = arith.constant 0 : index
    %c0_11 = arith.constant 0 : index
    %26 = vector.load %arg19[%c0_10, %c0_11] : memref<16x128xbf16, #tpu.memory_space<vmem>>, vector<16x32xbf16>
    tpu.vector_store %arg19[%c0_10, %c0_11], %25 {strides = array<i32>} : memref<16x128xbf16, #tpu.memory_space<vmem>>, vector<16x32xbf16>,
    %27 = vector.extract_strided_slice %8 {offsets = [0, 32], sizes = [16, 32], strides = [1, 1]} : vector<16x128xbf16> to vector<16x32xbf16>
    %c0_12 = arith.constant 0 : index
    %c32 = arith.constant 32 : index
    %28 = vector.load %arg18[%c0_12, %c32] : memref<16x256xbf16, #tpu.memory_space<vmem>>, vector<16x32xbf16>
    %c0_13 = arith.constant 0 : index
    %c160 = arith.constant 160 : index
    %29 = vector.load %arg18[%c0_13, %c160] : memref<16x256xbf16, #tpu.memory_space<vmem>>, vector<16x32xbf16>
    %cst_14 = arith.constant dense<0.000000e+00> : vector<16x16xf32>
    %30 = tpu.matmul %27, %28, %cst_14 {dimension_numbers = #tpu.dot_dimension_numbers<[1], [1], [0], [0], [0, 0, 1, 0], [], []>} : vector<16x32xbf16>, vector<16x32xbf16>, vector<16x16xf32> -> vector<16x16xf32>
    %cst_15 = arith.constant dense<0xFF800000> : vector<16xf32>
    %31 = vector.multi_reduction <maximumf>, %30, %cst_15 [1] : vector<16x16xf32> to vector<16xf32>
    %32 = vector.shape_cast %31 : vector<16xf32> to vector<16x1xf32>
    %33 = vector.broadcast %32 : vector<16x1xf32> to vector<16x16xf32>
    %34 = arith.subf %30, %33 : vector<16x16xf32>
    %35 = math.exp %34 : vector<16x16xf32>
    %cst_16 = arith.constant dense<0.000000e+00> : vector<16xf32>
    %36 = vector.multi_reduction <add>, %35, %cst_16 [1] : vector<16x16xf32> to vector<16xf32>
    %37 = vector.shape_cast %36 : vector<16xf32> to vector<16x1xf32>
    %38 = arith.truncf %35 : vector<16x16xf32> to vector<16x16xbf16>
    %cst_17 = arith.constant dense<0.000000e+00> : vector<16x32xf32>
    %39 = tpu.matmul %38, %29, %cst_17 {dimension_numbers = #tpu.dot_dimension_numbers<[1], [0], [0], [1], [0, 0, 1, 1], [], []>} : vector<16x16xbf16>, vector<16x32xbf16>, vector<16x32xf32> -> vector<16x32xf32>
    %40 = tpu.reciprocal %37 {approx = true} : vector<16x1xf32> -> vector<16x1xf32>
    %41 = vector.broadcast %40 : vector<16x1xf32> to vector<16x32xf32>
    %42 = arith.mulf %39, %41 : vector<16x32xf32>
    %43 = arith.truncf %42 : vector<16x32xf32> to vector<16x32xbf16>
    %c0_18 = arith.constant 0 : index
    %c32_19 = arith.constant 32 : index
    %44 = vector.load %arg19[%c0_18, %c32_19] : memref<16x128xbf16, #tpu.memory_space<vmem>>, vector<16x32xbf16>
    tpu.vector_store %arg19[%c0_18, %c32_19], %43 {strides = array<i32>} : memref<16x128xbf16, #tpu.memory_space<vmem>>, vector<16x32xbf16>,
    %45 = vector.extract_strided_slice %8 {offsets = [0, 64], sizes = [16, 32], strides = [1, 1]} : vector<16x128xbf16> to vector<16x32xbf16>
    %c0_20 = arith.constant 0 : index
    %c64 = arith.constant 64 : index
    %46 = vector.load %arg18[%c0_20, %c64] : memref<16x256xbf16, #tpu.memory_space<vmem>>, vector<16x32xbf16>
    %c0_21 = arith.constant 0 : index
    %c192 = arith.constant 192 : index
    %47 = vector.load %arg18[%c0_21, %c192] : memref<16x256xbf16, #tpu.memory_space<vmem>>, vector<16x32xbf16>
    %cst_22 = arith.constant dense<0.000000e+00> : vector<16x16xf32>
    %48 = tpu.matmul %45, %46, %cst_22 {dimension_numbers = #tpu.dot_dimension_numbers<[1], [1], [0], [0], [0, 0, 1, 0], [], []>} : vector<16x32xbf16>, vector<16x32xbf16>, vector<16x16xf32> -> vector<16x16xf32>
    %cst_23 = arith.constant dense<0xFF800000> : vector<16xf32>
    %49 = vector.multi_reduction <maximumf>, %48, %cst_23 [1] : vector<16x16xf32> to vector<16xf32>
    %50 = vector.shape_cast %49 : vector<16xf32> to vector<16x1xf32>
    %51 = vector.broadcast %50 : vector<16x1xf32> to vector<16x16xf32>
    %52 = arith.subf %48, %51 : vector<16x16xf32>
    %53 = math.exp %52 : vector<16x16xf32>
    %cst_24 = arith.constant dense<0.000000e+00> : vector<16xf32>
    %54 = vector.multi_reduction <add>, %53, %cst_24 [1] : vector<16x16xf32> to vector<16xf32>
    %55 = vector.shape_cast %54 : vector<16xf32> to vector<16x1xf32>
    %56 = arith.truncf %53 : vector<16x16xf32> to vector<16x16xbf16>
    %cst_25 = arith.constant dense<0.000000e+00> : vector<16x32xf32>
    %57 = tpu.matmul %56, %47, %cst_25 {dimension_numbers = #tpu.dot_dimension_numbers<[1], [0], [0], [1], [0, 0, 1, 1], [], []>} : vector<16x16xbf16>, vector<16x32xbf16>, vector<16x32xf32> -> vector<16x32xf32>
    %58 = tpu.reciprocal %55 {approx = true} : vector<16x1xf32> -> vector<16x1xf32>
    %59 = vector.broadcast %58 : vector<16x1xf32> to vector<16x32xf32>
    %60 = arith.mulf %57, %59 : vector<16x32xf32>
    %61 = arith.truncf %60 : vector<16x32xf32> to vector<16x32xbf16>
    %c0_26 = arith.constant 0 : index
    %c64_27 = arith.constant 64 : index
    %62 = vector.load %arg19[%c0_26, %c64_27] : memref<16x128xbf16, #tpu.memory_space<vmem>>, vector<16x32xbf16>
    tpu.vector_store %arg19[%c0_26, %c64_27], %61 {strides = array<i32>} : memref<16x128xbf16, #tpu.memory_space<vmem>>, vector<16x32xbf16>,
    %63 = vector.extract_strided_slice %8 {offsets = [0, 96], sizes = [16, 32], strides = [1, 1]} : vector<16x128xbf16> to vector<16x32xbf16>
    %c0_28 = arith.constant 0 : index
    %c96 = arith.constant 96 : index
    %64 = vector.load %arg18[%c0_28, %c96] : memref<16x256xbf16, #tpu.memory_space<vmem>>, vector<16x32xbf16>
    %c0_29 = arith.constant 0 : index
    %c224 = arith.constant 224 : index
    %65 = vector.load %arg18[%c0_29, %c224] : memref<16x256xbf16, #tpu.memory_space<vmem>>, vector<16x32xbf16>
    %cst_30 = arith.constant dense<0.000000e+00> : vector<16x16xf32>
    %66 = tpu.matmul %63, %64, %cst_30 {dimension_numbers = #tpu.dot_dimension_numbers<[1], [1], [0], [0], [0, 0, 1, 0], [], []>} : vector<16x32xbf16>, vector<16x32xbf16>, vector<16x16xf32> -> vector<16x16xf32>
    %cst_31 = arith.constant dense<0xFF800000> : vector<16xf32>
    %67 = vector.multi_reduction <maximumf>, %66, %cst_31 [1] : vector<16x16xf32> to vector<16xf32>
    %68 = vector.shape_cast %67 : vector<16xf32> to vector<16x1xf32>
    %69 = vector.broadcast %68 : vector<16x1xf32> to vector<16x16xf32>
    %70 = arith.subf %66, %69 : vector<16x16xf32>
    %71 = math.exp %70 : vector<16x16xf32>
    %cst_32 = arith.constant dense<0.000000e+00> : vector<16xf32>
    %72 = vector.multi_reduction <add>, %71, %cst_32 [1] : vector<16x16xf32> to vector<16xf32>
    %73 = vector.shape_cast %72 : vector<16xf32> to vector<16x1xf32>
    %74 = arith.truncf %71 : vector<16x16xf32> to vector<16x16xbf16>
    %cst_33 = arith.constant dense<0.000000e+00> : vector<16x32xf32>
    %75 = tpu.matmul %74, %65, %cst_33 {dimension_numbers = #tpu.dot_dimension_numbers<[1], [0], [0], [1], [0, 0, 1, 1], [], []>} : vector<16x16xbf16>, vector<16x32xbf16>, vector<16x32xf32> -> vector<16x32xf32>
    %76 = tpu.reciprocal %73 {approx = true} : vector<16x1xf32> -> vector<16x1xf32>
    %77 = vector.broadcast %76 : vector<16x1xf32> to vector<16x32xf32>
    %78 = arith.mulf %75, %77 : vector<16x32xf32>
    %79 = arith.truncf %78 : vector<16x32xf32> to vector<16x32xbf16>
    %c0_34 = arith.constant 0 : index
    %c96_35 = arith.constant 96 : index
    %80 = vector.load %arg19[%c0_34, %c96_35] : memref<16x128xbf16, #tpu.memory_space<vmem>>, vector<16x32xbf16>
    tpu.vector_store %arg19[%c0_34, %c96_35], %79 {strides = array<i32>} : memref<16x128xbf16, #tpu.memory_space<vmem>>, vector<16x32xbf16>,
    %c0_36 = arith.constant 0 : index
    %c0_37 = arith.constant 0 : index
    %81 = vector.load %arg19[%c0_36, %c0_37] : memref<16x128xbf16, #tpu.memory_space<vmem>>, vector<16x128xbf16>
    %c0_38 = arith.constant 0 : index
    %c0_39 = arith.constant 0 : index
    %82 = vector.load %arg6[%c0_38, %c0_39] : memref<128x128xbf16, #tpu.memory_space<vmem>>, vector<128x128xbf16>
    %cst_40 = arith.constant dense<0.000000e+00> : vector<16x128xf32>
    %83 = tpu.matmul %81, %82, %cst_40 {dimension_numbers = #tpu.dot_dimension_numbers<[1], [0], [0], [1], [0, 0, 1, 1], [], []>} : vector<16x128xbf16>, vector<128x128xbf16>, vector<16x128xf32> -> vector<16x128xf32>
    %c0_41 = arith.constant 0 : index
    %c0_42 = arith.constant 0 : index
    %84 = vector.load %arg7[%c0_41, %c0_42] : memref<1x128xf32, #tpu.memory_space<vmem>>, vector<1x128xf32>
    %85 = vector.broadcast %84 : vector<1x128xf32> to vector<16x128xf32>
    %86 = arith.addf %83, %85 : vector<16x128xf32>
    %87 = arith.addf %4, %86 : vector<16x128xf32>
    %c0_43 = arith.constant 0 : index
    %c0_44 = arith.constant 0 : index
    %88 = vector.load %arg8[%c0_43, %c0_44] : memref<1x128xf32, #tpu.memory_space<vmem>>, vector<1x128xf32>
    %c0_45 = arith.constant 0 : index
    %c0_46 = arith.constant 0 : index
    %89 = vector.load %arg9[%c0_45, %c0_46] : memref<1x128xf32, #tpu.memory_space<vmem>>, vector<1x128xf32>
    %cst_47 = arith.constant dense<0.000000e+00> : vector<16xf32>
    %90 = vector.multi_reduction <add>, %87, %cst_47 [1] : vector<16x128xf32> to vector<16xf32>
    %91 = vector.shape_cast %90 : vector<16xf32> to vector<16x1xf32>
    %cst_48 = arith.constant 1.280000e+02 : f32
    %92 = vector.broadcast %cst_48 : f32 to vector<16x1xf32>
    %93 = arith.divf %91, %92 : vector<16x1xf32>
    %94 = vector.broadcast %93 : vector<16x1xf32> to vector<16x128xf32>
    %95 = arith.subf %87, %94 : vector<16x128xf32>
    %96 = arith.mulf %95, %95 : vector<16x128xf32>
    %cst_49 = arith.constant dense<0.000000e+00> : vector<16xf32>
    %97 = vector.multi_reduction <add>, %96, %cst_49 [1] : vector<16x128xf32> to vector<16xf32>
    %98 = vector.shape_cast %97 : vector<16xf32> to vector<16x1xf32>
    %cst_50 = arith.constant 1.280000e+02 : f32
    %99 = vector.broadcast %cst_50 : f32 to vector<16x1xf32>
    %100 = arith.divf %98, %99 : vector<16x1xf32>
    %101 = vector.broadcast %93 : vector<16x1xf32> to vector<16x128xf32>
    %102 = arith.subf %87, %101 : vector<16x128xf32>
    %cst_51 = arith.constant 9.99999997E-7 : f32
    %103 = vector.broadcast %cst_51 : f32 to vector<16x1xf32>
    %104 = arith.addf %100, %103 : vector<16x1xf32>
    %105 = math.rsqrt %104 : vector<16x1xf32>
    %106 = vector.broadcast %105 : vector<16x1xf32> to vector<16x128xf32>
    %107 = arith.mulf %102, %106 : vector<16x128xf32>
    %108 = vector.broadcast %88 : vector<1x128xf32> to vector<16x128xf32>
    %109 = arith.mulf %107, %108 : vector<16x128xf32>
    %110 = vector.broadcast %89 : vector<1x128xf32> to vector<16x128xf32>
    %111 = arith.addf %109, %110 : vector<16x128xf32>
    %112 = arith.truncf %111 : vector<16x128xf32> to vector<16x128xbf16>
    %c0_52 = arith.constant 0 : index
    %c0_53 = arith.constant 0 : index
    %113 = vector.load %arg10[%c0_52, %c0_53] : memref<128x256xbf16, #tpu.memory_space<vmem>>, vector<128x256xbf16>
    %cst_54 = arith.constant dense<0.000000e+00> : vector<16x256xf32>
    %114 = tpu.matmul %112, %113, %cst_54 {dimension_numbers = #tpu.dot_dimension_numbers<[1], [0], [0], [1], [0, 0, 1, 1], [], []>} : vector<16x128xbf16>, vector<128x256xbf16>, vector<16x256xf32> -> vector<16x256xf32>
    %c0_55 = arith.constant 0 : index
    %c0_56 = arith.constant 0 : index
    %115 = vector.load %arg11[%c0_55, %c0_56] : memref<1x256xf32, #tpu.memory_space<vmem>>, vector<1x256xf32>
    %116 = vector.broadcast %115 : vector<1x256xf32> to vector<16x256xf32>
    %117 = arith.addf %114, %116 : vector<16x256xf32>
    %cst_57 = arith.constant 0.000000e+00 : f32
    %118 = vector.broadcast %cst_57 : f32 to vector<16x256xf32>
    %119 = arith.maximumf %117, %118 : vector<16x256xf32>
    %120 = arith.truncf %119 : vector<16x256xf32> to vector<16x256xbf16>
    %c0_58 = arith.constant 0 : index
    %c0_59 = arith.constant 0 : index
    %121 = vector.load %arg12[%c0_58, %c0_59] : memref<256x128xbf16, #tpu.memory_space<vmem>>, vector<256x128xbf16>
    %cst_60 = arith.constant dense<0.000000e+00> : vector<16x128xf32>
    %122 = tpu.matmul %120, %121, %cst_60 {dimension_numbers = #tpu.dot_dimension_numbers<[1], [0], [0], [1], [0, 0, 1, 1], [], []>} : vector<16x256xbf16>, vector<256x128xbf16>, vector<16x128xf32> -> vector<16x128xf32>
    %c0_61 = arith.constant 0 : index
    %c0_62 = arith.constant 0 : index
    %123 = vector.load %arg13[%c0_61, %c0_62] : memref<1x128xf32, #tpu.memory_space<vmem>>, vector<1x128xf32>
    %124 = vector.broadcast %123 : vector<1x128xf32> to vector<16x128xf32>
    %125 = arith.addf %122, %124 : vector<16x128xf32>
    %126 = arith.addf %111, %125 : vector<16x128xf32>
    %c0_63 = arith.constant 0 : index
    %c0_64 = arith.constant 0 : index
    %127 = vector.load %arg14[%c0_63, %c0_64] : memref<1x128xf32, #tpu.memory_space<vmem>>, vector<1x128xf32>
    %c0_65 = arith.constant 0 : index
    %c0_66 = arith.constant 0 : index
    %128 = vector.load %arg15[%c0_65, %c0_66] : memref<1x128xf32, #tpu.memory_space<vmem>>, vector<1x128xf32>
    %cst_67 = arith.constant dense<0.000000e+00> : vector<16xf32>
    %129 = vector.multi_reduction <add>, %126, %cst_67 [1] : vector<16x128xf32> to vector<16xf32>
    %130 = vector.shape_cast %129 : vector<16xf32> to vector<16x1xf32>
    %cst_68 = arith.constant 1.280000e+02 : f32
    %131 = vector.broadcast %cst_68 : f32 to vector<16x1xf32>
    %132 = arith.divf %130, %131 : vector<16x1xf32>
    %133 = vector.broadcast %132 : vector<16x1xf32> to vector<16x128xf32>
    %134 = arith.subf %126, %133 : vector<16x128xf32>
    %135 = arith.mulf %134, %134 : vector<16x128xf32>
    %cst_69 = arith.constant dense<0.000000e+00> : vector<16xf32>
    %136 = vector.multi_reduction <add>, %135, %cst_69 [1] : vector<16x128xf32> to vector<16xf32>
    %137 = vector.shape_cast %136 : vector<16xf32> to vector<16x1xf32>
    %cst_70 = arith.constant 1.280000e+02 : f32
    %138 = vector.broadcast %cst_70 : f32 to vector<16x1xf32>
    %139 = arith.divf %137, %138 : vector<16x1xf32>
    %140 = vector.broadcast %132 : vector<16x1xf32> to vector<16x128xf32>
    %141 = arith.subf %126, %140 : vector<16x128xf32>
    %cst_71 = arith.constant 9.99999997E-7 : f32
    %142 = vector.broadcast %cst_71 : f32 to vector<16x1xf32>
    %143 = arith.addf %139, %142 : vector<16x1xf32>
    %144 = math.rsqrt %143 : vector<16x1xf32>
    %145 = vector.broadcast %144 : vector<16x1xf32> to vector<16x128xf32>
    %146 = arith.mulf %141, %145 : vector<16x128xf32>
    %147 = vector.broadcast %127 : vector<1x128xf32> to vector<16x128xf32>
    %148 = arith.mulf %146, %147 : vector<16x128xf32>
    %149 = vector.broadcast %128 : vector<1x128xf32> to vector<16x128xf32>
    %150 = arith.addf %148, %149 : vector<16x128xf32>
    %c0_72 = arith.constant 0 : index
    %c0_73 = arith.constant 0 : index
    %c0_74 = arith.constant 0 : index
    %151 = vector.load %arg16[%c0_72, %c0_73, %c0_74] : memref<1x16x128xf32, #tpu.memory_space<vmem>>, vector<1x16x128xf32>
    %152 = vector.shape_cast %151 : vector<1x16x128xf32> to vector<16x128xf32>
    %153 = vector.shape_cast %150 : vector<16x128xf32> to vector<1x16x128xf32>
    tpu.vector_store %arg16[%c0_72, %c0_73, %c0_74], %153 {strides = array<i32>} : memref<1x16x128xf32, #tpu.memory_space<vmem>>, vector<1x16x128xf32>,
    return
  }
  func.func @transform_0(%arg0: i32, %arg1: i32) -> (i32, i32, i32) {
    %c0_i32 = arith.constant 0 : i32
    %c0_i32_0 = arith.constant 0 : i32
    return %arg0, %arg1, %c0_i32 : i32, i32, i32
  }
  func.func @transform_1(%arg0: i32, %arg1: i32) -> (i32, i32, i32) {
    %c0_i32 = arith.constant 0 : i32
    %c0_i32_0 = arith.constant 0 : i32
    %c0_i32_1 = arith.constant 0 : i32
    return %arg0, %c0_i32, %c0_i32_0 : i32, i32, i32
  }
  func.func @transform_2(%arg0: i32, %arg1: i32) -> (i32, i32) {
    %c0_i32 = arith.constant 0 : i32
    %c0_i32_0 = arith.constant 0 : i32
    %c0_i32_1 = arith.constant 0 : i32
    return %c0_i32, %c0_i32_0 : i32, i32
  }
  func.func @transform_3(%arg0: i32, %arg1: i32) -> (i32, i32) {
    %c0_i32 = arith.constant 0 : i32
    %c0_i32_0 = arith.constant 0 : i32
    %c0_i32_1 = arith.constant 0 : i32
    return %c0_i32, %c0_i32_0 : i32, i32
  }
  func.func @transform_4(%arg0: i32, %arg1: i32) -> (i32, i32) {
    %c0_i32 = arith.constant 0 : i32
    %c0_i32_0 = arith.constant 0 : i32
    %c0_i32_1 = arith.constant 0 : i32
    return %c0_i32, %c0_i32_0 : i32, i32
  }
  func.func @transform_5(%arg0: i32, %arg1: i32) -> (i32, i32) {
    %c0_i32 = arith.constant 0 : i32
    %c0_i32_0 = arith.constant 0 : i32
    %c0_i32_1 = arith.constant 0 : i32
    return %c0_i32, %c0_i32_0 : i32, i32
  }
  func.func @transform_6(%arg0: i32, %arg1: i32) -> (i32, i32) {
    %c0_i32 = arith.constant 0 : i32
    %c0_i32_0 = arith.constant 0 : i32
    %c0_i32_1 = arith.constant 0 : i32
    return %c0_i32, %c0_i32_0 : i32, i32
  }
  func.func @transform_7(%arg0: i32, %arg1: i32) -> (i32, i32) {
    %c0_i32 = arith.constant 0 : i32
    %c0_i32_0 = arith.constant 0 : i32
    %c0_i32_1 = arith.constant 0 : i32
    return %c0_i32, %c0_i32_0 : i32, i32
  }
  func.func @transform_8(%arg0: i32, %arg1: i32) -> (i32, i32) {
    %c0_i32 = arith.constant 0 : i32
    %c0_i32_0 = arith.constant 0 : i32
    %c0_i32_1 = arith.constant 0 : i32
    return %c0_i32, %c0_i32_0 : i32, i32
  }
  func.func @transform_9(%arg0: i32, %arg1: i32) -> (i32, i32) {
    %c0_i32 = arith.constant 0 : i32
    %c0_i32_0 = arith.constant 0 : i32
    %c0_i32_1 = arith.constant 0 : i32
    return %c0_i32, %c0_i32_0 : i32, i32
  }
  func.func @transform_10(%arg0: i32, %arg1: i32) -> (i32, i32) {
    %c0_i32 = arith.constant 0 : i32
    %c0_i32_0 = arith.constant 0 : i32
    %c0_i32_1 = arith.constant 0 : i32
    return %c0_i32, %c0_i32_0 : i32, i32
  }
  func.func @transform_11(%arg0: i32, %arg1: i32) -> (i32, i32) {
    %c0_i32 = arith.constant 0 : i32
    %c0_i32_0 = arith.constant 0 : i32
    %c0_i32_1 = arith.constant 0 : i32
    return %c0_i32, %c0_i32_0 : i32, i32
  }
  func.func @transform_12(%arg0: i32, %arg1: i32) -> (i32, i32) {
    %c0_i32 = arith.constant 0 : i32
    %c0_i32_0 = arith.constant 0 : i32
    %c0_i32_1 = arith.constant 0 : i32
    return %c0_i32, %c0_i32_0 : i32, i32
  }
  func.func @transform_13(%arg0: i32, %arg1: i32) -> (i32, i32) {
    %c0_i32 = arith.constant 0 : i32
    %c0_i32_0 = arith.constant 0 : i32
    %c0_i32_1 = arith.constant 0 : i32
    return %c0_i32, %c0_i32_0 : i32, i32
  }
  func.func @transform_14(%arg0: i32, %arg1: i32) -> (i32, i32, i32) {
    %c0_i32 = arith.constant 0 : i32
    %c0_i32_0 = arith.constant 0 : i32
    return %arg0, %arg1, %c0_i32 : i32, i32, i32
  }
}

module attributes {stable_mosaic.version = 11 : i64} {
  func.func @encoder_kernel(%arg0: i32, %arg1: i32, %arg2: memref<1x16x128xf32, #tpu.memory_space<vmem>>, %arg3: memref<1x16x128xbf16, #tpu.memory_space<vmem>>, %arg4: memref<128x384xbf16, #tpu.memory_space<vmem>>, %arg5: memref<1x384xf32, #tpu.memory_space<vmem>>, %arg6: memref<128x128xbf16, #tpu.memory_space<vmem>>, %arg7: memref<1x128xf32, #tpu.memory_space<vmem>>, %arg8: memref<1x128xf32, #tpu.memory_space<vmem>>, %arg9: memref<1x128xf32, #tpu.memory_space<vmem>>, %arg10: memref<128x256xbf16, #tpu.memory_space<vmem>>, %arg11: memref<1x256xf32, #tpu.memory_space<vmem>>, %arg12: memref<256x128xbf16, #tpu.memory_space<vmem>>, %arg13: memref<1x128xf32, #tpu.memory_space<vmem>>, %arg14: memref<1x128xf32, #tpu.memory_space<vmem>>, %arg15: memref<1x128xf32, #tpu.memory_space<vmem>>, %arg16: memref<1x16x128xf32, #tpu.memory_space<vmem>>, %arg17: memref<16x128xbf16, #tpu.memory_space<vmem>>, %arg18: memref<16x256xbf16, #tpu.memory_space<vmem>>, %arg19: memref<16x128xbf16, #tpu.memory_space<vmem>>) attributes {dimension_semantics = [#tpu.dimension_semantics<parallel>, #tpu.dimension_semantics<arbitrary>], iteration_bounds = array<i64: 2, 1>, scalar_prefetch = 0 : i64, scratch_operands = 3 : i64, tpu.core_type = #tpu.core_type<tc>, window_params = [{transform_indices = @transform_0, window_bounds = array<i64: 1, 16, 128>}, {transform_indices = @transform_1, window_bounds = array<i64: 1, 16, 128>}, {pipeline_mode = #tpu.pipeline_mode<synchronous>, transform_indices = @transform_2, window_bounds = array<i64: 128, 384>}, {pipeline_mode = #tpu.pipeline_mode<synchronous>, transform_indices = @transform_3, window_bounds = array<i64: 1, 384>}, {pipeline_mode = #tpu.pipeline_mode<synchronous>, transform_indices = @transform_4, window_bounds = array<i64: 128, 128>}, {pipeline_mode = #tpu.pipeline_mode<synchronous>, transform_indices = @transform_5, window_bounds = array<i64: 1, 128>}, {pipeline_mode = #tpu.pipeline_mode<synchronous>, transform_indices = @transform_6, window_bounds = array<i64: 1, 128>}, {pipeline_mode = #tpu.pipeline_mode<synchronous>, transform_indices = @transform_7, window_bounds = array<i64: 1, 128>}, {pipeline_mode = #tpu.pipeline_mode<synchronous>, transform_indices = @transform_8, window_bounds = array<i64: 128, 256>}, {pipeline_mode = #tpu.pipeline_mode<synchronous>, transform_indices = @transform_9, window_bounds = array<i64: 1, 256>}, {pipeline_mode = #tpu.pipeline_mode<synchronous>, transform_indices = @transform_10, window_bounds = array<i64: 256, 128>}, {pipeline_mode = #tpu.pipeline_mode<synchronous>, transform_indices = @transform_11, window_bounds = array<i64: 1, 128>}, {pipeline_mode = #tpu.pipeline_mode<synchronous>, transform_indices = @transform_12, window_bounds = array<i64: 1, 128>}, {pipeline_mode = #tpu.pipeline_mode<synchronous>, transform_indices = @transform_13, window_bounds = array<i64: 1, 128>}, {transform_indices = @transform_14, window_bounds = array<i64: 1, 16, 128>}]} {
    %c0_i32 = arith.constant 0 : i32
    %0 = arith.cmpi eq, %arg1, %c0_i32 : i32
    %1 = arith.extui %0 : i1 to i32
    %c0_i32_0 = arith.constant 0 : i32
    %2 = arith.cmpi ne, %1, %c0_i32_0 : i32
    scf.if %2 {
      %c0_75 = arith.constant 0 : index
      %c0_76 = arith.constant 0 : index
      %c0_77 = arith.constant 0 : index
      %154 = vector.load %arg3[%c0_75, %c0_76, %c0_77] : memref<1x16x128xbf16, #tpu.memory_space<vmem>>, vector<1x16x128xbf16>
      %155 = vector.shape_cast %154 : vector<1x16x128xbf16> to vector<16x128xbf16>
      %c0_78 = arith.constant 0 : index
      %c0_79 = arith.constant 0 : index
      %156 = vector.load %arg4[%c0_78, %c0_79] : memref<128x384xbf16, #tpu.memory_space<vmem>>, vector<128x384xbf16>
      %cst_80 = arith.constant dense<0.000000e+00> : vector<16x384xf32>
      %157 = tpu.matmul %155, %156, %cst_80 {dimension_numbers = #tpu.dot_dimension_numbers<[1], [0], [0], [1], [0, 0, 1, 1], [], []>} : vector<16x128xbf16>, vector<128x384xbf16>, vector<16x384xf32> -> vector<16x384xf32>
      %c0_81 = arith.constant 0 : index
      %c0_82 = arith.constant 0 : index
      %158 = vector.load %arg5[%c0_81, %c0_82] : memref<1x384xf32, #tpu.memory_space<vmem>>, vector<1x384xf32>
      %159 = vector.broadcast %158 : vector<1x384xf32> to vector<16x384xf32>
      %160 = arith.addf %157, %159 : vector<16x384xf32>
      %161 = vector.extract_strided_slice %160 {offsets = [0, 0], sizes = [16, 128], strides = [1, 1]} : vector<16x384xf32> to vector<16x128xf32>
      %cst_83 = arith.constant 0.176776692 : f32
      %162 = vector.broadcast %cst_83 : f32 to vector<16x128xf32>
      %163 = arith.mulf %161, %162 : vector<16x128xf32>
      %164 = arith.truncf %163 : vector<16x128xf32> to vector<16x128xbf16>
      %c0_84 = arith.constant 0 : index
      %c0_85 = arith.constant 0 : index
      %165 = vector.load %arg17[%c0_84, %c0_85] : memref<16x128xbf16, #tpu.memory_space<vmem>>, vector<16x128xbf16>
      tpu.vector_store %arg17[%c0_84, %c0_85], %164 {strides = array<i32>} : memref<16x128xbf16, #tpu.memory_space<vmem>>, vector<16x128xbf16>,
      %166 = vector.extract_strided_slice %160 {offsets = [0, 128], sizes = [16, 256], strides = [1, 1]} : vector<16x384xf32> to vector<16x256xf32>
      %167 = arith.truncf %166 : vector<16x256xf32> to vector<16x256xbf16>
      %c0_86 = arith.constant 0 : index
      %c0_87 = arith.constant 0 : index
      %168 = vector.load %arg18[%c0_86, %c0_87] : memref<16x256xbf16, #tpu.memory_space<vmem>>, vector<16x256xbf16>
      tpu.vector_store %arg18[%c0_86, %c0_87], %167 {strides = array<i32>} : memref<16x256xbf16, #tpu.memory_space<vmem>>, vector<16x256xbf16>,
    } else {
    }
    %c0 = arith.constant 0 : index
    %c0_1 = arith.constant 0 : index
    %c0_2 = arith.constant 0 : index
    %3 = vector.load %arg2[%c0, %c0_1, %c0_2] : memref<1x16x128xf32, #tpu.memory_space<vmem>>, vector<1x16x128xf32>
    %4 = vector.shape_cast %3 : vector<1x16x128xf32> to vector<16x128xf32>
    %c16_i32 = arith.constant 16 : i32
    %5 = arith.muli %arg1, %c16_i32 : i32
    %6 = tpu.assume_multiple %5, 16 : i32
    %7 = arith.index_cast %6 : i32 to index
    %c0_3 = arith.constant 0 : index
    %8 = vector.load %arg17[%7, %c0_3] : memref<16x128xbf16, #tpu.memory_space<vmem>>, vector<16x128xbf16>
    %9 = vector.extract_strided_slice %8 {offsets = [0, 0], sizes = [16, 32], strides = [1, 1]} : vector<16x128xbf16> to vector<16x32xbf16>
    %c0_4 = arith.constant 0 : index
    %c0_5 = arith.constant 0 : index
    %10 = vector.load %arg18[%c0_4, %c0_5] : memref<16x256xbf16, #tpu.memory_space<vmem>>, vector<16x32xbf16>
    %c0_6 = arith.constant 0 : index
    %c128 = arith.constant 128 : index
    %11 = vector.load %arg18[%c0_6, %c128] : memref<16x256xbf16, #tpu.memory_space<vmem>>, vector<16x32xbf16>
    %cst = arith.constant dense<0.000000e+00> : vector<16x16xf32>
    %12 = tpu.matmul %9, %10, %cst {dimension_numbers = #tpu.dot_dimension_numbers<[1], [1], [0], [0], [0, 0, 1, 0], [], []>} : vector<16x32xbf16>, vector<16x32xbf16>, vector<16x16xf32> -> vector<16x16xf32>
    %cst_7 = arith.constant dense<0xFF800000> : vector<16xf32>
    %13 = vector.multi_reduction <maximumf>, %12, %cst_7 [1] : vector<16x16xf32> to vector<16xf32>
    %14 = vector.shape_cast %13 : vector<16xf32> to vector<16x1xf32>
    %15 = vector.broadcast %14 : vector<16x1xf32> to vector<16x16xf32>
    %16 = arith.subf %12, %15 : vector<16x16xf32>
    %17 = math.exp %16 : vector<16x16xf32>
    %cst_8 = arith.constant dense<0.000000e+00> : vector<16xf32>
    %18 = vector.multi_reduction <add>, %17, %cst_8 [1] : vector<16x16xf32> to vector<16xf32>
    %19 = vector.shape_cast %18 : vector<16xf32> to vector<16x1xf32>
    %20 = arith.truncf %17 : vector<16x16xf32> to vector<16x16xbf16>
    %cst_9 = arith.constant dense<0.000000e+00> : vector<16x32xf32>
    %21 = tpu.matmul %20, %11, %cst_9 {dimension_numbers = #tpu.dot_dimension_numbers<[1], [0], [0], [1], [0, 0, 1, 1], [], []>} : vector<16x16xbf16>, vector<16x32xbf16>, vector<16x32xf32> -> vector<16x32xf32>
    %22 = tpu.reciprocal %19 {approx = true} : vector<16x1xf32> -> vector<16x1xf32>
    %23 = vector.broadcast %22 : vector<16x1xf32> to vector<16x32xf32>
    %24 = arith.mulf %21, %23 : vector<16x32xf32>
    %25 = arith.truncf %24 : vector<16x32xf32> to vector<16x32xbf16>
    %c0_10 = arith.constant 0 : index
    %c0_11 = arith.constant 0 : index
    %26 = vector.load %arg19[%c0_10, %c0_11] : memref<16x128xbf16, #tpu.memory_space<vmem>>, vector<16x32xbf16>
    tpu.vector_store %arg19[%c0_10, %c0_11], %25 {strides = array<i32>} : memref<16x128xbf16, #tpu.memory_space<vmem>>, vector<16x32xbf16>,
    %27 = vector.extract_strided_slice %8 {offsets = [0, 32], sizes = [16, 32], strides = [1, 1]} : vector<16x128xbf16> to vector<16x32xbf16>
    %c0_12 = arith.constant 0 : index
    %c32 = arith.constant 32 : index
    %28 = vector.load %arg18[%c0_12, %c32] : memref<16x256xbf16, #tpu.memory_space<vmem>>, vector<16x32xbf16>
    %c0_13 = arith.constant 0 : index
    %c160 = arith.constant 160 : index
    %29 = vector.load %arg18[%c0_13, %c160] : memref<16x256xbf16, #tpu.memory_space<vmem>>, vector<16x32xbf16>
    %cst_14 = arith.constant dense<0.000000e+00> : vector<16x16xf32>
    %30 = tpu.matmul %27, %28, %cst_14 {dimension_numbers = #tpu.dot_dimension_numbers<[1], [1], [0], [0], [0, 0, 1, 0], [], []>} : vector<16x32xbf16>, vector<16x32xbf16>, vector<16x16xf32> -> vector<16x16xf32>
    %cst_15 = arith.constant dense<0xFF800000> : vector<16xf32>
    %31 = vector.multi_reduction <maximumf>, %30, %cst_15 [1] : vector<16x16xf32> to vector<16xf32>
    %32 = vector.shape_cast %31 : vector<16xf32> to vector<16x1xf32>
    %33 = vector.broadcast %32 : vector<16x1xf32> to vector<16x16xf32>
    %34 = arith.subf %30, %33 : vector<16x16xf32>
    %35 = math.exp %34 : vector<16x16xf32>
    %cst_16 = arith.constant dense<0.000000e+00> : vector<16xf32>
    %36 = vector.multi_reduction <add>, %35, %cst_16 [1] : vector<16x16xf32> to vector<16xf32>
    %37 = vector.shape_cast %36 : vector<16xf32> to vector<16x1xf32>
    %38 = arith.truncf %35 : vector<16x16xf32> to vector<16x16xbf16>
    %cst_17 = arith.constant dense<0.000000e+00> : vector<16x32xf32>
    %39 = tpu.matmul %38, %29, %cst_17 {dimension_numbers = #tpu.dot_dimension_numbers<[1], [0], [0], [1], [0, 0, 1, 1], [], []>} : vector<16x16xbf16>, vector<16x32xbf16>, vector<16x32xf32> -> vector<16x32xf32>
    %40 = tpu.reciprocal %37 {approx = true} : vector<16x1xf32> -> vector<16x1xf32>
    %41 = vector.broadcast %40 : vector<16x1xf32> to vector<16x32xf32>
    %42 = arith.mulf %39, %41 : vector<16x32xf32>
    %43 = arith.truncf %42 : vector<16x32xf32> to vector<16x32xbf16>
    %c0_18 = arith.constant 0 : index
    %c32_19 = arith.constant 32 : index
    %44 = vector.load %arg19[%c0_18, %c32_19] : memref<16x128xbf16, #tpu.memory_space<vmem>>, vector<16x32xbf16>
    tpu.vector_store %arg19[%c0_18, %c32_19], %43 {strides = array<i32>} : memref<16x128xbf16, #tpu.memory_space<vmem>>, vector<16x32xbf16>,
    %45 = vector.extract_strided_slice %8 {offsets = [0, 64], sizes = [16, 32], strides = [1, 1]} : vector<16x128xbf16> to vector<16x32xbf16>
    %c0_20 = arith.constant 0 : index
    %c64 = arith.constant 64 : index
    %46 = vector.load %arg18[%c0_20, %c64] : memref<16x256xbf16, #tpu.memory_space<vmem>>, vector<16x32xbf16>
    %c0_21 = arith.constant 0 : index
    %c192 = arith.constant 192 : index
    %47 = vector.load %arg18[%c0_21, %c192] : memref<16x256xbf16, #tpu.memory_space<vmem>>, vector<16x32xbf16>
    %cst_22 = arith.constant dense<0.000000e+00> : vector<16x16xf32>
    %48 = tpu.matmul %45, %46, %cst_22 {dimension_numbers = #tpu.dot_dimension_numbers<[1], [1], [0], [0], [0, 0, 1, 0], [], []>} : vector<16x32xbf16>, vector<16x32xbf16>, vector<16x16xf32> -> vector<16x16xf32>
    %cst_23 = arith.constant dense<0xFF800000> : vector<16xf32>
    %49 = vector.multi_reduction <maximumf>, %48, %cst_23 [1] : vector<16x16xf32> to vector<16xf32>
    %50 = vector.shape_cast %49 : vector<16xf32> to vector<16x1xf32>
    %51 = vector.broadcast %50 : vector<16x1xf32> to vector<16x16xf32>
    %52 = arith.subf %48, %51 : vector<16x16xf32>
    %53 = math.exp %52 : vector<16x16xf32>
    %cst_24 = arith.constant dense<0.000000e+00> : vector<16xf32>
    %54 = vector.multi_reduction <add>, %53, %cst_24 [1] : vector<16x16xf32> to vector<16xf32>
    %55 = vector.shape_cast %54 : vector<16xf32> to vector<16x1xf32>
    %56 = arith.truncf %53 : vector<16x16xf32> to vector<16x16xbf16>
    %cst_25 = arith.constant dense<0.000000e+00> : vector<16x32xf32>
    %57 = tpu.matmul %56, %47, %cst_25 {dimension_numbers = #tpu.dot_dimension_numbers<[1], [0], [0], [1], [0, 0, 1, 1], [], []>} : vector<16x16xbf16>, vector<16x32xbf16>, vector<16x32xf32> -> vector<16x32xf32>
    %58 = tpu.reciprocal %55 {approx = true} : vector<16x1xf32> -> vector<16x1xf32>
    %59 = vector.broadcast %58 : vector<16x1xf32> to vector<16x32xf32>
    %60 = arith.mulf %57, %59 : vector<16x32xf32>
    %61 = arith.truncf %60 : vector<16x32xf32> to vector<16x32xbf16>
    %c0_26 = arith.constant 0 : index
    %c64_27 = arith.constant 64 : index
    %62 = vector.load %arg19[%c0_26, %c64_27] : memref<16x128xbf16, #tpu.memory_space<vmem>>, vector<16x32xbf16>
    tpu.vector_store %arg19[%c0_26, %c64_27], %61 {strides = array<i32>} : memref<16x128xbf16, #tpu.memory_space<vmem>>, vector<16x32xbf16>,
    %63 = vector.extract_strided_slice %8 {offsets = [0, 96], sizes = [16, 32], strides = [1, 1]} : vector<16x128xbf16> to vector<16x32xbf16>
    %c0_28 = arith.constant 0 : index
    %c96 = arith.constant 96 : index
    %64 = vector.load %arg18[%c0_28, %c96] : memref<16x256xbf16, #tpu.memory_space<vmem>>, vector<16x32xbf16>
    %c0_29 = arith.constant 0 : index
    %c224 = arith.constant 224 : index
    %65 = vector.load %arg18[%c0_29, %c224] : memref<16x256xbf16, #tpu.memory_space<vmem>>, vector<16x32xbf16>
    %cst_30 = arith.constant dense<0.000000e+00> : vector<16x16xf32>
    %66 = tpu.matmul %63, %64, %cst_30 {dimension_numbers = #tpu.dot_dimension_numbers<[1], [1], [0], [0], [0, 0, 1, 0], [], []>} : vector<16x32xbf16>, vector<16x32xbf16>, vector<16x16xf32> -> vector<16x16xf32>
    %cst_31 = arith.constant dense<0xFF800000> : vector<16xf32>
    %67 = vector.multi_reduction <maximumf>, %66, %cst_31 [1] : vector<16x16xf32> to vector<16xf32>
    %68 = vector.shape_cast %67 : vector<16xf32> to vector<16x1xf32>
    %69 = vector.broadcast %68 : vector<16x1xf32> to vector<16x16xf32>
    %70 = arith.subf %66, %69 : vector<16x16xf32>
    %71 = math.exp %70 : vector<16x16xf32>
    %cst_32 = arith.constant dense<0.000000e+00> : vector<16xf32>
    %72 = vector.multi_reduction <add>, %71, %cst_32 [1] : vector<16x16xf32> to vector<16xf32>
    %73 = vector.shape_cast %72 : vector<16xf32> to vector<16x1xf32>
    %74 = arith.truncf %71 : vector<16x16xf32> to vector<16x16xbf16>
    %cst_33 = arith.constant dense<0.000000e+00> : vector<16x32xf32>
    %75 = tpu.matmul %74, %65, %cst_33 {dimension_numbers = #tpu.dot_dimension_numbers<[1], [0], [0], [1], [0, 0, 1, 1], [], []>} : vector<16x16xbf16>, vector<16x32xbf16>, vector<16x32xf32> -> vector<16x32xf32>
    %76 = tpu.reciprocal %73 {approx = true} : vector<16x1xf32> -> vector<16x1xf32>
    %77 = vector.broadcast %76 : vector<16x1xf32> to vector<16x32xf32>
    %78 = arith.mulf %75, %77 : vector<16x32xf32>
    %79 = arith.truncf %78 : vector<16x32xf32> to vector<16x32xbf16>
    %c0_34 = arith.constant 0 : index
    %c96_35 = arith.constant 96 : index
    %80 = vector.load %arg19[%c0_34, %c96_35] : memref<16x128xbf16, #tpu.memory_space<vmem>>, vector<16x32xbf16>
    tpu.vector_store %arg19[%c0_34, %c96_35], %79 {strides = array<i32>} : memref<16x128xbf16, #tpu.memory_space<vmem>>, vector<16x32xbf16>,
    %c0_36 = arith.constant 0 : index
    %c0_37 = arith.constant 0 : index
    %81 = vector.load %arg19[%c0_36, %c0_37] : memref<16x128xbf16, #tpu.memory_space<vmem>>, vector<16x128xbf16>
    %c0_38 = arith.constant 0 : index
    %c0_39 = arith.constant 0 : index
    %82 = vector.load %arg6[%c0_38, %c0_39] : memref<128x128xbf16, #tpu.memory_space<vmem>>, vector<128x128xbf16>
    %cst_40 = arith.constant dense<0.000000e+00> : vector<16x128xf32>
    %83 = tpu.matmul %81, %82, %cst_40 {dimension_numbers = #tpu.dot_dimension_numbers<[1], [0], [0], [1], [0, 0, 1, 1], [], []>} : vector<16x128xbf16>, vector<128x128xbf16>, vector<16x128xf32> -> vector<16x128xf32>
    %c0_41 = arith.constant 0 : index
    %c0_42 = arith.constant 0 : index
    %84 = vector.load %arg7[%c0_41, %c0_42] : memref<1x128xf32, #tpu.memory_space<vmem>>, vector<1x128xf32>
    %85 = vector.broadcast %84 : vector<1x128xf32> to vector<16x128xf32>
    %86 = arith.addf %83, %85 : vector<16x128xf32>
    %87 = arith.addf %4, %86 : vector<16x128xf32>
    %c0_43 = arith.constant 0 : index
    %c0_44 = arith.constant 0 : index
    %88 = vector.load %arg8[%c0_43, %c0_44] : memref<1x128xf32, #tpu.memory_space<vmem>>, vector<1x128xf32>
    %c0_45 = arith.constant 0 : index
    %c0_46 = arith.constant 0 : index
    %89 = vector.load %arg9[%c0_45, %c0_46] : memref<1x128xf32, #tpu.memory_space<vmem>>, vector<1x128xf32>
    %cst_47 = arith.constant dense<0.000000e+00> : vector<16xf32>
    %90 = vector.multi_reduction <add>, %87, %cst_47 [1] : vector<16x128xf32> to vector<16xf32>
    %91 = vector.shape_cast %90 : vector<16xf32> to vector<16x1xf32>
    %cst_48 = arith.constant 1.280000e+02 : f32
    %92 = vector.broadcast %cst_48 : f32 to vector<16x1xf32>
    %93 = arith.divf %91, %92 : vector<16x1xf32>
    %94 = vector.broadcast %93 : vector<16x1xf32> to vector<16x128xf32>
    %95 = arith.subf %87, %94 : vector<16x128xf32>
    %96 = arith.mulf %95, %95 : vector<16x128xf32>
    %cst_49 = arith.constant dense<0.000000e+00> : vector<16xf32>
    %97 = vector.multi_reduction <add>, %96, %cst_49 [1] : vector<16x128xf32> to vector<16xf32>
    %98 = vector.shape_cast %97 : vector<16xf32> to vector<16x1xf32>
    %cst_50 = arith.constant 1.280000e+02 : f32
    %99 = vector.broadcast %cst_50 : f32 to vector<16x1xf32>
    %100 = arith.divf %98, %99 : vector<16x1xf32>
    %101 = vector.broadcast %93 : vector<16x1xf32> to vector<16x128xf32>
    %102 = arith.subf %87, %101 : vector<16x128xf32>
    %cst_51 = arith.constant 9.99999997E-7 : f32
    %103 = vector.broadcast %cst_51 : f32 to vector<16x1xf32>
    %104 = arith.addf %100, %103 : vector<16x1xf32>
    %105 = math.rsqrt %104 : vector<16x1xf32>
    %106 = vector.broadcast %105 : vector<16x1xf32> to vector<16x128xf32>
    %107 = arith.mulf %102, %106 : vector<16x128xf32>
    %108 = vector.broadcast %88 : vector<1x128xf32> to vector<16x128xf32>
    %109 = arith.mulf %107, %108 : vector<16x128xf32>
    %110 = vector.broadcast %89 : vector<1x128xf32> to vector<16x128xf32>
    %111 = arith.addf %109, %110 : vector<16x128xf32>
    %112 = arith.truncf %111 : vector<16x128xf32> to vector<16x128xbf16>
    %c0_52 = arith.constant 0 : index
    %c0_53 = arith.constant 0 : index
    %113 = vector.load %arg10[%c0_52, %c0_53] : memref<128x256xbf16, #tpu.memory_space<vmem>>, vector<128x256xbf16>
    %cst_54 = arith.constant dense<0.000000e+00> : vector<16x256xf32>
    %114 = tpu.matmul %112, %113, %cst_54 {dimension_numbers = #tpu.dot_dimension_numbers<[1], [0], [0], [1], [0, 0, 1, 1], [], []>} : vector<16x128xbf16>, vector<128x256xbf16>, vector<16x256xf32> -> vector<16x256xf32>
    %c0_55 = arith.constant 0 : index
    %c0_56 = arith.constant 0 : index
    %115 = vector.load %arg11[%c0_55, %c0_56] : memref<1x256xf32, #tpu.memory_space<vmem>>, vector<1x256xf32>
    %116 = vector.broadcast %115 : vector<1x256xf32> to vector<16x256xf32>
    %117 = arith.addf %114, %116 : vector<16x256xf32>
    %cst_57 = arith.constant 0.000000e+00 : f32
    %118 = vector.broadcast %cst_57 : f32 to vector<16x256xf32>
    %119 = arith.maximumf %117, %118 : vector<16x256xf32>
    %120 = arith.truncf %119 : vector<16x256xf32> to vector<16x256xbf16>
    %c0_58 = arith.constant 0 : index
    %c0_59 = arith.constant 0 : index
    %121 = vector.load %arg12[%c0_58, %c0_59] : memref<256x128xbf16, #tpu.memory_space<vmem>>, vector<256x128xbf16>
    %cst_60 = arith.constant dense<0.000000e+00> : vector<16x128xf32>
    %122 = tpu.matmul %120, %121, %cst_60 {dimension_numbers = #tpu.dot_dimension_numbers<[1], [0], [0], [1], [0, 0, 1, 1], [], []>} : vector<16x256xbf16>, vector<256x128xbf16>, vector<16x128xf32> -> vector<16x128xf32>
    %c0_61 = arith.constant 0 : index
    %c0_62 = arith.constant 0 : index
    %123 = vector.load %arg13[%c0_61, %c0_62] : memref<1x128xf32, #tpu.memory_space<vmem>>, vector<1x128xf32>
    %124 = vector.broadcast %123 : vector<1x128xf32> to vector<16x128xf32>
    %125 = arith.addf %122, %124 : vector<16x128xf32>
    %126 = arith.addf %111, %125 : vector<16x128xf32>
    %c0_63 = arith.constant 0 : index
    %c0_64 = arith.constant 0 : index
    %127 = vector.load %arg14[%c0_63, %c0_64] : memref<1x128xf32, #tpu.memory_space<vmem>>, vector<1x128xf32>
    %c0_65 = arith.constant 0 : index
    %c0_66 = arith.constant 0 : index
    %128 = vector.load %arg15[%c0_65, %c0_66] : memref<1x128xf32, #tpu.memory_space<vmem>>, vector<1x128xf32>
    %cst_67 = arith.constant dense<0.000000e+00> : vector<16xf32>
    %129 = vector.multi_reduction <add>, %126, %cst_67 [1] : vector<16x128xf32> to vector<16xf32>
    %130 = vector.shape_cast %129 : vector<16xf32> to vector<16x1xf32>
    %cst_68 = arith.constant 1.280000e+02 : f32
    %131 = vector.broadcast %cst_68 : f32 to vector<16x1xf32>
    %132 = arith.divf %130, %131 : vector<16x1xf32>
    %133 = vector.broadcast %132 : vector<16x1xf32> to vector<16x128xf32>
    %134 = arith.subf %126, %133 : vector<16x128xf32>
    %135 = arith.mulf %134, %134 : vector<16x128xf32>
    %cst_69 = arith.constant dense<0.000000e+00> : vector<16xf32>
    %136 = vector.multi_reduction <add>, %135, %cst_69 [1] : vector<16x128xf32> to vector<16xf32>
    %137 = vector.shape_cast %136 : vector<16xf32> to vector<16x1xf32>
    %cst_70 = arith.constant 1.280000e+02 : f32
    %138 = vector.broadcast %cst_70 : f32 to vector<16x1xf32>
    %139 = arith.divf %137, %138 : vector<16x1xf32>
    %140 = vector.broadcast %132 : vector<16x1xf32> to vector<16x128xf32>
    %141 = arith.subf %126, %140 : vector<16x128xf32>
    %cst_71 = arith.constant 9.99999997E-7 : f32
    %142 = vector.broadcast %cst_71 : f32 to vector<16x1xf32>
    %143 = arith.addf %139, %142 : vector<16x1xf32>
    %144 = math.rsqrt %143 : vector<16x1xf32>
    %145 = vector.broadcast %144 : vector<16x1xf32> to vector<16x128xf32>
    %146 = arith.mulf %141, %145 : vector<16x128xf32>
    %147 = vector.broadcast %127 : vector<1x128xf32> to vector<16x128xf32>
    %148 = arith.mulf %146, %147 : vector<16x128xf32>
    %149 = vector.broadcast %128 : vector<1x128xf32> to vector<16x128xf32>
    %150 = arith.addf %148, %149 : vector<16x128xf32>
    %c0_72 = arith.constant 0 : index
    %c0_73 = arith.constant 0 : index
    %c0_74 = arith.constant 0 : index
    %151 = vector.load %arg16[%c0_72, %c0_73, %c0_74] : memref<1x16x128xf32, #tpu.memory_space<vmem>>, vector<1x16x128xf32>
    %152 = vector.shape_cast %151 : vector<1x16x128xf32> to vector<16x128xf32>
    %153 = vector.shape_cast %150 : vector<16x128xf32> to vector<1x16x128xf32>
    tpu.vector_store %arg16[%c0_72, %c0_73, %c0_74], %153 {strides = array<i32>} : memref<1x16x128xf32, #tpu.memory_space<vmem>>, vector<1x16x128xf32>,
    return
  }
  func.func @transform_0(%arg0: i32, %arg1: i32) -> (i32, i32, i32) {
    %c0_i32 = arith.constant 0 : i32
    %c0_i32_0 = arith.constant 0 : i32
    return %arg0, %arg1, %c0_i32 : i32, i32, i32
  }
  func.func @transform_1(%arg0: i32, %arg1: i32) -> (i32, i32, i32) {
    %c0_i32 = arith.constant 0 : i32
    %c0_i32_0 = arith.constant 0 : i32
    %c0_i32_1 = arith.constant 0 : i32
    return %arg0, %c0_i32, %c0_i32_0 : i32, i32, i32
  }
  func.func @transform_2(%arg0: i32, %arg1: i32) -> (i32, i32) {
    %c0_i32 = arith.constant 0 : i32
    %c0_i32_0 = arith.constant 0 : i32
    %c0_i32_1 = arith.constant 0 : i32
    return %c0_i32, %c0_i32_0 : i32, i32
  }
  func.func @transform_3(%arg0: i32, %arg1: i32) -> (i32, i32) {
    %c0_i32 = arith.constant 0 : i32
    %c0_i32_0 = arith.constant 0 : i32
    %c0_i32_1 = arith.constant 0 : i32
    return %c0_i32, %c0_i32_0 : i32, i32
  }
  func.func @transform_4(%arg0: i32, %arg1: i32) -> (i32, i32) {
    %c0_i32 = arith.constant 0 : i32
    %c0_i32_0 = arith.constant 0 : i32
    %c0_i32_1 = arith.constant 0 : i32
    return %c0_i32, %c0_i32_0 : i32, i32
  }
  func.func @transform_5(%arg0: i32, %arg1: i32) -> (i32, i32) {
    %c0_i32 = arith.constant 0 : i32
    %c0_i32_0 = arith.constant 0 : i32
    %c0_i32_1 = arith.constant 0 : i32
    return %c0_i32, %c0_i32_0 : i32, i32
  }
  func.func @transform_6(%arg0: i32, %arg1: i32) -> (i32, i32) {
    %c0_i32 = arith.constant 0 : i32
    %c0_i32_0 = arith.constant 0 : i32
    %c0_i32_1 = arith.constant 0 : i32
    return %c0_i32, %c0_i32_0 : i32, i32
  }
  func.func @transform_7(%arg0: i32, %arg1: i32) -> (i32, i32) {
    %c0_i32 = arith.constant 0 : i32
    %c0_i32_0 = arith.constant 0 : i32
    %c0_i32_1 = arith.constant 0 : i32
    return %c0_i32, %c0_i32_0 : i32, i32
  }
  func.func @transform_8(%arg0: i32, %arg1: i32) -> (i32, i32) {
    %c0_i32 = arith.constant 0 : i32
    %c0_i32_0 = arith.constant 0 : i32
    %c0_i32_1 = arith.constant 0 : i32
    return %c0_i32, %c0_i32_0 : i32, i32
  }
  func.func @transform_9(%arg0: i32, %arg1: i32) -> (i32, i32) {
    %c0_i32 = arith.constant 0 : i32
    %c0_i32_0 = arith.constant 0 : i32
    %c0_i32_1 = arith.constant 0 : i32
    return %c0_i32, %c0_i32_0 : i32, i32
  }
  func.func @transform_10(%arg0: i32, %arg1: i32) -> (i32, i32) {
    %c0_i32 = arith.constant 0 : i32
    %c0_i32_0 = arith.constant 0 : i32
    %c0_i32_1 = arith.constant 0 : i32
    return %c0_i32, %c0_i32_0 : i32, i32
  }
  func.func @transform_11(%arg0: i32, %arg1: i32) -> (i32, i32) {
    %c0_i32 = arith.constant 0 : i32
    %c0_i32_0 = arith.constant 0 : i32
    %c0_i32_1 = arith.constant 0 : i32
    return %c0_i32, %c0_i32_0 : i32, i32
  }
  func.func @transform_12(%arg0: i32, %arg1: i32) -> (i32, i32) {
    %c0_i32 = arith.constant 0 : i32
    %c0_i32_0 = arith.constant 0 : i32
    %c0_i32_1 = arith.constant 0 : i32
    return %c0_i32, %c0_i32_0 : i32, i32
  }
  func.func @transform_13(%arg0: i32, %arg1: i32) -> (i32, i32) {
    %c0_i32 = arith.constant 0 : i32
    %c0_i32_0 = arith.constant 0 : i32
    %c0_i32_1 = arith.constant 0 : i32
    return %c0_i32, %c0_i32_0 : i32, i32
  }
  func.func @transform_14(%arg0: i32, %arg1: i32) -> (i32, i32, i32) {
    %c0_i32 = arith.constant 0 : i32
    %c0_i32_0 = arith.constant 0 : i32
    return %arg0, %arg1, %c0_i32 : i32, i32, i32
  }
}

</mosaic_0001>

<llo_original>
// kernel: tpu_custom_call.1
$region0: #{tpu_custom_call.1}
  #allocation0 [shape = 'u32[]', space=smem, size = 0x4, offset = 0x4, fixed_abs, tag = 'smem constant byte address 0x4 - core index']
  #allocation1 [shape = 'u32[144,128]{1,0:T(1,128)}', space=vmem, size = 0x12000, scoped, tag = 'internal scratch']
  #allocation2 [shape = 'bf16[16,128]{1,0:T(16,128)(2,1)}', space=vmem, size = 0x1000, scoped, tag = 'scratch operand']
  #allocation3 [shape = 'bf16[16,256]{1,0:T(16,128)(2,1)}', space=vmem, size = 0x2000, scoped, tag = 'scratch operand']
  #allocation4 [shape = 'bf16[16,128]{1,0:T(16,128)(2,1)}', space=vmem, size = 0x1000, scoped, tag = 'scratch operand']
  %s0 = inlined_call_operand.hbm [shape: f32[2,16,128], index: 0, kind: input, shape index: {}]
  %s1 = inlined_call_operand.hbm [shape: bf16[2,16,128], index: 1, kind: input, shape index: {}]
  %s2 = inlined_call_operand.hbm [shape: bf16[128,384], index: 2, kind: input, shape index: {}]
  %s3 = inlined_call_operand.vmem [shape: f32[1,384], index: 3, kind: input, shape index: {}]
  %s4 = inlined_call_operand.hbm [shape: bf16[128,128], index: 4, kind: input, shape index: {}]
  %s5 = inlined_call_operand.vmem [shape: f32[1,128], index: 5, kind: input, shape index: {}]
  %s6 = inlined_call_operand.vmem [shape: f32[1,128], index: 6, kind: input, shape index: {}]
  %s7 = inlined_call_operand.vmem [shape: f32[1,128], index: 7, kind: input, shape index: {}]
  %s8 = inlined_call_operand.hbm [shape: bf16[128,256], index: 8, kind: input, shape index: {}]
  %s9 = inlined_call_operand.vmem [shape: f32[1,256], index: 9, kind: input, shape index: {}]
  %s10 = inlined_call_operand.hbm [shape: bf16[256,128], index: 10, kind: input, shape index: {}]
  %s11 = inlined_call_operand.vmem [shape: f32[1,128], index: 11, kind: input, shape index: {}]
  %s12 = inlined_call_operand.vmem [shape: f32[1,128], index: 12, kind: input, shape index: {}]
  %s13 = inlined_call_operand.vmem [shape: f32[1,128], index: 13, kind: input, shape index: {}]
  %s14 = inlined_call_operand.hbm [shape: f32[2,16,128], index: 14, kind: output, shape index: {}]
  %s15 = sld [smem:[#allocation0]]
  $region117: #{tpu_custom_call.1} parent=0
    _
  %s17 = ssub.s32 1, %s15
  %s18 = scalar_select 0, %s17, %s15
  $region1: #{tpu_custom_call.1} parent=0
    #allocation5 [shape = 'u8[16384]{0}', space=vmem, size = 0x4000, scoped, tag = 'input window, operand 0']
    #allocation6 [shape = 's32[2]{0}', space=sflag, size = 0x8, scoped, tag = 'scoped memory for tpu_custom_call.1']
    #allocation7 [shape = 's32[2]{0}', space=sflag, size = 0x8, scoped, tag = 'scoped memory for tpu_custom_call.1']
    #allocation8 [shape = 'u8[4096]{0}', space=vmem, size = 0x1000, scoped, tag = 'input window, operand 1, single buffered']
    #allocation9 [shape = 's32[1]{0}', space=sflag, size = 0x4, scoped, tag = 'scoped memory for tpu_custom_call.1']
    #allocation10 [shape = 'u8[98304]{0}', space=vmem, size = 0x18000, scoped, tag = 'input window, operand 2, single buffered']
    #allocation11 [shape = 'u8[32768]{0}', space=vmem, size = 0x8000, scoped, tag = 'input window, operand 4, single buffered']
    #allocation12 [shape = 's32[1]{0}', space=sflag, size = 0x4, scoped, tag = 'scoped memory for tpu_custom_call.1']
    #allocation13 [shape = 'u8[65536]{0}', space=vmem, size = 0x10000, scoped, tag = 'input window, operand 8, single buffered']
    #allocation14 [shape = 'u8[65536]{0}', space=vmem, size = 0x10000, scoped, tag = 'input window, operand 10, single buffered']
    #allocation15 [shape = 's32[1]{0}', space=sflag, size = 0x4, scoped, tag = 'scoped memory for tpu_custom_call.1']
    #allocation16 [shape = 'u8[16384]{0}', space=vmem, size = 0x4000, scoped, tag = 'output window, operand 0']
    %19 = vsyncpa [#allocation6], 0
    %s20 = scalar_lea.sflag [#allocation6], 1
    %21 = vsyncpa %s20, 0
    %22 = vsyncpa [#allocation9], 0
    %23 = vsyncpa [#allocation12], 0
    %24 = vsyncpa [#allocation15], 0
    %25 = vsyncpa [#allocation7], 0
    %s26 = scalar_lea.sflag [#allocation7], 1
    %27 = vsyncpa %s26, 0
    loop: start=0, step=1, limit=4
    $region2: #{tpu_custom_call.1} parent=1 // loop_pre_header
      _
    $region3: #{tpu_custom_call.1} parent=1 // loop_header
      %s29 = sphi 0, %s33
      %p30 = scmp.ge.s32.totalorder %s29, 4
      %s36 = sphi 0, %s48
      %s37 = sphi 0, %s44
      %s38 = sphi 0, %s36
      %s39 = sphi 0, %s37
      %s40 = sphi 0, %s38
      %s41 = sphi 0, %s39
      %s53 = sphi 0, %s55
      %s56 = sphi 0, %s53
      %s57 = sphi 0, %s56
      %s73 = sphi 0, %s57
      %s79 = sphi 0, %s81
      %s82 = sphi 0, %s79
      %s83 = sphi 0, %s82
      %s99 = sphi 0, %s83
      %s103 = sphi 0, %s103
      %s105 = sphi 0, %s103
      %s106 = sphi 0, %s105
      %s120 = sphi 0, %s106
      %s124 = sphi 0, %s124
      %s126 = sphi 0, %s124
      %s127 = sphi 0, %s126
      %s141 = sphi 0, %s127
      %s145 = sphi 0, %s145
      %s147 = sphi 0, %s145
      %s148 = sphi 0, %s147
      %s162 = sphi 0, %s148
      %s166 = sphi 0, %s166
      %s168 = sphi 0, %s166
      %s169 = sphi 0, %s168
      %s183 = sphi 0, %s169
      %s187 = sphi 0, %s187
      %s189 = sphi 0, %s187
      %s190 = sphi 0, %s189
      %s204 = sphi 0, %s190
      %s208 = sphi 0, %s208
      %s210 = sphi 0, %s208
      %s211 = sphi 0, %s210
      %s225 = sphi 0, %s211
      %s229 = sphi 0, %s229
      %s231 = sphi 0, %s229
      %s232 = sphi 0, %s231
      %s246 = sphi 0, %s232
      %s250 = sphi 0, %s250
      %s252 = sphi 0, %s250
      %s253 = sphi 0, %s252
      %s267 = sphi 0, %s253
      %s271 = sphi 0, %s271
      %s273 = sphi 0, %s271
      %s274 = sphi 0, %s273
      %s288 = sphi 0, %s274
      %s292 = sphi 0, %s292
      %s294 = sphi 0, %s292
      %s295 = sphi 0, %s294
      %s309 = sphi 0, %s295
      %s313 = sphi 0, %s313
      %s315 = sphi 0, %s313
      %s316 = sphi 0, %s315
      %s330 = sphi 0, %s316
      %s334 = sphi 0, %s334
      %s336 = sphi 0, %s334
      %s337 = sphi 0, %s336
      %s351 = sphi 0, %s337
      %s359 = sphi 0, %s361
      %s362 = sphi 0, %s359
      %s363 = sphi 0, %s362
      %s379 = sphi 0, %s363
    $region4: #{tpu_custom_call.1} parent=1 // loop_header_branch
      %32 = sbr.rel (%p30) target = $region8
    $region5: #{tpu_custom_call.1} parent=1 // loop_body
      %s34 = ssub.s32 %s29, 1
      %s35 = ssub.s32 %s29, 2
      %s42 = sadd.s32 1, %s37
      %p43 = scmp.ge.s32.totalorder %s42, 1
      %s44 = scalar_select %p43, 0, %s42
      %s45 = sadd.s32 1, %s36
      %s46 = scalar_select %p43, %s45, %s36
      %p47 = scmp.ge.s32.totalorder %s46, 2
      %s48 = scalar_select %p47, 0, %s46
      %s49 = ssub.s32 %s36, %s48
      %s50 = ssub.s32 %s37, %s44
      %s51 = sor.u32 %s49, %s50
      %p52 = scmp.eq.s32.totalorder %s51, 0
      %s54 = sadd.s32 %s53, 1
      %s55 = scalar_select %p52, %s53, %s54
      %p58 = pneg %p52
      %p59 = scmp.eq.s32.totalorder %s29, 1
      %p60 = por %p58, %p59
      %p61 = scmp.ne.s32.totalorder %s53, %s56
      %p62 = scmp.eq.s32.totalorder %s29, 0
      %p63 = por %p61, %p62
      %p64 = scmp.ne.s32.totalorder %s53, %s56
      %p65 = scmp.eq.s32.totalorder %s34, 1
      %p66 = por %p64, %p65
      %p67 = scmp.ne.s32.totalorder %s56, %s57
      %p68 = scmp.eq.s32.totalorder %s34, 0
      %p69 = por %p67, %p68
      %p70 = scmp.ne.s32.totalorder %s56, %s57
      %p71 = scmp.eq.s32.totalorder %s35, 1
      %p72 = por %p70, %p71
      %p74 = scmp.ne.s32.totalorder %s57, %s73
      %p75 = scmp.eq.s32.totalorder %s35, 0
      %p76 = por %p74, %p75
      %s77 = ssub.s32 %s36, %s48
      %p78 = scmp.eq.s32.totalorder %s77, 0
      %s80 = sadd.s32 %s79, 1
      %s81 = scalar_select %p78, %s79, %s80
      %p84 = pneg %p78
      %p85 = scmp.eq.s32.totalorder %s29, 1
      %p86 = por %p84, %p85
      %p87 = scmp.ne.s32.totalorder %s79, %s82
      %p88 = scmp.eq.s32.totalorder %s29, 0
      %p89 = por %p87, %p88
      %p90 = scmp.ne.s32.totalorder %s79, %s82
      %p91 = scmp.eq.s32.totalorder %s34, 1
      %p92 = por %p90, %p91
      %p93 = scmp.ne.s32.totalorder %s82, %s83
      %p94 = scmp.eq.s32.totalorder %s34, 0
      %p95 = por %p93, %p94
      %p96 = scmp.ne.s32.totalorder %s82, %s83
      %p97 = scmp.eq.s32.totalorder %s35, 1
      %p98 = por %p96, %p97
      %p100 = scmp.ne.s32.totalorder %s83, %s99
      %p101 = scmp.eq.s32.totalorder %s35, 0
      %p102 = por %p100, %p101
      %s104 = sadd.s32 %s103, 1
      %p107 = scmp.eq.s32.totalorder %s29, 1
      %p108 = scmp.ne.s32.totalorder %s103, %s105
      %p109 = scmp.eq.s32.totalorder %s29, 0
      %p110 = por %p108, %p109
      %p111 = scmp.ne.s32.totalorder %s103, %s105
      %p112 = scmp.eq.s32.totalorder %s34, 1
      %p113 = por %p111, %p112
      %p114 = scmp.ne.s32.totalorder %s105, %s106
      %p115 = scmp.eq.s32.totalorder %s34, 0
      %p116 = por %p114, %p115
      %p117 = scmp.ne.s32.totalorder %s105, %s106
      %p118 = scmp.eq.s32.totalorder %s35, 1
      %p119 = por %p117, %p118
      %p121 = scmp.ne.s32.totalorder %s106, %s120
      %p122 = scmp.eq.s32.totalorder %s35, 0
      %p123 = por %p121, %p122
      %s125 = sadd.s32 %s124, 1
      %p128 = scmp.eq.s32.totalorder %s29, 1
      %p129 = scmp.ne.s32.totalorder %s124, %s126
      %p130 = scmp.eq.s32.totalorder %s29, 0
      %p131 = por %p129, %p130
      %p132 = scmp.ne.s32.totalorder %s124, %s126
      %p133 = scmp.eq.s32.totalorder %s34, 1
      %p134 = por %p132, %p133
      %p135 = scmp.ne.s32.totalorder %s126, %s127
      %p136 = scmp.eq.s32.totalorder %s34, 0
      %p137 = por %p135, %p136
      %p138 = scmp.ne.s32.totalorder %s126, %s127
      %p139 = scmp.eq.s32.totalorder %s35, 1
      %p140 = por %p138, %p139
      %p142 = scmp.ne.s32.totalorder %s127, %s141
      %p143 = scmp.eq.s32.totalorder %s35, 0
      %p144 = por %p142, %p143
      %s146 = sadd.s32 %s145, 1
      %p149 = scmp.eq.s32.totalorder %s29, 1
      %p150 = scmp.ne.s32.totalorder %s145, %s147
      %p151 = scmp.eq.s32.totalorder %s29, 0
      %p152 = por %p150, %p151
      %p153 = scmp.ne.s32.totalorder %s145, %s147
      %p154 = scmp.eq.s32.totalorder %s34, 1
      %p155 = por %p153, %p154
      %p156 = scmp.ne.s32.totalorder %s147, %s148
      %p157 = scmp.eq.s32.totalorder %s34, 0
      %p158 = por %p156, %p157
      %p159 = scmp.ne.s32.totalorder %s147, %s148
      %p160 = scmp.eq.s32.totalorder %s35, 1
      %p161 = por %p159, %p160
      %p163 = scmp.ne.s32.totalorder %s148, %s162
      %p164 = scmp.eq.s32.totalorder %s35, 0
      %p165 = por %p163, %p164
      %s167 = sadd.s32 %s166, 1
      %p170 = scmp.eq.s32.totalorder %s29, 1
      %p171 = scmp.ne.s32.totalorder %s166, %s168
      %p172 = scmp.eq.s32.totalorder %s29, 0
      %p173 = por %p171, %p172
      %p174 = scmp.ne.s32.totalorder %s166, %s168
      %p175 = scmp.eq.s32.totalorder %s34, 1
      %p176 = por %p174, %p175
      %p177 = scmp.ne.s32.totalorder %s168, %s169
      %p178 = scmp.eq.s32.totalorder %s34, 0
      %p179 = por %p177, %p178
      %p180 = scmp.ne.s32.totalorder %s168, %s169
      %p181 = scmp.eq.s32.totalorder %s35, 1
      %p182 = por %p180, %p181
      %p184 = scmp.ne.s32.totalorder %s169, %s183
      %p185 = scmp.eq.s32.totalorder %s35, 0
      %p186 = por %p184, %p185
      %s188 = sadd.s32 %s187, 1
      %p191 = scmp.eq.s32.totalorder %s29, 1
      %p192 = scmp.ne.s32.totalorder %s187, %s189
      %p193 = scmp.eq.s32.totalorder %s29, 0
      %p194 = por %p192, %p193
      %p195 = scmp.ne.s32.totalorder %s187, %s189
      %p196 = scmp.eq.s32.totalorder %s34, 1
      %p197 = por %p195, %p196
      %p198 = scmp.ne.s32.totalorder %s189, %s190
      %p199 = scmp.eq.s32.totalorder %s34, 0
      %p200 = por %p198, %p199
      %p201 = scmp.ne.s32.totalorder %s189, %s190
      %p202 = scmp.eq.s32.totalorder %s35, 1
      %p203 = por %p201, %p202
      %p205 = scmp.ne.s32.totalorder %s190, %s204
      %p206 = scmp.eq.s32.totalorder %s35, 0
      %p207 = por %p205, %p206
      %s209 = sadd.s32 %s208, 1
      %p212 = scmp.eq.s32.totalorder %s29, 1
      %p213 = scmp.ne.s32.totalorder %s208, %s210
      %p214 = scmp.eq.s32.totalorder %s29, 0
      %p215 = por %p213, %p214
      %p216 = scmp.ne.s32.totalorder %s208, %s210
      %p217 = scmp.eq.s32.totalorder %s34, 1
      %p218 = por %p216, %p217
      %p219 = scmp.ne.s32.totalorder %s210, %s211
      %p220 = scmp.eq.s32.totalorder %s34, 0
      %p221 = por %p219, %p220
      %p222 = scmp.ne.s32.totalorder %s210, %s211
      %p223 = scmp.eq.s32.totalorder %s35, 1
      %p224 = por %p222, %p223
      %p226 = scmp.ne.s32.totalorder %s211, %s225
      %p227 = scmp.eq.s32.totalorder %s35, 0
      %p228 = por %p226, %p227
      %s230 = sadd.s32 %s229, 1
      %p233 = scmp.eq.s32.totalorder %s29, 1
      %p234 = scmp.ne.s32.totalorder %s229, %s231
      %p235 = scmp.eq.s32.totalorder %s29, 0
      %p236 = por %p234, %p235
      %p237 = scmp.ne.s32.totalorder %s229, %s231
      %p238 = scmp.eq.s32.totalorder %s34, 1
      %p239 = por %p237, %p238
      %p240 = scmp.ne.s32.totalorder %s231, %s232
      %p241 = scmp.eq.s32.totalorder %s34, 0
      %p242 = por %p240, %p241
      %p243 = scmp.ne.s32.totalorder %s231, %s232
      %p244 = scmp.eq.s32.totalorder %s35, 1
      %p245 = por %p243, %p244
      %p247 = scmp.ne.s32.totalorder %s232, %s246
      %p248 = scmp.eq.s32.totalorder %s35, 0
      %p249 = por %p247, %p248
      %s251 = sadd.s32 %s250, 1
      %p254 = scmp.eq.s32.totalorder %s29, 1
      %p255 = scmp.ne.s32.totalorder %s250, %s252
      %p256 = scmp.eq.s32.totalorder %s29, 0
      %p257 = por %p255, %p256
      %p258 = scmp.ne.s32.totalorder %s250, %s252
      %p259 = scmp.eq.s32.totalorder %s34, 1
      %p260 = por %p258, %p259
      %p261 = scmp.ne.s32.totalorder %s252, %s253
      %p262 = scmp.eq.s32.totalorder %s34, 0
      %p263 = por %p261, %p262
      %p264 = scmp.ne.s32.totalorder %s252, %s253
      %p265 = scmp.eq.s32.totalorder %s35, 1
      %p266 = por %p264, %p265
      %p268 = scmp.ne.s32.totalorder %s253, %s267
      %p269 = scmp.eq.s32.totalorder %s35, 0
      %p270 = por %p268, %p269
      %s272 = sadd.s32 %s271, 1
      %p275 = scmp.eq.s32.totalorder %s29, 1
      %p276 = scmp.ne.s32.totalorder %s271, %s273
      %p277 = scmp.eq.s32.totalorder %s29, 0
      %p278 = por %p276, %p277
      %p279 = scmp.ne.s32.totalorder %s271, %s273
      %p280 = scmp.eq.s32.totalorder %s34, 1
      %p281 = por %p279, %p280
      %p282 = scmp.ne.s32.totalorder %s273, %s274
      %p283 = scmp.eq.s32.totalorder %s34, 0
      %p284 = por %p282, %p283
      %p285 = scmp.ne.s32.totalorder %s273, %s274
      %p286 = scmp.eq.s32.totalorder %s35, 1
      %p287 = por %p285, %p286
      %p289 = scmp.ne.s32.totalorder %s274, %s288
      %p290 = scmp.eq.s32.totalorder %s35, 0
      %p291 = por %p289, %p290
      %s293 = sadd.s32 %s292, 1
      %p296 = scmp.eq.s32.totalorder %s29, 1
      %p297 = scmp.ne.s32.totalorder %s292, %s294
      %p298 = scmp.eq.s32.totalorder %s29, 0
      %p299 = por %p297, %p298
      %p300 = scmp.ne.s32.totalorder %s292, %s294
      %p301 = scmp.eq.s32.totalorder %s34, 1
      %p302 = por %p300, %p301
      %p303 = scmp.ne.s32.totalorder %s294, %s295
      %p304 = scmp.eq.s32.totalorder %s34, 0
      %p305 = por %p303, %p304
      %p306 = scmp.ne.s32.totalorder %s294, %s295
      %p307 = scmp.eq.s32.totalorder %s35, 1
      %p308 = por %p306, %p307
      %p310 = scmp.ne.s32.totalorder %s295, %s309
      %p311 = scmp.eq.s32.totalorder %s35, 0
      %p312 = por %p310, %p311
      %s314 = sadd.s32 %s313, 1
      %p317 = scmp.eq.s32.totalorder %s29, 1
      %p318 = scmp.ne.s32.totalorder %s313, %s315
      %p319 = scmp.eq.s32.totalorder %s29, 0
      %p320 = por %p318, %p319
      %p321 = scmp.ne.s32.totalorder %s313, %s315
      %p322 = scmp.eq.s32.totalorder %s34, 1
      %p323 = por %p321, %p322
      %p324 = scmp.ne.s32.totalorder %s315, %s316
      %p325 = scmp.eq.s32.totalorder %s34, 0
      %p326 = por %p324, %p325
      %p327 = scmp.ne.s32.totalorder %s315, %s316
      %p328 = scmp.eq.s32.totalorder %s35, 1
      %p329 = por %p327, %p328
      %p331 = scmp.ne.s32.totalorder %s316, %s330
      %p332 = scmp.eq.s32.totalorder %s35, 0
      %p333 = por %p331, %p332
      %s335 = sadd.s32 %s334, 1
      %p338 = scmp.eq.s32.totalorder %s29, 1
      %p339 = scmp.ne.s32.totalorder %s334, %s336
      %p340 = scmp.eq.s32.totalorder %s29, 0
      %p341 = por %p339, %p340
      %p342 = scmp.ne.s32.totalorder %s334, %s336
      %p343 = scmp.eq.s32.totalorder %s34, 1
      %p344 = por %p342, %p343
      %p345 = scmp.ne.s32.totalorder %s336, %s337
      %p346 = scmp.eq.s32.totalorder %s34, 0
      %p347 = por %p345, %p346
      %p348 = scmp.ne.s32.totalorder %s336, %s337
      %p349 = scmp.eq.s32.totalorder %s35, 1
      %p350 = por %p348, %p349
      %p352 = scmp.ne.s32.totalorder %s337, %s351
      %p353 = scmp.eq.s32.totalorder %s35, 0
      %p354 = por %p352, %p353
      %s355 = ssub.s32 %s36, %s48
      %s356 = ssub.s32 %s37, %s44
      %s357 = sor.u32 %s355, %s356
      %p358 = scmp.eq.s32.totalorder %s357, 0
      %s360 = sadd.s32 %s359, 1
      %s361 = scalar_select %p358, %s359, %s360
      %p364 = pneg %p358
      %p365 = scmp.eq.s32.totalorder %s29, 1
      %p366 = por %p364, %p365
      %p367 = scmp.ne.s32.totalorder %s359, %s362
      %p368 = scmp.eq.s32.totalorder %s29, 0
      %p369 = por %p367, %p368
      %p370 = scmp.ne.s32.totalorder %s359, %s362
      %p371 = scmp.eq.s32.totalorder %s34, 1
      %p372 = por %p370, %p371
      %p373 = scmp.ne.s32.totalorder %s362, %s363
      %p374 = scmp.eq.s32.totalorder %s34, 0
      %p375 = por %p373, %p374
      %p376 = scmp.ne.s32.totalorder %s362, %s363
      %p377 = scmp.eq.s32.totalorder %s35, 1
      %p378 = por %p376, %p377
      %p380 = scmp.ne.s32.totalorder %s363, %s379
      %p381 = scmp.eq.s32.totalorder %s35, 0
      %p382 = por %p380, %p381
      %p383 = scmp.le.s32.totalorder 1, %s29
      %p384 = scmp.lt.s32.totalorder %s29, 3
      %p385 = pnand %p383, %p384
      %p386 = pneg %p385
      // Predicated region
      $region9: #{tpu_custom_call.1} parent=5 // pred_check
        _
      $region10: #{tpu_custom_call.1} parent=5 // pred_check_branch
        %388 = sbr.rel (%p385) target = $region12
      $region11: #{tpu_custom_call.1} parent=5 // pred_region
        %s389 = ssub.s32 %s29, 1
        // Predicated region
        $region13: #{tpu_custom_call.1} parent=11 // pred_check
          %p390 = pneg %p95
        $region14: #{tpu_custom_call.1} parent=11 // pred_check_branch
          %392 = sbr.rel (%p390) target = $region16
        $region15: #{tpu_custom_call.1} parent=11 // pred_region
          %s394 = ssub.s32 128, 128
          %395 = vsyncadd [#allocation9], %s394
          %s396 = smul.addr %s38, 2
          %s397 = smul.addr %s396, 64
          %s398 = scalar_lea.hbm %s1, %s397
          %s399 = sshll.u32 [#allocation8], 4
          %s400 = int_to_ptr.vmem [resolvable:$true] %s399
          %405 = dma.hbm_to_vmem [thread:$0]  %s398, 128, %s400, [#allocation9], 64, 64, 4
        $region16: #{tpu_custom_call.1} parent=11 // pred_fallthru
          _
        // Predicated region
        $region17: #{tpu_custom_call.1} parent=11 // pred_check
          %p406 = pneg %p116
        $region18: #{tpu_custom_call.1} parent=11 // pred_check_branch
          %408 = sbr.rel (%p406) target = $region20
        $region19: #{tpu_custom_call.1} parent=11 // pred_region
          %s410 = ssub.s32 3072, 3072
          %411 = vsyncadd [#allocation9], %s410
          %s412 = sshll.u32 [#allocation10], 4
          %s413 = int_to_ptr.vmem [resolvable:$true] %s412
          %418 = dma.hbm_to_vmem [thread:$0]  %s2, 3072, %s413, [#allocation9], 192, 192, 12
        $region20: #{tpu_custom_call.1} parent=11 // pred_fallthru
          _
        // Predicated region
        $region21: #{tpu_custom_call.1} parent=11 // pred_check
          %p419 = pneg %p137
        $region22: #{tpu_custom_call.1} parent=11 // pred_check_branch
          %421 = sbr.rel (%p419) target = $region24
        $region23: #{tpu_custom_call.1} parent=11 // pred_region
          _
        $region24: #{tpu_custom_call.1} parent=11 // pred_fallthru
          _
        // Predicated region
        $region25: #{tpu_custom_call.1} parent=11 // pred_check
          %p422 = pneg %p158
        $region26: #{tpu_custom_call.1} parent=11 // pred_check_branch
          %424 = sbr.rel (%p422) target = $region28
        $region27: #{tpu_custom_call.1} parent=11 // pred_region
          %s426 = ssub.s32 1024, 1024
          %427 = vsyncadd [#allocation12], %s426
          %s428 = sshll.u32 [#allocation11], 4
          %s429 = int_to_ptr.vmem [resolvable:$true] %s428
          %434 = dma.hbm_to_vmem [thread:$0]  %s4, 1024, %s429, [#allocation12], 64, 64, 4
        $region28: #{tpu_custom_call.1} parent=11 // pred_fallthru
          _
        // Predicated region
        $region29: #{tpu_custom_call.1} parent=11 // pred_check
          %p435 = pneg %p179
        $region30: #{tpu_custom_call.1} parent=11 // pred_check_branch
          %437 = sbr.rel (%p435) target = $region32
        $region31: #{tpu_custom_call.1} parent=11 // pred_region
          _
        $region32: #{tpu_custom_call.1} parent=11 // pred_fallthru
          _
        // Predicated region
        $region33: #{tpu_custom_call.1} parent=11 // pred_check
          %p438 = pneg %p200
        $region34: #{tpu_custom_call.1} parent=11 // pred_check_branch
          %440 = sbr.rel (%p438) target = $region36
        $region35: #{tpu_custom_call.1} parent=11 // pred_region
          _
        $region36: #{tpu_custom_call.1} parent=11 // pred_fallthru
          _
        // Predicated region
        $region37: #{tpu_custom_call.1} parent=11 // pred_check
          %p441 = pneg %p221
        $region38: #{tpu_custom_call.1} parent=11 // pred_check_branch
          %443 = sbr.rel (%p441) target = $region40
        $region39: #{tpu_custom_call.1} parent=11 // pred_region
          _
        $region40: #{tpu_custom_call.1} parent=11 // pred_fallthru
          _
        // Predicated region
        $region41: #{tpu_custom_call.1} parent=11 // pred_check
          %p444 = pneg %p242
        $region42: #{tpu_custom_call.1} parent=11 // pred_check_branch
          %446 = sbr.rel (%p444) target = $region44
        $region43: #{tpu_custom_call.1} parent=11 // pred_region
          %s448 = ssub.s32 2048, 2048
          %449 = vsyncadd [#allocation12], %s448
          %s450 = sshll.u32 [#allocation13], 4
          %s451 = int_to_ptr.vmem [resolvable:$true] %s450
          %456 = dma.hbm_to_vmem [thread:$0]  %s8, 2048, %s451, [#allocation12], 128, 128, 8
        $region44: #{tpu_custom_call.1} parent=11 // pred_fallthru
          _
        // Predicated region
        $region45: #{tpu_custom_call.1} parent=11 // pred_check
          %p457 = pneg %p263
        $region46: #{tpu_custom_call.1} parent=11 // pred_check_branch
          %459 = sbr.rel (%p457) target = $region48
        $region47: #{tpu_custom_call.1} parent=11 // pred_region
          _
        $region48: #{tpu_custom_call.1} parent=11 // pred_fallthru
          _
        // Predicated region
        $region49: #{tpu_custom_call.1} parent=11 // pred_check
          %p460 = pneg %p284
        $region50: #{tpu_custom_call.1} parent=11 // pred_check_branch
          %462 = sbr.rel (%p460) target = $region52
        $region51: #{tpu_custom_call.1} parent=11 // pred_region
          %s464 = ssub.s32 2048, 2048
          %465 = vsyncadd [#allocation15], %s464
          %s466 = sshll.u32 [#allocation14], 4
          %s467 = int_to_ptr.vmem [resolvable:$true] %s466
          %472 = dma.hbm_to_vmem [thread:$0]  %s10, 2048, %s467, [#allocation15], 64, 64, 4
        $region52: #{tpu_custom_call.1} parent=11 // pred_fallthru
          _
        // Predicated region
        $region53: #{tpu_custom_call.1} parent=11 // pred_check
          %p473 = pneg %p305
        $region54: #{tpu_custom_call.1} parent=11 // pred_check_branch
          %475 = sbr.rel (%p473) target = $region56
        $region55: #{tpu_custom_call.1} parent=11 // pred_region
          _
        $region56: #{tpu_custom_call.1} parent=11 // pred_fallthru
          _
        // Predicated region
        $region57: #{tpu_custom_call.1} parent=11 // pred_check
          %p476 = pneg %p326
        $region58: #{tpu_custom_call.1} parent=11 // pred_check_branch
          %478 = sbr.rel (%p476) target = $region60
        $region59: #{tpu_custom_call.1} parent=11 // pred_region
          _
        $region60: #{tpu_custom_call.1} parent=11 // pred_fallthru
          _
        // Predicated region
        $region61: #{tpu_custom_call.1} parent=11 // pred_check
          %p479 = pneg %p347
        $region62: #{tpu_custom_call.1} parent=11 // pred_check_branch
          %481 = sbr.rel (%p479) target = $region64
        $region63: #{tpu_custom_call.1} parent=11 // pred_region
          _
        $region64: #{tpu_custom_call.1} parent=11 // pred_fallthru
          _
      $region12: #{tpu_custom_call.1} parent=5 // pred_fallthru
        _
      %p482 = scmp.lt.s32.totalorder %s29, 2
      // Predicated region
      $region65: #{tpu_custom_call.1} parent=5 // pred_check
        %p483 = pneg %p482
      $region66: #{tpu_custom_call.1} parent=5 // pred_check_branch
        %485 = sbr.rel (%p483) target = $region68
      $region67: #{tpu_custom_call.1} parent=5 // pred_region
        // Predicated region
        $region69: #{tpu_custom_call.1} parent=67 // pred_check
          %p486 = pneg %p63
        $region70: #{tpu_custom_call.1} parent=67 // pred_check_branch
          %488 = sbr.rel (%p486) target = $region72
        $region71: #{tpu_custom_call.1} parent=67 // pred_region
          %s489 = sand.u32 %s53, 1
          %s490 = scalar_lea.sflag [#allocation6], %s489
          %s491 = sand.u32 %s53, 1
          %s492 = smul.addr %s491, 16
          %s493 = scalar_lea.vmem [#allocation5], %s492
          %s494 = smul.u32 2, %s37
          %s496 = ssub.s32 256, 256
          %497 = vsyncadd %s490, %s496
          %s498 = smul.addr %s36, 2
          %s499 = sadd.s32 %s494, %s498
          %s500 = smul.addr %s499, 128
          %s501 = scalar_lea.hbm %s0, %s500
          %s502 = sshll.u32 %s493, 4
          %s503 = int_to_ptr.vmem [resolvable:$true] %s502
          %508 = dma.hbm_to_vmem [thread:$0]  %s501, 256, %s503, %s490, 128, 128, 8
        $region72: #{tpu_custom_call.1} parent=67 // pred_fallthru
          _
      $region68: #{tpu_custom_call.1} parent=5 // pred_fallthru
        _
      %p509 = scmp.le.s32.totalorder 1, %s29
      %p510 = scmp.lt.s32.totalorder %s29, 3
      %p511 = pnand %p509, %p510
      %p512 = pneg %p511
      // Predicated region
      $region73: #{tpu_custom_call.1} parent=5 // pred_check
        _
      $region74: #{tpu_custom_call.1} parent=5 // pred_check_branch
        %514 = sbr.rel (%p511) target = $region76
      $region75: #{tpu_custom_call.1} parent=5 // pred_region
        %s515 = ssub.s32 %s29, 1
        %s516 = sand.u32 %s56, 1
        %s517 = scalar_lea.sflag [#allocation6], %s516
        %s518 = sand.u32 %s56, 1
        %s519 = smul.addr %s518, 16
        %s520 = scalar_lea.vmem [#allocation5], %s519
        // Predicated region
        $region77: #{tpu_custom_call.1} parent=75 // pred_check
          %p521 = pneg %p69
        $region78: #{tpu_custom_call.1} parent=75 // pred_check_branch
          %523 = sbr.rel (%p521) target = $region80
        $region79: #{tpu_custom_call.1} parent=75 // pred_region
          %524 = dma.done %s517, 256
        $region80: #{tpu_custom_call.1} parent=75 // pred_fallthru
          _
        // Predicated region
        $region81: #{tpu_custom_call.1} parent=75 // pred_check
          %p525 = pneg %p95
        $region82: #{tpu_custom_call.1} parent=75 // pred_check_branch
          %527 = sbr.rel (%p525) target = $region84
        $region83: #{tpu_custom_call.1} parent=75 // pred_region
          %528 = dma.done [#allocation9], 128
        $region84: #{tpu_custom_call.1} parent=75 // pred_fallthru
          _
        // Predicated region
        $region85: #{tpu_custom_call.1} parent=75 // pred_check
          %p529 = pneg %p116
        $region86: #{tpu_custom_call.1} parent=75 // pred_check_branch
          %531 = sbr.rel (%p529) target = $region88
        $region87: #{tpu_custom_call.1} parent=75 // pred_region
          %532 = dma.done [#allocation9], 3072
        $region88: #{tpu_custom_call.1} parent=75 // pred_fallthru
          _
        // Predicated region
        $region89: #{tpu_custom_call.1} parent=75 // pred_check
          %p533 = pneg %p158
        $region90: #{tpu_custom_call.1} parent=75 // pred_check_branch
          %535 = sbr.rel (%p533) target = $region92
        $region91: #{tpu_custom_call.1} parent=75 // pred_region
          %536 = dma.done [#allocation12], 1024
        $region92: #{tpu_custom_call.1} parent=75 // pred_fallthru
          _
        // Predicated region
        $region93: #{tpu_custom_call.1} parent=75 // pred_check
          %p537 = pneg %p242
        $region94: #{tpu_custom_call.1} parent=75 // pred_check_branch
          %539 = sbr.rel (%p537) target = $region96
        $region95: #{tpu_custom_call.1} parent=75 // pred_region
          %540 = dma.done [#allocation12], 2048
        $region96: #{tpu_custom_call.1} parent=75 // pred_fallthru
          _
        // Predicated region
        $region97: #{tpu_custom_call.1} parent=75 // pred_check
          %p541 = pneg %p284
        $region98: #{tpu_custom_call.1} parent=75 // pred_check_branch
          %543 = sbr.rel (%p541) target = $region100
        $region99: #{tpu_custom_call.1} parent=75 // pred_region
          %544 = dma.done [#allocation15], 2048
        $region100: #{tpu_custom_call.1} parent=75 // pred_fallthru
          _
        %s545 = sand.u32 %s56, 1
        %s546 = scalar_lea.sflag [#allocation6], %s545
        %s547 = sand.u32 %s56, 1
        %s548 = smul.addr %s547, 16
        %s549 = scalar_lea.vmem [#allocation5], %s548
        %p550 = pneg %p69
        %p551 = pneg %p66
        %p552 = pneg %p95
        %p553 = pneg %p92
        %p554 = pneg %p116
        %p555 = pneg %p113
        %p556 = pneg %p137
        %p557 = pneg %p134
        %p558 = pneg %p158
        %p559 = pneg %p155
        %p560 = pneg %p179
        %p561 = pneg %p176
        %p562 = pneg %p200
        %p563 = pneg %p197
        %p564 = pneg %p221
        %p565 = pneg %p218
        %p566 = pneg %p242
        %p567 = pneg %p239
        %p568 = pneg %p263
        %p569 = pneg %p260
        %p570 = pneg %p284
        %p571 = pneg %p281
        %p572 = pneg %p305
        %p573 = pneg %p302
        %p574 = pneg %p326
        %p575 = pneg %p323
        %p576 = pneg %p347
        %p577 = pneg %p344
        %p578 = pneg %p375
        %p579 = pneg %p372
        %s580 = sand.u32 %s362, 1
        %s581 = scalar_lea.sflag [#allocation7], %s580
        %s582 = sand.u32 %s362, 1
        %s583 = smul.addr %s582, 16
        %s584 = scalar_lea.vmem [#allocation16], %s583
        %s585 = smul.u32 2, %s39
        %s586 = smul.u32 2, %s39
        %p588 = scmp.eq.s32.totalorder %s39, 0
        // Predicated region
        $region101: #{tpu_custom_call.1} parent=75 // pred_check
          %p589 = pneg %p588
        $region102: #{tpu_custom_call.1} parent=75 // pred_check_branch
          %591 = sbr.rel (%p589) target = $region104
        $region103: #{tpu_custom_call.1} parent=75 // pred_region
          %v592 = vld [vmem:[#allocation8] sm:$0xf]
          %v593 = vld [vmem:[#allocation8 + $0x4] sm:$0xf]
          %v594 = vld [vmem:[#allocation10] sm:$0xff]
          %v595 = vld [vmem:[#allocation10 + $0x8] sm:$0xf]
          %v596 = vld [vmem:[#allocation10 + $0xc] sm:$0xff]
          %v597 = vld [vmem:[#allocation10 + $0x14] sm:$0xf]
          %v598 = vld [vmem:[#allocation10 + $0x18] sm:$0xff]
          %v599 = vld [vmem:[#allocation10 + $0x20] sm:$0xf]
          %v600 = vld [vmem:[#allocation10 + $0x24] sm:$0xff]
          %v601 = vld [vmem:[#allocation10 + $0x2c] sm:$0xf]
          %v602 = vld [vmem:[#allocation10 + $0x30] sm:$0xff]
          %v603 = vld [vmem:[#allocation10 + $0x38] sm:$0xf]
          %v604 = vld [vmem:[#allocation10 + $0x3c] sm:$0xff]
          %v605 = vld [vmem:[#allocation10 + $0x44] sm:$0xf]
          %v606 = vld [vmem:[#allocation10 + $0x48] sm:$0xff]
          %v607 = vld [vmem:[#allocation10 + $0x50] sm:$0xf]
          %v608 = vld [vmem:[#allocation10 + $0x54] sm:$0xff]
          %v609 = vld [vmem:[#allocation10 + $0x5c] sm:$0xf]
          %v610 = vld [vmem:[#allocation10 + $0x60] sm:$0xff]
          %v611 = vld [vmem:[#allocation10 + $0x68] sm:$0xf]
          %v612 = vld [vmem:[#allocation10 + $0x6c] sm:$0xff]
          %v613 = vld [vmem:[#allocation10 + $0x74] sm:$0xf]
          %v614 = vld [vmem:[#allocation10 + $0x78] sm:$0xff]
          %v615 = vld [vmem:[#allocation10 + $0x80] sm:$0xf]
          %v616 = vld [vmem:[#allocation10 + $0x84] sm:$0xff]
          %v617 = vld [vmem:[#allocation10 + $0x8c] sm:$0xf]
          %v618 = vld [vmem:[#allocation10 + $0x90] sm:$0xff]
          %v619 = vld [vmem:[#allocation10 + $0x98] sm:$0xf]
          %v620 = vld [vmem:[#allocation10 + $0x9c] sm:$0xff]
          %v621 = vld [vmem:[#allocation10 + $0xa4] sm:$0xf]
          %v622 = vld [vmem:[#allocation10 + $0xa8] sm:$0xff]
          %v623 = vld [vmem:[#allocation10 + $0xb0] sm:$0xf]
          %v624 = vld [vmem:[#allocation10 + $0xb4] sm:$0xff]
          %v625 = vld [vmem:[#allocation10 + $0xbc] sm:$0xf]
          %v626 = vld [vmem:[%s3] sm:$0x7]
          %v628 = vlaneseq
          %v629 = vshrl.u32 %v628, 7
          %v630 = vsub.s32 0, %v629
          %v631 = vrot.slane %v626, %v630
          %v632 = vlaneseq
          %v633 = vshrl.u32 %v632, 7
          %v634 = vsub.s32 1, %v633
          %v635 = vrot.slane %v626, %v634
          %v636 = vlaneseq
          %v637 = vshrl.u32 %v636, 7
          %v638 = vsub.s32 2, %v637
          %v639 = vrot.slane %v626, %v638
          %v645 = vunpack.c.l.b16 %v592
          %v646 = vunpack.c.l.b16 %v593
          %v647 = vpack.c.b16 %v646, %v645
          %v681 = vunpack.c.l.b16 %v594
          %v682 = vunpack.c.h.b16 %v594
          %v683 = vunpack.c.l.b16 %v595
          %v684 = vunpack.c.l.b16 %v596
          %v685 = vunpack.c.h.b16 %v596
          %v686 = vunpack.c.l.b16 %v597
          %v687 = vunpack.c.l.b16 %v598
          %v688 = vunpack.c.h.b16 %v598
          %v689 = vunpack.c.l.b16 %v599
          %v690 = vunpack.c.l.b16 %v600
          %v691 = vunpack.c.h.b16 %v600
          %v692 = vunpack.c.l.b16 %v601
          %v693 = vunpack.c.l.b16 %v602
          %v694 = vunpack.c.h.b16 %v602
          %v695 = vunpack.c.l.b16 %v603
          %v696 = vunpack.c.l.b16 %v604
          %v697 = vunpack.c.h.b16 %v604
          %v698 = vunpack.c.l.b16 %v605
          %v699 = vunpack.c.l.b16 %v606
          %v700 = vunpack.c.h.b16 %v606
          %v701 = vunpack.c.l.b16 %v607
          %v702 = vunpack.c.l.b16 %v608
          %v703 = vunpack.c.h.b16 %v608
          %v704 = vunpack.c.l.b16 %v609
          %v705 = vunpack.c.l.b16 %v610
          %v706 = vunpack.c.h.b16 %v610
          %v707 = vunpack.c.l.b16 %v611
          %v708 = vunpack.c.l.b16 %v612
          %v709 = vunpack.c.h.b16 %v612
          %v710 = vunpack.c.l.b16 %v613
          %v711 = vunpack.c.l.b16 %v614
          %v712 = vunpack.c.h.b16 %v614
          %v713 = vunpack.c.l.b16 %v615
          %v714 = vunpack.c.l.b16 %v616
          %v715 = vunpack.c.h.b16 %v616
          %v716 = vunpack.c.l.b16 %v617
          %v717 = vunpack.c.l.b16 %v618
          %v718 = vunpack.c.h.b16 %v618
          %v719 = vunpack.c.l.b16 %v619
          %v720 = vunpack.c.l.b16 %v620
          %v721 = vunpack.c.h.b16 %v620
          %v722 = vunpack.c.l.b16 %v621
          %v723 = vunpack.c.l.b16 %v622
          %v724 = vunpack.c.h.b16 %v622
          %v725 = vunpack.c.l.b16 %v623
          %v726 = vunpack.c.l.b16 %v624
          %v727 = vunpack.c.h.b16 %v624
          %v728 = vunpack.c.l.b16 %v625
          %v729 = vpack.c.b16 %v684, %v681
          %v730 = vpack.c.b16 %v685, %v682
          %v731 = vpack.c.b16 %v686, %v683
          %v732 = vpack.c.b16 %v690, %v687
          %v733 = vpack.c.b16 %v691, %v688
          %v734 = vpack.c.b16 %v692, %v689
          %v735 = vpack.c.b16 %v696, %v693
          %v736 = vpack.c.b16 %v697, %v694
          %v737 = vpack.c.b16 %v698, %v695
          %v738 = vpack.c.b16 %v702, %v699
          %v739 = vpack.c.b16 %v703, %v700
          %v740 = vpack.c.b16 %v704, %v701
          %v741 = vpack.c.b16 %v708, %v705
          %v742 = vpack.c.b16 %v709, %v706
          %v743 = vpack.c.b16 %v710, %v707
          %v744 = vpack.c.b16 %v714, %v711
          %v745 = vpack.c.b16 %v715, %v712
          %v746 = vpack.c.b16 %v716, %v713
          %v747 = vpack.c.b16 %v720, %v717
          %v748 = vpack.c.b16 %v721, %v718
          %v749 = vpack.c.b16 %v722, %v719
          %v750 = vpack.c.b16 %v726, %v723
          %v751 = vpack.c.b16 %v727, %v724
          %v752 = vpack.c.b16 %v728, %v725
          %777 = vmatprep.subr.bf16.mxu0 %v730
          %778 = vmatpush1.bf16.msra.mxu0 %v729
          %779 = vmatprep.subr.bf16.mxu0 %v733
          %780 = vmatpush1.bf16.msra.mxu0 %v732
          %781 = vmatprep.subr.bf16.mxu0 %v736
          %782 = vmatpush1.bf16.msra.mxu0 %v735
          %783 = vmatprep.subr.bf16.mxu0 %v739
          %784 = vmatpush1.bf16.msra.mxu0 %v738
          %785 = vmatprep.subr.bf16.mxu0 %v742
          %786 = vmatpush1.bf16.msra.mxu0 %v741
          %787 = vmatprep.subr.bf16.mxu0 %v745
          %788 = vmatpush1.bf16.msra.mxu0 %v744
          %789 = vmatprep.subr.bf16.mxu0 %v748
          %790 = vmatpush1.bf16.msra.mxu0 %v747
          %791 = vmatprep.subr.bf16.mxu0 %v751
          %792 = vmatpush1.bf16.msra.mxu0 %v750
          %793 = vmatprep.subr.bf16.mxu0 0
          %794 = vmatpush1.bf16.msra.mxu0 0
          %795 = vmatprep.subr.bf16.mxu0 0
          %796 = vmatpush1.bf16.msra.mxu0 0
          %797 = vmatprep.subr.bf16.mxu0 0
          %798 = vmatpush1.bf16.msra.mxu0 0
          %799 = vmatprep.subr.bf16.mxu0 0
          %800 = vmatpush1.bf16.msra.mxu0 0
          %801 = vmatprep.subr.bf16.mxu0 0
          %802 = vmatpush1.bf16.msra.mxu0 0
          %803 = vmatprep.subr.bf16.mxu0 0
          %804 = vmatpush1.bf16.msra.mxu0 0
          %805 = vmatprep.subr.bf16.mxu0 0
          %806 = vmatpush1.bf16.msra.mxu0 0
          %807 = vmatprep.subr.bf16.mxu0 0
          %808 = vmatpush1.bf16.msra.mxu0 0
          %809 = vmatprep.mubr.bf16.mxu0 0
          %810 = vmatmul.mubr.bf16.gmra.mrb[0].mxu0 %v647
          %v811 = vpop.f32.mrb[0].mxu0
          %v812 = vadd.f32 %v631, %v811
          %v813 = vpop.f32.mrb[0].mxu0
          %v814 = vadd.f32 %v635, %v813
          %v815 = vpop.f32.mrb[0].mxu0
          %v816 = vadd.f32 %v631, %v815
          %v817 = vpop.f32.mrb[0].mxu0
          %v818 = vadd.f32 %v635, %v817
          %819 = vdwg.mxu0
          %820 = vmatprep.subr.bf16.mxu0 0
          %821 = vmatpush1.bf16.msra.mxu0 %v731
          %822 = vmatprep.subr.bf16.mxu0 0
          %823 = vmatpush1.bf16.msra.mxu0 %v734
          %824 = vmatprep.subr.bf16.mxu0 0
          %825 = vmatpush1.bf16.msra.mxu0 %v737
          %826 = vmatprep.subr.bf16.mxu0 0
          %827 = vmatpush1.bf16.msra.mxu0 %v740
          %828 = vmatprep.subr.bf16.mxu0 0
          %829 = vmatpush1.bf16.msra.mxu0 %v743
          %830 = vmatprep.subr.bf16.mxu0 0
          %831 = vmatpush1.bf16.msra.mxu0 %v746
          %832 = vmatprep.subr.bf16.mxu0 0
          %833 = vmatpush1.bf16.msra.mxu0 %v749
          %834 = vmatprep.subr.bf16.mxu0 0
          %835 = vmatpush1.bf16.msra.mxu0 %v752
          %836 = vmatprep.subr.bf16.mxu0 0
          %837 = vmatpush1.bf16.msra.mxu0 0
          %838 = vmatprep.subr.bf16.mxu0 0
          %839 = vmatpush1.bf16.msra.mxu0 0
          %840 = vmatprep.subr.bf16.mxu0 0
          %841 = vmatpush1.bf16.msra.mxu0 0
          %842 = vmatprep.subr.bf16.mxu0 0
          %843 = vmatpush1.bf16.msra.mxu0 0
          %844 = vmatprep.subr.bf16.mxu0 0
          %845 = vmatpush1.bf16.msra.mxu0 0
          %846 = vmatprep.subr.bf16.mxu0 0
          %847 = vmatpush1.bf16.msra.mxu0 0
          %848 = vmatprep.subr.bf16.mxu0 0
          %849 = vmatpush1.bf16.msra.mxu0 0
          %850 = vmatprep.subr.bf16.mxu0 0
          %851 = vmatpush1.bf16.msra.mxu0 0
          %852 = vmatprep.mubr.bf16.mxu0 0
          %853 = vmatmul.mubr.bf16.gmra.mrb[0].mxu0 %v647
          %v854 = vpop.f32.mrb[0].mxu0
          %v855 = vadd.f32 %v639, %v854
          %v856 = vpop.f32.mrb[0].mxu0
          %v857 = vpop.f32.mrb[0].mxu0
          %v858 = vadd.f32 %v639, %v857
          %v859 = vpop.f32.mrb[0].mxu0
          %860 = vdwg.mxu0
          %v861 = vmul.f32 %v812, 0.17677669
          %v862 = vmul.f32 %v816, 0.17677669
          %v863 = vpack.c.bf16 %v862, %v861
          %864 = vst [vmem:[#allocation2] sm:$0xff] %v863
          %v865 = vpack.c.bf16 %v818, %v814
          %v866 = vpack.c.bf16 %v858, %v855
          %867 = vst [vmem:[#allocation3] sm:$0xff] %v865
          %868 = vst [vmem:[#allocation3 + $0x8] sm:$0xff] %v866
        $region104: #{tpu_custom_call.1} parent=75 // pred_fallthru
          _
        %v869 = vld [vmem:[%s520] sm:$0xff]
        %v870 = vld [vmem:[%s520 + $0x8] sm:$0xff]
        %s871 = smul.u32 %s39, 16
        %s872 = sshra.s32 %s871, 4
        %s873 = sand.u32 %s871, 15
        %s874 = smul.addr %s872, 8
        %s875 = scalar_lea.vmem [#allocation2], %s874
        %v876 = vld [vmem:[%s875] sm:$0xff]
        %v877 = vld [vmem:[#allocation3] sm:$0xff]
        %v878 = vld [vmem:[#allocation3 + $0x8] sm:$0xff]
        %vm879 = vcmask 261120
        %v881 = vsel %vm879, %v876, 0
        %v884 = vsel %vm879, %v877, 0
        %886 = vmatprep.subr.bf16.mxu0 0
        %887 = vmatpush1.bf16.xpose.msra.mxu0 %v884
        %888 = vmatprep.subr.bf16.mxu0 0
        %889 = vmatpush1.bf16.xpose.msra.mxu0 0
        %890 = vmatprep.subr.bf16.mxu0 0
        %891 = vmatpush1.bf16.xpose.msra.mxu0 0
        %892 = vmatprep.subr.bf16.mxu0 0
        %893 = vmatpush1.bf16.xpose.msra.mxu0 0
        %894 = vmatprep.subr.bf16.mxu0 0
        %895 = vmatpush1.bf16.xpose.msra.mxu0 0
        %896 = vmatprep.subr.bf16.mxu0 0
        %897 = vmatpush1.bf16.xpose.msra.mxu0 0
        %898 = vmatprep.subr.bf16.mxu0 0
        %899 = vmatpush1.bf16.xpose.msra.mxu0 0
        %900 = vmatprep.subr.bf16.mxu0 0
        %901 = vmatpush1.bf16.xpose.msra.mxu0 0
        %902 = vmatprep.subr.bf16.mxu0 0
        %903 = vmatpush1.bf16.xpose.msra.mxu0 0
        %904 = vmatprep.subr.bf16.mxu0 0
        %905 = vmatpush1.bf16.xpose.msra.mxu0 0
        %906 = vmatprep.subr.bf16.mxu0 0
        %907 = vmatpush1.bf16.xpose.msra.mxu0 0
        %908 = vmatprep.subr.bf16.mxu0 0
        %909 = vmatpush1.bf16.xpose.msra.mxu0 0
        %910 = vmatprep.subr.bf16.mxu0 0
        %911 = vmatpush1.bf16.xpose.msra.mxu0 0
        %912 = vmatprep.subr.bf16.mxu0 0
        %913 = vmatpush1.bf16.xpose.msra.mxu0 0
        %914 = vmatprep.subr.bf16.mxu0 0
        %915 = vmatpush1.bf16.xpose.msra.mxu0 0
        %916 = vmatprep.subr.bf16.mxu0 0
        %917 = vmatpush1.bf16.xpose.msra.mxu0 0
        %918 = vmatprep.mubr.bf16.mxu0 0
        %919 = vmatmul.mubr.bf16.gmra.mrb[0].mxu0 %v881
        %v920 = vpop.f32.mrb[0].mxu0
        %v921 = vadd.f32 0.0, %v920
        %v922 = vpop.f32.mrb[0].mxu0
        %v923 = vpop.f32.mrb[0].mxu0
        %v924 = vadd.f32 0.0, %v923
        %v925 = vpop.f32.mrb[0].mxu0
        %926 = vdwg.mxu0
        %vm927 = vcmask 130048
        %v928 = vsel %vm927, %v921, -inf
        %929 = vmax.xlane.f32.xlu0 %v928
        %v930 = vpop.xlane.xlu0 %929
        %v931 = vsel %vm927, %v924, -inf
        %932 = vmax.xlane.f32.xlu0 %v931
        %v933 = vpop.xlane.xlu0 %932
        %v934 = vsub.f32 %v921, %v930
        %v935 = vsub.f32 %v924, %v933
        %v936 = vmul.f32 %v934, 1.442695
        %v937 = vpow.pop %v936
        %v938 = vmul.f32 %v935, 1.442695
        %v939 = vpow.pop %v938
        %v940 = vsel %vm927, %v937, 0.0
        %941 = vadd.xlane.f32.xlu0 %v940
        %v942 = vpop.xlane.xlu0 %941
        %v943 = vsel %vm927, %v939, 0.0
        %944 = vadd.xlane.f32.xlu0 %v943
        %v945 = vpop.xlane.xlu0 %944
        %v946 = vpack.c.bf16 %v939, %v937
        %v948 = vsel %vm927, %v946, 0
        %950 = vmatprep.subr.bf16.mxu0 0
        %951 = vmatpush1.bf16.msra.mxu0 %v878
        %952 = vmatprep.subr.bf16.mxu0 0
        %953 = vmatpush1.bf16.msra.mxu0 0
        %954 = vmatprep.subr.bf16.mxu0 0
        %955 = vmatpush1.bf16.msra.mxu0 0
        %956 = vmatprep.subr.bf16.mxu0 0
        %957 = vmatpush1.bf16.msra.mxu0 0
        %958 = vmatprep.subr.bf16.mxu0 0
        %959 = vmatpush1.bf16.msra.mxu0 0
        %960 = vmatprep.subr.bf16.mxu0 0
        %961 = vmatpush1.bf16.msra.mxu0 0
        %962 = vmatprep.subr.bf16.mxu0 0
        %963 = vmatpush1.bf16.msra.mxu0 0
        %964 = vmatprep.subr.bf16.mxu0 0
        %965 = vmatpush1.bf16.msra.mxu0 0
        %966 = vmatprep.subr.bf16.mxu0 0
        %967 = vmatpush1.bf16.msra.mxu0 0
        %968 = vmatprep.subr.bf16.mxu0 0
        %969 = vmatpush1.bf16.msra.mxu0 0
        %970 = vmatprep.subr.bf16.mxu0 0
        %971 = vmatpush1.bf16.msra.mxu0 0
        %972 = vmatprep.subr.bf16.mxu0 0
        %973 = vmatpush1.bf16.msra.mxu0 0
        %974 = vmatprep.subr.bf16.mxu0 0
        %975 = vmatpush1.bf16.msra.mxu0 0
        %976 = vmatprep.subr.bf16.mxu0 0
        %977 = vmatpush1.bf16.msra.mxu0 0
        %978 = vmatprep.subr.bf16.mxu0 0
        %979 = vmatpush1.bf16.msra.mxu0 0
        %980 = vmatprep.subr.bf16.mxu0 0
        %981 = vmatpush1.bf16.msra.mxu0 0
        %982 = vmatprep.mubr.bf16.mxu0 0
        %983 = vmatmul.mubr.bf16.gmra.mrb[0].mxu0 %v948
        %v984 = vpop.f32.mrb[0].mxu0
        %v985 = vadd.f32 0.0, %v984
        %v986 = vpop.f32.mrb[0].mxu0
        %v987 = vpop.f32.mrb[0].mxu0
        %v988 = vadd.f32 0.0, %v987
        %v989 = vpop.f32.mrb[0].mxu0
        %990 = vdwg.mxu0
        %v991 = vrcp.pop %v942
        %v992 = vrcp.pop %v945
        %v993 = vmul.f32 %v985, %v991
        %v994 = vmul.f32 %v988, %v992
        %v995 = vpack.c.bf16 %v994, %v993
        %996 = vst.msk [vmem:[#allocation4] sm:$0xff] %vm879, %v995
        %v997 = vld [vmem:[#allocation3] sm:$0xff]
        %v998 = vld [vmem:[#allocation3 + $0x8] sm:$0xff]
        %1000 = vrot.lane.b32.xlu0 %v876, 96
        %v1001 = vpop.permute.xlu0 %1000
        %1003 = vrot.lane.b32.xlu0 %v997, 96
        %v1004 = vpop.permute.xlu0 %1003
        %v1006 = vsel %vm879, %v1001, 0
        %v1009 = vsel %vm879, %v1004, 0
        %1011 = vmatprep.subr.bf16.mxu0 0
        %1012 = vmatpush1.bf16.xpose.msra.mxu0 %v1009
        %1013 = vmatprep.subr.bf16.mxu0 0
        %1014 = vmatpush1.bf16.xpose.msra.mxu0 0
        %1015 = vmatprep.subr.bf16.mxu0 0
        %1016 = vmatpush1.bf16.xpose.msra.mxu0 0
        %1017 = vmatprep.subr.bf16.mxu0 0
        %1018 = vmatpush1.bf16.xpose.msra.mxu0 0
        %1019 = vmatprep.subr.bf16.mxu0 0
        %1020 = vmatpush1.bf16.xpose.msra.mxu0 0
        %1021 = vmatprep.subr.bf16.mxu0 0
        %1022 = vmatpush1.bf16.xpose.msra.mxu0 0
        %1023 = vmatprep.subr.bf16.mxu0 0
        %1024 = vmatpush1.bf16.xpose.msra.mxu0 0
        %1025 = vmatprep.subr.bf16.mxu0 0
        %1026 = vmatpush1.bf16.xpose.msra.mxu0 0
        %1027 = vmatprep.subr.bf16.mxu0 0
        %1028 = vmatpush1.bf16.xpose.msra.mxu0 0
        %1029 = vmatprep.subr.bf16.mxu0 0
        %1030 = vmatpush1.bf16.xpose.msra.mxu0 0
        %1031 = vmatprep.subr.bf16.mxu0 0
        %1032 = vmatpush1.bf16.xpose.msra.mxu0 0
        %1033 = vmatprep.subr.bf16.mxu0 0
        %1034 = vmatpush1.bf16.xpose.msra.mxu0 0
        %1035 = vmatprep.subr.bf16.mxu0 0
        %1036 = vmatpush1.bf16.xpose.msra.mxu0 0
        %1037 = vmatprep.subr.bf16.mxu0 0
        %1038 = vmatpush1.bf16.xpose.msra.mxu0 0
        %1039 = vmatprep.subr.bf16.mxu0 0
        %1040 = vmatpush1.bf16.xpose.msra.mxu0 0
        %1041 = vmatprep.subr.bf16.mxu0 0
        %1042 = vmatpush1.bf16.xpose.msra.mxu0 0
        %1043 = vmatprep.mubr.bf16.mxu0 0
        %1044 = vmatmul.mubr.bf16.gmra.mrb[0].mxu0 %v1006
        %v1045 = vpop.f32.mrb[0].mxu0
        %v1046 = vadd.f32 0.0, %v1045
        %v1047 = vpop.f32.mrb[0].mxu0
        %v1048 = vpop.f32.mrb[0].mxu0
        %v1049 = vadd.f32 0.0, %v1048
        %v1050 = vpop.f32.mrb[0].mxu0
        %1051 = vdwg.mxu0
        %v1052 = vsel %vm927, %v1046, -inf
        %1053 = vmax.xlane.f32.xlu0 %v1052
        %v1054 = vpop.xlane.xlu0 %1053
        %v1055 = vsel %vm927, %v1049, -inf
        %1056 = vmax.xlane.f32.xlu0 %v1055
        %v1057 = vpop.xlane.xlu0 %1056
        %v1058 = vsub.f32 %v1046, %v1054
        %v1059 = vsub.f32 %v1049, %v1057
        %v1060 = vmul.f32 %v1058, 1.442695
        %v1061 = vpow.pop %v1060
        %v1062 = vmul.f32 %v1059, 1.442695
        %v1063 = vpow.pop %v1062
        %v1064 = vsel %vm927, %v1061, 0.0
        %1065 = vadd.xlane.f32.xlu0 %v1064
        %v1066 = vpop.xlane.xlu0 %1065
        %v1067 = vsel %vm927, %v1063, 0.0
        %1068 = vadd.xlane.f32.xlu0 %v1067
        %v1069 = vpop.xlane.xlu0 %1068
        %v1070 = vpack.c.bf16 %v1063, %v1061
        %1072 = vrot.lane.b32.xlu0 %v998, 96
        %v1073 = vpop.permute.xlu0 %1072
        %v1076 = vsel %vm927, %v1070, 0
        %1078 = vmatprep.subr.bf16.mxu0 0
        %1079 = vmatpush1.bf16.msra.mxu0 %v1073
        %1080 = vmatprep.subr.bf16.mxu0 0
        %1081 = vmatpush1.bf16.msra.mxu0 0
        %1082 = vmatprep.subr.bf16.mxu0 0
        %1083 = vmatpush1.bf16.msra.mxu0 0
        %1084 = vmatprep.subr.bf16.mxu0 0
        %1085 = vmatpush1.bf16.msra.mxu0 0
        %1086 = vmatprep.subr.bf16.mxu0 0
        %1087 = vmatpush1.bf16.msra.mxu0 0
        %1088 = vmatprep.subr.bf16.mxu0 0
        %1089 = vmatpush1.bf16.msra.mxu0 0
        %1090 = vmatprep.subr.bf16.mxu0 0
        %1091 = vmatpush1.bf16.msra.mxu0 0
        %1092 = vmatprep.subr.bf16.mxu0 0
        %1093 = vmatpush1.bf16.msra.mxu0 0
        %1094 = vmatprep.subr.bf16.mxu0 0
        %1095 = vmatpush1.bf16.msra.mxu0 0
        %1096 = vmatprep.subr.bf16.mxu0 0
        %1097 = vmatpush1.bf16.msra.mxu0 0
        %1098 = vmatprep.subr.bf16.mxu0 0
        %1099 = vmatpush1.bf16.msra.mxu0 0
        %1100 = vmatprep.subr.bf16.mxu0 0
        %1101 = vmatpush1.bf16.msra.mxu0 0
        %1102 = vmatprep.subr.bf16.mxu0 0
        %1103 = vmatpush1.bf16.msra.mxu0 0
        %1104 = vmatprep.subr.bf16.mxu0 0
        %1105 = vmatpush1.bf16.msra.mxu0 0
        %1106 = vmatprep.subr.bf16.mxu0 0
        %1107 = vmatpush1.bf16.msra.mxu0 0
        %1108 = vmatprep.subr.bf16.mxu0 0
        %1109 = vmatpush1.bf16.msra.mxu0 0
        %1110 = vmatprep.mubr.bf16.mxu0 0
        %1111 = vmatmul.mubr.bf16.gmra.mrb[0].mxu0 %v1076
        %v1112 = vpop.f32.mrb[0].mxu0
        %v1113 = vadd.f32 0.0, %v1112
        %v1114 = vpop.f32.mrb[0].mxu0
        %v1115 = vpop.f32.mrb[0].mxu0
        %v1116 = vadd.f32 0.0, %v1115
        %v1117 = vpop.f32.mrb[0].mxu0
        %1118 = vdwg.mxu0
        %v1119 = vrcp.pop %v1066
        %v1120 = vrcp.pop %v1069
        %v1121 = vmul.f32 %v1113, %v1119
        %v1122 = vmul.f32 %v1116, %v1120
        %v1123 = vpack.c.bf16 %v1122, %v1121
        %1125 = vrot.lane.b32.xlu0 %v1123, 32
        %v1126 = vpop.permute.xlu0 %1125
        %vm1128 = vcmask 523520
        %1129 = vst.msk [vmem:[#allocation4] sm:$0xff] %vm1128, %v1126
        %v1130 = vld [vmem:[#allocation3] sm:$0xff]
        %v1131 = vld [vmem:[#allocation3 + $0x8] sm:$0xff]
        %1132 = vrot.lane.b32.xlu0 %v876, 64
        %v1133 = vpop.permute.xlu0 %1132
        %1135 = vrot.lane.b32.xlu0 %v1130, 64
        %v1136 = vpop.permute.xlu0 %1135
        %v1138 = vsel %vm879, %v1133, 0
        %v1141 = vsel %vm879, %v1136, 0
        %1143 = vmatprep.subr.bf16.mxu0 0
        %1144 = vmatpush1.bf16.xpose.msra.mxu0 %v1141
        %1145 = vmatprep.subr.bf16.mxu0 0
        %1146 = vmatpush1.bf16.xpose.msra.mxu0 0
        %1147 = vmatprep.subr.bf16.mxu0 0
        %1148 = vmatpush1.bf16.xpose.msra.mxu0 0
        %1149 = vmatprep.subr.bf16.mxu0 0
        %1150 = vmatpush1.bf16.xpose.msra.mxu0 0
        %1151 = vmatprep.subr.bf16.mxu0 0
        %1152 = vmatpush1.bf16.xpose.msra.mxu0 0
        %1153 = vmatprep.subr.bf16.mxu0 0
        %1154 = vmatpush1.bf16.xpose.msra.mxu0 0
        %1155 = vmatprep.subr.bf16.mxu0 0
        %1156 = vmatpush1.bf16.xpose.msra.mxu0 0
        %1157 = vmatprep.subr.bf16.mxu0 0
        %1158 = vmatpush1.bf16.xpose.msra.mxu0 0
        %1159 = vmatprep.subr.bf16.mxu0 0
        %1160 = vmatpush1.bf16.xpose.msra.mxu0 0
        %1161 = vmatprep.subr.bf16.mxu0 0
        %1162 = vmatpush1.bf16.xpose.msra.mxu0 0
        %1163 = vmatprep.subr.bf16.mxu0 0
        %1164 = vmatpush1.bf16.xpose.msra.mxu0 0
        %1165 = vmatprep.subr.bf16.mxu0 0
        %1166 = vmatpush1.bf16.xpose.msra.mxu0 0
        %1167 = vmatprep.subr.bf16.mxu0 0
        %1168 = vmatpush1.bf16.xpose.msra.mxu0 0
        %1169 = vmatprep.subr.bf16.mxu0 0
        %1170 = vmatpush1.bf16.xpose.msra.mxu0 0
        %1171 = vmatprep.subr.bf16.mxu0 0
        %1172 = vmatpush1.bf16.xpose.msra.mxu0 0
        %1173 = vmatprep.subr.bf16.mxu0 0
        %1174 = vmatpush1.bf16.xpose.msra.mxu0 0
        %1175 = vmatprep.mubr.bf16.mxu0 0
        %1176 = vmatmul.mubr.bf16.gmra.mrb[0].mxu0 %v1138
        %v1177 = vpop.f32.mrb[0].mxu0
        %v1178 = vadd.f32 0.0, %v1177
        %v1179 = vpop.f32.mrb[0].mxu0
        %v1180 = vpop.f32.mrb[0].mxu0
        %v1181 = vadd.f32 0.0, %v1180
        %v1182 = vpop.f32.mrb[0].mxu0
        %1183 = vdwg.mxu0
        %v1184 = vsel %vm927, %v1178, -inf
        %1185 = vmax.xlane.f32.xlu0 %v1184
        %v1186 = vpop.xlane.xlu0 %1185
        %v1187 = vsel %vm927, %v1181, -inf
        %1188 = vmax.xlane.f32.xlu0 %v1187
        %v1189 = vpop.xlane.xlu0 %1188
        %v1190 = vsub.f32 %v1178, %v1186
        %v1191 = vsub.f32 %v1181, %v1189
        %v1192 = vmul.f32 %v1190, 1.442695
        %v1193 = vpow.pop %v1192
        %v1194 = vmul.f32 %v1191, 1.442695
        %v1195 = vpow.pop %v1194
        %v1196 = vsel %vm927, %v1193, 0.0
        %1197 = vadd.xlane.f32.xlu0 %v1196
        %v1198 = vpop.xlane.xlu0 %1197
        %v1199 = vsel %vm927, %v1195, 0.0
        %1200 = vadd.xlane.f32.xlu0 %v1199
        %v1201 = vpop.xlane.xlu0 %1200
        %v1202 = vpack.c.bf16 %v1195, %v1193
        %1204 = vrot.lane.b32.xlu0 %v1131, 64
        %v1205 = vpop.permute.xlu0 %1204
        %v1208 = vsel %vm927, %v1202, 0
        %1210 = vmatprep.subr.bf16.mxu0 0
        %1211 = vmatpush1.bf16.msra.mxu0 %v1205
        %1212 = vmatprep.subr.bf16.mxu0 0
        %1213 = vmatpush1.bf16.msra.mxu0 0
        %1214 = vmatprep.subr.bf16.mxu0 0
        %1215 = vmatpush1.bf16.msra.mxu0 0
        %1216 = vmatprep.subr.bf16.mxu0 0
        %1217 = vmatpush1.bf16.msra.mxu0 0
        %1218 = vmatprep.subr.bf16.mxu0 0
        %1219 = vmatpush1.bf16.msra.mxu0 0
        %1220 = vmatprep.subr.bf16.mxu0 0
        %1221 = vmatpush1.bf16.msra.mxu0 0
        %1222 = vmatprep.subr.bf16.mxu0 0
        %1223 = vmatpush1.bf16.msra.mxu0 0
        %1224 = vmatprep.subr.bf16.mxu0 0
        %1225 = vmatpush1.bf16.msra.mxu0 0
        %1226 = vmatprep.subr.bf16.mxu0 0
        %1227 = vmatpush1.bf16.msra.mxu0 0
        %1228 = vmatprep.subr.bf16.mxu0 0
        %1229 = vmatpush1.bf16.msra.mxu0 0
        %1230 = vmatprep.subr.bf16.mxu0 0
        %1231 = vmatpush1.bf16.msra.mxu0 0
        %1232 = vmatprep.subr.bf16.mxu0 0
        %1233 = vmatpush1.bf16.msra.mxu0 0
        %1234 = vmatprep.subr.bf16.mxu0 0
        %1235 = vmatpush1.bf16.msra.mxu0 0
        %1236 = vmatprep.subr.bf16.mxu0 0
        %1237 = vmatpush1.bf16.msra.mxu0 0
        %1238 = vmatprep.subr.bf16.mxu0 0
        %1239 = vmatpush1.bf16.msra.mxu0 0
        %1240 = vmatprep.subr.bf16.mxu0 0
        %1241 = vmatpush1.bf16.msra.mxu0 0
        %1242 = vmatprep.mubr.bf16.mxu0 0
        %1243 = vmatmul.mubr.bf16.gmra.mrb[0].mxu0 %v1208
        %v1244 = vpop.f32.mrb[0].mxu0
        %v1245 = vadd.f32 0.0, %v1244
        %v1246 = vpop.f32.mrb[0].mxu0
        %v1247 = vpop.f32.mrb[0].mxu0
        %v1248 = vadd.f32 0.0, %v1247
        %v1249 = vpop.f32.mrb[0].mxu0
        %1250 = vdwg.mxu0
        %v1251 = vrcp.pop %v1198
        %v1252 = vrcp.pop %v1201
        %v1253 = vmul.f32 %v1245, %v1251
        %v1254 = vmul.f32 %v1248, %v1252
        %v1255 = vpack.c.bf16 %v1254, %v1253
        %1257 = vrot.lane.b32.xlu0 %v1255, 64
        %v1258 = vpop.permute.xlu0 %1257
        %vm1260 = vcmask 785920
        %1261 = vst.msk [vmem:[#allocation4] sm:$0xff] %vm1260, %v1258
        %v1262 = vld [vmem:[#allocation3] sm:$0xff]
        %v1263 = vld [vmem:[#allocation3 + $0x8] sm:$0xff]
        %1264 = vrot.lane.b32.xlu0 %v876, 32
        %v1265 = vpop.permute.xlu0 %1264
        %1267 = vrot.lane.b32.xlu0 %v1262, 32
        %v1268 = vpop.permute.xlu0 %1267
        %v1270 = vsel %vm879, %v1265, 0
        %v1273 = vsel %vm879, %v1268, 0
        %1275 = vmatprep.subr.bf16.mxu0 0
        %1276 = vmatpush1.bf16.xpose.msra.mxu0 %v1273
        %1277 = vmatprep.subr.bf16.mxu0 0
        %1278 = vmatpush1.bf16.xpose.msra.mxu0 0
        %1279 = vmatprep.subr.bf16.mxu0 0
        %1280 = vmatpush1.bf16.xpose.msra.mxu0 0
        %1281 = vmatprep.subr.bf16.mxu0 0
        %1282 = vmatpush1.bf16.xpose.msra.mxu0 0
        %1283 = vmatprep.subr.bf16.mxu0 0
        %1284 = vmatpush1.bf16.xpose.msra.mxu0 0
        %1285 = vmatprep.subr.bf16.mxu0 0
        %1286 = vmatpush1.bf16.xpose.msra.mxu0 0
        %1287 = vmatprep.subr.bf16.mxu0 0
        %1288 = vmatpush1.bf16.xpose.msra.mxu0 0
        %1289 = vmatprep.subr.bf16.mxu0 0
        %1290 = vmatpush1.bf16.xpose.msra.mxu0 0
        %1291 = vmatprep.subr.bf16.mxu0 0
        %1292 = vmatpush1.bf16.xpose.msra.mxu0 0
        %1293 = vmatprep.subr.bf16.mxu0 0
        %1294 = vmatpush1.bf16.xpose.msra.mxu0 0
        %1295 = vmatprep.subr.bf16.mxu0 0
        %1296 = vmatpush1.bf16.xpose.msra.mxu0 0
        %1297 = vmatprep.subr.bf16.mxu0 0
        %1298 = vmatpush1.bf16.xpose.msra.mxu0 0
        %1299 = vmatprep.subr.bf16.mxu0 0
        %1300 = vmatpush1.bf16.xpose.msra.mxu0 0
        %1301 = vmatprep.subr.bf16.mxu0 0
        %1302 = vmatpush1.bf16.xpose.msra.mxu0 0
        %1303 = vmatprep.subr.bf16.mxu0 0
        %1304 = vmatpush1.bf16.xpose.msra.mxu0 0
        %1305 = vmatprep.subr.bf16.mxu0 0
        %1306 = vmatpush1.bf16.xpose.msra.mxu0 0
        %1307 = vmatprep.mubr.bf16.mxu0 0
        %1308 = vmatmul.mubr.bf16.gmra.mrb[0].mxu0 %v1270
        %v1309 = vpop.f32.mrb[0].mxu0
        %v1310 = vadd.f32 0.0, %v1309
        %v1311 = vpop.f32.mrb[0].mxu0
        %v1312 = vpop.f32.mrb[0].mxu0
        %v1313 = vadd.f32 0.0, %v1312
        %v1314 = vpop.f32.mrb[0].mxu0
        %1315 = vdwg.mxu0
        %v1316 = vsel %vm927, %v1310, -inf
        %1317 = vmax.xlane.f32.xlu0 %v1316
        %v1318 = vpop.xlane.xlu0 %1317
        %v1319 = vsel %vm927, %v1313, -inf
        %1320 = vmax.xlane.f32.xlu0 %v1319
        %v1321 = vpop.xlane.xlu0 %1320
        %v1322 = vsub.f32 %v1310, %v1318
        %v1323 = vsub.f32 %v1313, %v1321
        %v1324 = vmul.f32 %v1322, 1.442695
        %v1325 = vpow.pop %v1324
        %v1326 = vmul.f32 %v1323, 1.442695
        %v1327 = vpow.pop %v1326
        %v1328 = vsel %vm927, %v1325, 0.0
        %1329 = vadd.xlane.f32.xlu0 %v1328
        %v1330 = vpop.xlane.xlu0 %1329
        %v1331 = vsel %vm927, %v1327, 0.0
        %1332 = vadd.xlane.f32.xlu0 %v1331
        %v1333 = vpop.xlane.xlu0 %1332
        %v1334 = vpack.c.bf16 %v1327, %v1325
        %1336 = vrot.lane.b32.xlu0 %v1263, 32
        %v1337 = vpop.permute.xlu0 %1336
        %v1340 = vsel %vm927, %v1334, 0
        %1342 = vmatprep.subr.bf16.mxu0 0
        %1343 = vmatpush1.bf16.msra.mxu0 %v1337
        %1344 = vmatprep.subr.bf16.mxu0 0
        %1345 = vmatpush1.bf16.msra.mxu0 0
        %1346 = vmatprep.subr.bf16.mxu0 0
        %1347 = vmatpush1.bf16.msra.mxu0 0
        %1348 = vmatprep.subr.bf16.mxu0 0
        %1349 = vmatpush1.bf16.msra.mxu0 0
        %1350 = vmatprep.subr.bf16.mxu0 0
        %1351 = vmatpush1.bf16.msra.mxu0 0
        %1352 = vmatprep.subr.bf16.mxu0 0
        %1353 = vmatpush1.bf16.msra.mxu0 0
        %1354 = vmatprep.subr.bf16.mxu0 0
        %1355 = vmatpush1.bf16.msra.mxu0 0
        %1356 = vmatprep.subr.bf16.mxu0 0
        %1357 = vmatpush1.bf16.msra.mxu0 0
        %1358 = vmatprep.subr.bf16.mxu0 0
        %1359 = vmatpush1.bf16.msra.mxu0 0
        %1360 = vmatprep.subr.bf16.mxu0 0
        %1361 = vmatpush1.bf16.msra.mxu0 0
        %1362 = vmatprep.subr.bf16.mxu0 0
        %1363 = vmatpush1.bf16.msra.mxu0 0
        %1364 = vmatprep.subr.bf16.mxu0 0
        %1365 = vmatpush1.bf16.msra.mxu0 0
        %1366 = vmatprep.subr.bf16.mxu0 0
        %1367 = vmatpush1.bf16.msra.mxu0 0
        %1368 = vmatprep.subr.bf16.mxu0 0
        %1369 = vmatpush1.bf16.msra.mxu0 0
        %1370 = vmatprep.subr.bf16.mxu0 0
        %1371 = vmatpush1.bf16.msra.mxu0 0
        %1372 = vmatprep.subr.bf16.mxu0 0
        %1373 = vmatpush1.bf16.msra.mxu0 0
        %1374 = vmatprep.mubr.bf16.mxu0 0
        %1375 = vmatmul.mubr.bf16.gmra.mrb[0].mxu0 %v1340
        %v1376 = vpop.f32.mrb[0].mxu0
        %v1377 = vadd.f32 0.0, %v1376
        %v1378 = vpop.f32.mrb[0].mxu0
        %v1379 = vpop.f32.mrb[0].mxu0
        %v1380 = vadd.f32 0.0, %v1379
        %v1381 = vpop.f32.mrb[0].mxu0
        %1382 = vdwg.mxu0
        %v1383 = vrcp.pop %v1330
        %v1384 = vrcp.pop %v1333
        %v1385 = vmul.f32 %v1377, %v1383
        %v1386 = vmul.f32 %v1380, %v1384
        %v1387 = vpack.c.bf16 %v1386, %v1385
        %1389 = vrot.lane.b32.xlu0 %v1387, 96
        %v1390 = vpop.permute.xlu0 %1389
        %vm1392 = vcmask 1048320
        %1393 = vst.msk [vmem:[#allocation4] sm:$0xff] %vm1392, %v1390
        %v1394 = vld [vmem:[#allocation4] sm:$0xff]
        %v1395 = vld [vmem:[#allocation11] sm:$0xf]
        %v1396 = vld [vmem:[#allocation11 + $0x4] sm:$0xf]
        %v1397 = vld [vmem:[#allocation11 + $0x8] sm:$0xf]
        %v1398 = vld [vmem:[#allocation11 + $0xc] sm:$0xf]
        %v1399 = vld [vmem:[#allocation11 + $0x10] sm:$0xf]
        %v1400 = vld [vmem:[#allocation11 + $0x14] sm:$0xf]
        %v1401 = vld [vmem:[#allocation11 + $0x18] sm:$0xf]
        %v1402 = vld [vmem:[#allocation11 + $0x1c] sm:$0xf]
        %v1403 = vld [vmem:[#allocation11 + $0x20] sm:$0xf]
        %v1404 = vld [vmem:[#allocation11 + $0x24] sm:$0xf]
        %v1405 = vld [vmem:[#allocation11 + $0x28] sm:$0xf]
        %v1406 = vld [vmem:[#allocation11 + $0x2c] sm:$0xf]
        %v1407 = vld [vmem:[#allocation11 + $0x30] sm:$0xf]
        %v1408 = vld [vmem:[#allocation11 + $0x34] sm:$0xf]
        %v1409 = vld [vmem:[#allocation11 + $0x38] sm:$0xf]
        %v1410 = vld [vmem:[#allocation11 + $0x3c] sm:$0xf]
        %v1411 = vld [vmem:[%s5] sm:$0x1]
        %v1413 = vlaneseq
        %v1414 = vshrl.u32 %v1413, 7
        %v1415 = vsub.s32 0, %v1414
        %v1416 = vrot.slane %v1411, %v1415
        %v1434 = vunpack.c.l.b16 %v1395
        %v1435 = vunpack.c.l.b16 %v1396
        %v1436 = vunpack.c.l.b16 %v1397
        %v1437 = vunpack.c.l.b16 %v1398
        %v1438 = vunpack.c.l.b16 %v1399
        %v1439 = vunpack.c.l.b16 %v1400
        %v1440 = vunpack.c.l.b16 %v1401
        %v1441 = vunpack.c.l.b16 %v1402
        %v1442 = vunpack.c.l.b16 %v1403
        %v1443 = vunpack.c.l.b16 %v1404
        %v1444 = vunpack.c.l.b16 %v1405
        %v1445 = vunpack.c.l.b16 %v1406
        %v1446 = vunpack.c.l.b16 %v1407
        %v1447 = vunpack.c.l.b16 %v1408
        %v1448 = vunpack.c.l.b16 %v1409
        %v1449 = vunpack.c.l.b16 %v1410
        %v1450 = vpack.c.b16 %v1435, %v1434
        %v1451 = vpack.c.b16 %v1437, %v1436
        %v1452 = vpack.c.b16 %v1439, %v1438
        %v1453 = vpack.c.b16 %v1441, %v1440
        %v1454 = vpack.c.b16 %v1443, %v1442
        %v1455 = vpack.c.b16 %v1445, %v1444
        %v1456 = vpack.c.b16 %v1447, %v1446
        %v1457 = vpack.c.b16 %v1449, %v1448
        %1466 = vmatprep.subr.bf16.mxu0 0
        %1467 = vmatpush1.bf16.msra.mxu0 %v1450
        %1468 = vmatprep.subr.bf16.mxu0 0
        %1469 = vmatpush1.bf16.msra.mxu0 %v1451
        %1470 = vmatprep.subr.bf16.mxu0 0
        %1471 = vmatpush1.bf16.msra.mxu0 %v1452
        %1472 = vmatprep.subr.bf16.mxu0 0
        %1473 = vmatpush1.bf16.msra.mxu0 %v1453
        %1474 = vmatprep.subr.bf16.mxu0 0
        %1475 = vmatpush1.bf16.msra.mxu0 %v1454
        %1476 = vmatprep.subr.bf16.mxu0 0
        %1477 = vmatpush1.bf16.msra.mxu0 %v1455
        %1478 = vmatprep.subr.bf16.mxu0 0
        %1479 = vmatpush1.bf16.msra.mxu0 %v1456
        %1480 = vmatprep.subr.bf16.mxu0 0
        %1481 = vmatpush1.bf16.msra.mxu0 %v1457
        %1482 = vmatprep.subr.bf16.mxu0 0
        %1483 = vmatpush1.bf16.msra.mxu0 0
        %1484 = vmatprep.subr.bf16.mxu0 0
        %1485 = vmatpush1.bf16.msra.mxu0 0
        %1486 = vmatprep.subr.bf16.mxu0 0
        %1487 = vmatpush1.bf16.msra.mxu0 0
        %1488 = vmatprep.subr.bf16.mxu0 0
        %1489 = vmatpush1.bf16.msra.mxu0 0
        %1490 = vmatprep.subr.bf16.mxu0 0
        %1491 = vmatpush1.bf16.msra.mxu0 0
        %1492 = vmatprep.subr.bf16.mxu0 0
        %1493 = vmatpush1.bf16.msra.mxu0 0
        %1494 = vmatprep.subr.bf16.mxu0 0
        %1495 = vmatpush1.bf16.msra.mxu0 0
        %1496 = vmatprep.subr.bf16.mxu0 0
        %1497 = vmatpush1.bf16.msra.mxu0 0
        %1498 = vmatprep.mubr.bf16.mxu0 0
        %1499 = vmatmul.mubr.bf16.gmra.mrb[0].mxu0 %v1394
        %v1500 = vpop.f32.mrb[0].mxu0
        %v1501 = vadd.f32 %v1416, %v1500
        %v1502 = vpop.f32.mrb[0].mxu0
        %v1503 = vpop.f32.mrb[0].mxu0
        %v1504 = vadd.f32 %v1416, %v1503
        %v1505 = vpop.f32.mrb[0].mxu0
        %1506 = vdwg.mxu0
        %v1507 = vadd.f32 %v869, %v1501
        %v1508 = vadd.f32 %v870, %v1504
        %v1509 = vld [vmem:[%s6] sm:$0x1]
        %v1510 = vld [vmem:[%s7] sm:$0x1]
        %1511 = vadd.xlane.f32.xlu0 %v1507
        %v1512 = vpop.xlane.xlu0 %1511
        %1513 = vadd.xlane.f32.xlu0 %v1508
        %v1514 = vpop.xlane.xlu0 %1513
        %v1515 = vrcp.pop 128.0
        %v1516 = vmul.f32 %v1512, %v1515
        %v1517 = vmul.f32 %v1514, %v1515
        %v1518 = vsub.f32 %v1507, %v1516
        %v1519 = vsub.f32 %v1508, %v1517
        %v1520 = vmul.f32 %v1518, %v1518
        %v1521 = vmul.f32 %v1519, %v1519
        %1522 = vadd.xlane.f32.xlu0 %v1520
        %v1523 = vpop.xlane.xlu0 %1522
        %1524 = vadd.xlane.f32.xlu0 %v1521
        %v1525 = vpop.xlane.xlu0 %1524
        %v1526 = vmul.f32 %v1523, %v1515
        %v1527 = vmul.f32 %v1525, %v1515
        %v1528 = vadd.f32 %v1526, 1e-06
        %v1529 = vadd.f32 %v1527, 1e-06
        %v1530 = vrsqrt.pop %v1528
        %v1531 = vrsqrt.pop %v1529
        %v1532 = vmul.f32 %v1518, %v1530
        %v1533 = vmul.f32 %v1519, %v1531
        %v1535 = vlaneseq
        %v1536 = vshrl.u32 %v1535, 7
        %v1537 = vsub.s32 0, %v1536
        %v1538 = vrot.slane %v1509, %v1537
        %v1540 = vmul.f32 %v1532, %v1538
        %v1541 = vmul.f32 %v1533, %v1538
        %v1543 = vlaneseq
        %v1544 = vshrl.u32 %v1543, 7
        %v1545 = vsub.s32 0, %v1544
        %v1546 = vrot.slane %v1510, %v1545
        %v1548 = vadd.f32 %v1540, %v1546
        %v1549 = vadd.f32 %v1541, %v1546
        %v1550 = vpack.c.bf16 %v1549, %v1548
        %v1551 = vld [vmem:[#allocation13] sm:$0xff]
        %v1552 = vld [vmem:[#allocation13 + $0x8] sm:$0xff]
        %v1553 = vld [vmem:[#allocation13 + $0x10] sm:$0xff]
        %v1554 = vld [vmem:[#allocation13 + $0x18] sm:$0xff]
        %v1555 = vld [vmem:[#allocation13 + $0x20] sm:$0xff]
        %v1556 = vld [vmem:[#allocation13 + $0x28] sm:$0xff]
        %v1557 = vld [vmem:[#allocation13 + $0x30] sm:$0xff]
        %v1558 = vld [vmem:[#allocation13 + $0x38] sm:$0xff]
        %v1559 = vld [vmem:[#allocation13 + $0x40] sm:$0xff]
        %v1560 = vld [vmem:[#allocation13 + $0x48] sm:$0xff]
        %v1561 = vld [vmem:[#allocation13 + $0x50] sm:$0xff]
        %v1562 = vld [vmem:[#allocation13 + $0x58] sm:$0xff]
        %v1563 = vld [vmem:[#allocation13 + $0x60] sm:$0xff]
        %v1564 = vld [vmem:[#allocation13 + $0x68] sm:$0xff]
        %v1565 = vld [vmem:[#allocation13 + $0x70] sm:$0xff]
        %v1566 = vld [vmem:[#allocation13 + $0x78] sm:$0xff]
        %v1567 = vld [vmem:[%s9] sm:$0x3]
        %v1569 = vlaneseq
        %v1570 = vshrl.u32 %v1569, 7
        %v1571 = vsub.s32 0, %v1570
        %v1572 = vrot.slane %v1567, %v1571
        %v1573 = vlaneseq
        %v1574 = vshrl.u32 %v1573, 7
        %v1575 = vsub.s32 1, %v1574
        %v1576 = vrot.slane %v1567, %v1575
        %v1595 = vunpack.c.l.b16 %v1551
        %v1596 = vunpack.c.h.b16 %v1551
        %v1597 = vunpack.c.l.b16 %v1552
        %v1598 = vunpack.c.h.b16 %v1552
        %v1599 = vunpack.c.l.b16 %v1553
        %v1600 = vunpack.c.h.b16 %v1553
        %v1601 = vunpack.c.l.b16 %v1554
        %v1602 = vunpack.c.h.b16 %v1554
        %v1603 = vunpack.c.l.b16 %v1555
        %v1604 = vunpack.c.h.b16 %v1555
        %v1605 = vunpack.c.l.b16 %v1556
        %v1606 = vunpack.c.h.b16 %v1556
        %v1607 = vunpack.c.l.b16 %v1557
        %v1608 = vunpack.c.h.b16 %v1557
        %v1609 = vunpack.c.l.b16 %v1558
        %v1610 = vunpack.c.h.b16 %v1558
        %v1611 = vunpack.c.l.b16 %v1559
        %v1612 = vunpack.c.h.b16 %v1559
        %v1613 = vunpack.c.l.b16 %v1560
        %v1614 = vunpack.c.h.b16 %v1560
        %v1615 = vunpack.c.l.b16 %v1561
        %v1616 = vunpack.c.h.b16 %v1561
        %v1617 = vunpack.c.l.b16 %v1562
        %v1618 = vunpack.c.h.b16 %v1562
        %v1619 = vunpack.c.l.b16 %v1563
        %v1620 = vunpack.c.h.b16 %v1563
        %v1621 = vunpack.c.l.b16 %v1564
        %v1622 = vunpack.c.h.b16 %v1564
        %v1623 = vunpack.c.l.b16 %v1565
        %v1624 = vunpack.c.h.b16 %v1565
        %v1625 = vunpack.c.l.b16 %v1566
        %v1626 = vunpack.c.h.b16 %v1566
        %v1627 = vpack.c.b16 %v1597, %v1595
        %v1628 = vpack.c.b16 %v1598, %v1596
        %v1629 = vpack.c.b16 %v1601, %v1599
        %v1630 = vpack.c.b16 %v1602, %v1600
        %v1631 = vpack.c.b16 %v1605, %v1603
        %v1632 = vpack.c.b16 %v1606, %v1604
        %v1633 = vpack.c.b16 %v1609, %v1607
        %v1634 = vpack.c.b16 %v1610, %v1608
        %v1635 = vpack.c.b16 %v1613, %v1611
        %v1636 = vpack.c.b16 %v1614, %v1612
        %v1637 = vpack.c.b16 %v1617, %v1615
        %v1638 = vpack.c.b16 %v1618, %v1616
        %v1639 = vpack.c.b16 %v1621, %v1619
        %v1640 = vpack.c.b16 %v1622, %v1620
        %v1641 = vpack.c.b16 %v1625, %v1623
        %v1642 = vpack.c.b16 %v1626, %v1624
        %1659 = vmatprep.subr.bf16.mxu0 %v1628
        %1660 = vmatpush1.bf16.msra.mxu0 %v1627
        %1661 = vmatprep.subr.bf16.mxu0 %v1630
        %1662 = vmatpush1.bf16.msra.mxu0 %v1629
        %1663 = vmatprep.subr.bf16.mxu0 %v1632
        %1664 = vmatpush1.bf16.msra.mxu0 %v1631
        %1665 = vmatprep.subr.bf16.mxu0 %v1634
        %1666 = vmatpush1.bf16.msra.mxu0 %v1633
        %1667 = vmatprep.subr.bf16.mxu0 %v1636
        %1668 = vmatpush1.bf16.msra.mxu0 %v1635
        %1669 = vmatprep.subr.bf16.mxu0 %v1638
        %1670 = vmatpush1.bf16.msra.mxu0 %v1637
        %1671 = vmatprep.subr.bf16.mxu0 %v1640
        %1672 = vmatpush1.bf16.msra.mxu0 %v1639
        %1673 = vmatprep.subr.bf16.mxu0 %v1642
        %1674 = vmatpush1.bf16.msra.mxu0 %v1641
        %1675 = vmatprep.subr.bf16.mxu0 0
        %1676 = vmatpush1.bf16.msra.mxu0 0
        %1677 = vmatprep.subr.bf16.mxu0 0
        %1678 = vmatpush1.bf16.msra.mxu0 0
        %1679 = vmatprep.subr.bf16.mxu0 0
        %1680 = vmatpush1.bf16.msra.mxu0 0
        %1681 = vmatprep.subr.bf16.mxu0 0
        %1682 = vmatpush1.bf16.msra.mxu0 0
        %1683 = vmatprep.subr.bf16.mxu0 0
        %1684 = vmatpush1.bf16.msra.mxu0 0
        %1685 = vmatprep.subr.bf16.mxu0 0
        %1686 = vmatpush1.bf16.msra.mxu0 0
        %1687 = vmatprep.subr.bf16.mxu0 0
        %1688 = vmatpush1.bf16.msra.mxu0 0
        %1689 = vmatprep.subr.bf16.mxu0 0
        %1690 = vmatpush1.bf16.msra.mxu0 0
        %1691 = vmatprep.mubr.bf16.mxu0 0
        %1692 = vmatmul.mubr.bf16.gmra.mrb[0].mxu0 %v1550
        %v1693 = vpop.f32.mrb[0].mxu0
        %v1694 = vadd.f32 %v1572, %v1693
        %v1695 = vpop.f32.mrb[0].mxu0
        %v1696 = vadd.f32 %v1576, %v1695
        %v1697 = vpop.f32.mrb[0].mxu0
        %v1698 = vadd.f32 %v1572, %v1697
        %v1699 = vpop.f32.mrb[0].mxu0
        %v1700 = vadd.f32 %v1576, %v1699
        %1701 = vdwg.mxu0
        %v1702 = vmax.f32 %v1694, 0.0
        %v1703 = vmax.f32 %v1696, 0.0
        %v1704 = vmax.f32 %v1698, 0.0
        %v1705 = vmax.f32 %v1700, 0.0
        %v1706 = vpack.c.bf16 %v1704, %v1702
        %v1707 = vpack.c.bf16 %v1705, %v1703
        %v1708 = vld [vmem:[#allocation14] sm:$0xf]
        %v1709 = vld [vmem:[#allocation14 + $0x4] sm:$0xf]
        %v1710 = vld [vmem:[#allocation14 + $0x8] sm:$0xf]
        %v1711 = vld [vmem:[#allocation14 + $0xc] sm:$0xf]
        %v1712 = vld [vmem:[#allocation14 + $0x10] sm:$0xf]
        %v1713 = vld [vmem:[#allocation14 + $0x14] sm:$0xf]
        %v1714 = vld [vmem:[#allocation14 + $0x18] sm:$0xf]
        %v1715 = vld [vmem:[#allocation14 + $0x1c] sm:$0xf]
        %v1716 = vld [vmem:[#allocation14 + $0x20] sm:$0xf]
        %v1717 = vld [vmem:[#allocation14 + $0x24] sm:$0xf]
        %v1718 = vld [vmem:[#allocation14 + $0x28] sm:$0xf]
        %v1719 = vld [vmem:[#allocation14 + $0x2c] sm:$0xf]
        %v1720 = vld [vmem:[#allocation14 + $0x30] sm:$0xf]
        %v1721 = vld [vmem:[#allocation14 + $0x34] sm:$0xf]
        %v1722 = vld [vmem:[#allocation14 + $0x38] sm:$0xf]
        %v1723 = vld [vmem:[#allocation14 + $0x3c] sm:$0xf]
        %v1724 = vld [vmem:[#allocation14 + $0x40] sm:$0xf]
        %v1725 = vld [vmem:[#allocation14 + $0x44] sm:$0xf]
        %v1726 = vld [vmem:[#allocation14 + $0x48] sm:$0xf]
        %v1727 = vld [vmem:[#allocation14 + $0x4c] sm:$0xf]
        %v1728 = vld [vmem:[#allocation14 + $0x50] sm:$0xf]
        %v1729 = vld [vmem:[#allocation14 + $0x54] sm:$0xf]
        %v1730 = vld [vmem:[#allocation14 + $0x58] sm:$0xf]
        %v1731 = vld [vmem:[#allocation14 + $0x5c] sm:$0xf]
        %v1732 = vld [vmem:[#allocation14 + $0x60] sm:$0xf]
        %v1733 = vld [vmem:[#allocation14 + $0x64] sm:$0xf]
        %v1734 = vld [vmem:[#allocation14 + $0x68] sm:$0xf]
        %v1735 = vld [vmem:[#allocation14 + $0x6c] sm:$0xf]
        %v1736 = vld [vmem:[#allocation14 + $0x70] sm:$0xf]
        %v1737 = vld [vmem:[#allocation14 + $0x74] sm:$0xf]
        %v1738 = vld [vmem:[#allocation14 + $0x78] sm:$0xf]
        %v1739 = vld [vmem:[#allocation14 + $0x7c] sm:$0xf]
        %v1740 = vld [vmem:[%s11] sm:$0x1]
        %v1742 = vlaneseq
        %v1743 = vshrl.u32 %v1742, 7
        %v1744 = vsub.s32 0, %v1743
        %v1745 = vrot.slane %v1740, %v1744
        %v1779 = vunpack.c.l.b16 %v1708
        %v1780 = vunpack.c.l.b16 %v1709
        %v1781 = vunpack.c.l.b16 %v1710
        %v1782 = vunpack.c.l.b16 %v1711
        %v1783 = vunpack.c.l.b16 %v1712
        %v1784 = vunpack.c.l.b16 %v1713
        %v1785 = vunpack.c.l.b16 %v1714
        %v1786 = vunpack.c.l.b16 %v1715
        %v1787 = vunpack.c.l.b16 %v1716
        %v1788 = vunpack.c.l.b16 %v1717
        %v1789 = vunpack.c.l.b16 %v1718
        %v1790 = vunpack.c.l.b16 %v1719
        %v1791 = vunpack.c.l.b16 %v1720
        %v1792 = vunpack.c.l.b16 %v1721
        %v1793 = vunpack.c.l.b16 %v1722
        %v1794 = vunpack.c.l.b16 %v1723
        %v1795 = vunpack.c.l.b16 %v1724
        %v1796 = vunpack.c.l.b16 %v1725
        %v1797 = vunpack.c.l.b16 %v1726
        %v1798 = vunpack.c.l.b16 %v1727
        %v1799 = vunpack.c.l.b16 %v1728
        %v1800 = vunpack.c.l.b16 %v1729
        %v1801 = vunpack.c.l.b16 %v1730
        %v1802 = vunpack.c.l.b16 %v1731
        %v1803 = vunpack.c.l.b16 %v1732
        %v1804 = vunpack.c.l.b16 %v1733
        %v1805 = vunpack.c.l.b16 %v1734
        %v1806 = vunpack.c.l.b16 %v1735
        %v1807 = vunpack.c.l.b16 %v1736
        %v1808 = vunpack.c.l.b16 %v1737
        %v1809 = vunpack.c.l.b16 %v1738
        %v1810 = vunpack.c.l.b16 %v1739
        %v1811 = vpack.c.b16 %v1780, %v1779
        %v1812 = vpack.c.b16 %v1782, %v1781
        %v1813 = vpack.c.b16 %v1784, %v1783
        %v1814 = vpack.c.b16 %v1786, %v1785
        %v1815 = vpack.c.b16 %v1788, %v1787
        %v1816 = vpack.c.b16 %v1790, %v1789
        %v1817 = vpack.c.b16 %v1792, %v1791
        %v1818 = vpack.c.b16 %v1794, %v1793
        %v1819 = vpack.c.b16 %v1796, %v1795
        %v1820 = vpack.c.b16 %v1798, %v1797
        %v1821 = vpack.c.b16 %v1800, %v1799
        %v1822 = vpack.c.b16 %v1802, %v1801
        %v1823 = vpack.c.b16 %v1804, %v1803
        %v1824 = vpack.c.b16 %v1806, %v1805
        %v1825 = vpack.c.b16 %v1808, %v1807
        %v1826 = vpack.c.b16 %v1810, %v1809
        %1843 = vmatprep.subr.bf16.mxu0 0
        %1844 = vmatpush1.bf16.msra.mxu0 %v1811
        %1845 = vmatprep.subr.bf16.mxu0 0
        %1846 = vmatpush1.bf16.msra.mxu0 %v1812
        %1847 = vmatprep.subr.bf16.mxu0 0
        %1848 = vmatpush1.bf16.msra.mxu0 %v1813
        %1849 = vmatprep.subr.bf16.mxu0 0
        %1850 = vmatpush1.bf16.msra.mxu0 %v1814
        %1851 = vmatprep.subr.bf16.mxu0 0
        %1852 = vmatpush1.bf16.msra.mxu0 %v1815
        %1853 = vmatprep.subr.bf16.mxu0 0
        %1854 = vmatpush1.bf16.msra.mxu0 %v1816
        %1855 = vmatprep.subr.bf16.mxu0 0
        %1856 = vmatpush1.bf16.msra.mxu0 %v1817
        %1857 = vmatprep.subr.bf16.mxu0 0
        %1858 = vmatpush1.bf16.msra.mxu0 %v1818
        %1859 = vmatprep.subr.bf16.mxu0 0
        %1860 = vmatpush1.bf16.msra.mxu0 %v1819
        %1861 = vmatprep.subr.bf16.mxu0 0
        %1862 = vmatpush1.bf16.msra.mxu0 %v1820
        %1863 = vmatprep.subr.bf16.mxu0 0
        %1864 = vmatpush1.bf16.msra.mxu0 %v1821
        %1865 = vmatprep.subr.bf16.mxu0 0
        %1866 = vmatpush1.bf16.msra.mxu0 %v1822
        %1867 = vmatprep.subr.bf16.mxu0 0
        %1868 = vmatpush1.bf16.msra.mxu0 %v1823
        %1869 = vmatprep.subr.bf16.mxu0 0
        %1870 = vmatpush1.bf16.msra.mxu0 %v1824
        %1871 = vmatprep.subr.bf16.mxu0 0
        %1872 = vmatpush1.bf16.msra.mxu0 %v1825
        %1873 = vmatprep.subr.bf16.mxu0 0
        %1874 = vmatpush1.bf16.msra.mxu0 %v1826
        %1875 = vmatprep.mubr.bf16.mxu0 %v1707
        %1876 = vmatmul.mubr.bf16.gmra.mrb[0].mxu0 %v1706
        %v1877 = vpop.f32.mrb[0].mxu0
        %v1878 = vadd.f32 %v1745, %v1877
        %v1879 = vpop.f32.mrb[0].mxu0
        %v1880 = vpop.f32.mrb[0].mxu0
        %v1881 = vadd.f32 %v1745, %v1880
        %v1882 = vpop.f32.mrb[0].mxu0
        %1883 = vdwg.mxu0
        %v1884 = vadd.f32 %v1548, %v1878
        %v1885 = vadd.f32 %v1549, %v1881
        %v1886 = vld [vmem:[%s12] sm:$0x1]
        %v1887 = vld [vmem:[%s13] sm:$0x1]
        %1888 = vadd.xlane.f32.xlu0 %v1884
        %v1889 = vpop.xlane.xlu0 %1888
        %1890 = vadd.xlane.f32.xlu0 %v1885
        %v1891 = vpop.xlane.xlu0 %1890
        %v1892 = vmul.f32 %v1889, %v1515
        %v1893 = vmul.f32 %v1891, %v1515
        %v1894 = vsub.f32 %v1884, %v1892
        %v1895 = vsub.f32 %v1885, %v1893
        %v1896 = vmul.f32 %v1894, %v1894
        %v1897 = vmul.f32 %v1895, %v1895
        %1898 = vadd.xlane.f32.xlu0 %v1896
        %v1899 = vpop.xlane.xlu0 %1898
        %1900 = vadd.xlane.f32.xlu0 %v1897
        %v1901 = vpop.xlane.xlu0 %1900
        %v1902 = vmul.f32 %v1899, %v1515
        %v1903 = vmul.f32 %v1901, %v1515
        %v1904 = vadd.f32 %v1902, 1e-06
        %v1905 = vadd.f32 %v1903, 1e-06
        %v1906 = vrsqrt.pop %v1904
        %v1907 = vrsqrt.pop %v1905
        %v1908 = vmul.f32 %v1894, %v1906
        %v1909 = vmul.f32 %v1895, %v1907
        %v1911 = vlaneseq
        %v1912 = vshrl.u32 %v1911, 7
        %v1913 = vsub.s32 0, %v1912
        %v1914 = vrot.slane %v1886, %v1913
        %v1916 = vmul.f32 %v1908, %v1914
        %v1917 = vmul.f32 %v1909, %v1914
        %v1919 = vlaneseq
        %v1920 = vshrl.u32 %v1919, 7
        %v1921 = vsub.s32 0, %v1920
        %v1922 = vrot.slane %v1887, %v1921
        %v1924 = vadd.f32 %v1916, %v1922
        %v1925 = vadd.f32 %v1917, %v1922
        %1926 = vst [vmem:[%s584] sm:$0xff] %v1924
        %1927 = vst [vmem:[%s584 + $0x8] sm:$0xff] %v1925
        %s1928 = sand.u32 %s362, 1
        %s1929 = scalar_lea.sflag [#allocation7], %s1928
        %s1930 = sand.u32 %s362, 1
        %s1931 = smul.addr %s1930, 16
        %s1932 = scalar_lea.vmem [#allocation16], %s1931
        // Predicated region
        $region105: #{tpu_custom_call.1} parent=75 // pred_check
          %p1933 = pneg %p372
        $region106: #{tpu_custom_call.1} parent=75 // pred_check_branch
          %1935 = sbr.rel (%p1933) target = $region108
        $region107: #{tpu_custom_call.1} parent=75 // pred_region
          %s1936 = smul.u32 2, %s39
          %s1938 = ssub.s32 256, 256
          %1939 = vsyncadd %s1929, %s1938
          %s1940 = smul.addr %s38, 2
          %s1941 = sadd.s32 %s1936, %s1940
          %s1942 = smul.addr %s1941, 128
          %s1943 = scalar_lea.hbm %s14, %s1942
          %s1944 = sshll.u32 %s1932, 4
          %s1945 = int_to_ptr.vmem [resolvable:$true] %s1944
          %1950 = dma.vmem_to_hbm [thread:$0]  %s1945, 256, %s1943, %s1929, 128, 128, 8
        $region108: #{tpu_custom_call.1} parent=75 // pred_fallthru
          _
      $region76: #{tpu_custom_call.1} parent=5 // pred_fallthru
        _
      %p1951 = scmp.le.s32.totalorder 2, %s29
      // Predicated region
      $region109: #{tpu_custom_call.1} parent=5 // pred_check
        %p1952 = pneg %p1951
      $region110: #{tpu_custom_call.1} parent=5 // pred_check_branch
        %1954 = sbr.rel (%p1952) target = $region112
      $region111: #{tpu_custom_call.1} parent=5 // pred_region
        %s1955 = ssub.s32 %s29, 2
        // Predicated region
        $region113: #{tpu_custom_call.1} parent=111 // pred_check
          %p1956 = pneg %p378
        $region114: #{tpu_custom_call.1} parent=111 // pred_check_branch
          %1958 = sbr.rel (%p1956) target = $region116
        $region115: #{tpu_custom_call.1} parent=111 // pred_region
          %s1959 = sand.u32 %s363, 1
          %s1960 = scalar_lea.sflag [#allocation7], %s1959
          %s1961 = sand.u32 %s363, 1
          %s1962 = smul.addr %s1961, 16
          %s1963 = scalar_lea.vmem [#allocation16], %s1962
          %1964 = dma.done %s1960, 256
        $region116: #{tpu_custom_call.1} parent=111 // pred_fallthru
          _
      $region112: #{tpu_custom_call.1} parent=5 // pred_fallthru
        _
    $region6: #{tpu_custom_call.1} parent=1 // loop_footer
      %s33 = sadd.s32 1, %s29
    $region7: #{tpu_custom_call.1} parent=1 // loop_footer_branch
      %28 = sbr.rel target = $region3
    $region8: #{tpu_custom_call.1} parent=1 // loop_exit
      _
    %1965 = vsyncpa [#allocation6], 1
    %s1966 = scalar_lea.sflag [#allocation6], 1
    %1967 = vsyncpa %s1966, 1
    %1968 = vsyncpa [#allocation9], 1
    %1969 = vsyncpa [#allocation12], 1
    %1970 = vsyncpa [#allocation15], 1
    %1971 = vsyncpa [#allocation7], 1
    %s1972 = scalar_lea.sflag [#allocation7], 1
    %1973 = vsyncpa %s1972, 1

// kernel: tpu_custom_call.1
$region0: #{tpu_custom_call.1}
  #allocation0 [shape = 'u32[]', space=smem, size = 0x4, offset = 0x4, fixed_abs, tag = 'smem constant byte address 0x4 - core index']
  #allocation1 [shape = 'u32[144,128]{1,0:T(1,128)}', space=vmem, size = 0x12000, scoped, tag = 'internal scratch']
  #allocation2 [shape = 'bf16[16,128]{1,0:T(16,128)(2,1)}', space=vmem, size = 0x1000, scoped, tag = 'scratch operand']
  #allocation3 [shape = 'bf16[16,256]{1,0:T(16,128)(2,1)}', space=vmem, size = 0x2000, scoped, tag = 'scratch operand']
  #allocation4 [shape = 'bf16[16,128]{1,0:T(16,128)(2,1)}', space=vmem, size = 0x1000, scoped, tag = 'scratch operand']
  %s0 = inlined_call_operand.hbm [shape: f32[2,16,128], index: 0, kind: input, shape index: {}]
  %s1 = inlined_call_operand.hbm [shape: bf16[2,16,128], index: 1, kind: input, shape index: {}]
  %s2 = inlined_call_operand.hbm [shape: bf16[128,384], index: 2, kind: input, shape index: {}]
  %s3 = inlined_call_operand.vmem [shape: f32[1,384], index: 3, kind: input, shape index: {}]
  %s4 = inlined_call_operand.hbm [shape: bf16[128,128], index: 4, kind: input, shape index: {}]
  %s5 = inlined_call_operand.vmem [shape: f32[1,128], index: 5, kind: input, shape index: {}]
  %s6 = inlined_call_operand.vmem [shape: f32[1,128], index: 6, kind: input, shape index: {}]
  %s7 = inlined_call_operand.vmem [shape: f32[1,128], index: 7, kind: input, shape index: {}]
  %s8 = inlined_call_operand.hbm [shape: bf16[128,256], index: 8, kind: input, shape index: {}]
  %s9 = inlined_call_operand.vmem [shape: f32[1,256], index: 9, kind: input, shape index: {}]
  %s10 = inlined_call_operand.hbm [shape: bf16[256,128], index: 10, kind: input, shape index: {}]
  %s11 = inlined_call_operand.vmem [shape: f32[1,128], index: 11, kind: input, shape index: {}]
  %s12 = inlined_call_operand.vmem [shape: f32[1,128], index: 12, kind: input, shape index: {}]
  %s13 = inlined_call_operand.vmem [shape: f32[1,128], index: 13, kind: input, shape index: {}]
  %s14 = inlined_call_operand.hbm [shape: f32[2,16,128], index: 14, kind: output, shape index: {}]
  %s15 = sld [smem:[#allocation0]]
  $region117: #{tpu_custom_call.1} parent=0
    _
  %s17 = ssub.s32 1, %s15
  %s18 = scalar_select 0, %s17, %s15
  $region1: #{tpu_custom_call.1} parent=0
    #allocation5 [shape = 'u8[16384]{0}', space=vmem, size = 0x4000, scoped, tag = 'input window, operand 0']
    #allocation6 [shape = 's32[2]{0}', space=sflag, size = 0x8, scoped, tag = 'scoped memory for tpu_custom_call.1']
    #allocation7 [shape = 's32[2]{0}', space=sflag, size = 0x8, scoped, tag = 'scoped memory for tpu_custom_call.1']
    #allocation8 [shape = 'u8[8192]{0}', space=vmem, size = 0x2000, scoped, tag = 'input window, operand 1']
    #allocation9 [shape = 's32[2]{0}', space=sflag, size = 0x8, scoped, tag = 'scoped memory for tpu_custom_call.1']
    #allocation10 [shape = 'u8[98304]{0}', space=vmem, size = 0x18000, scoped, tag = 'input window, operand 2, single buffered']
    #allocation11 [shape = 'u8[32768]{0}', space=vmem, size = 0x8000, scoped, tag = 'input window, operand 4, single buffered']
    #allocation12 [shape = 's32[1]{0}', space=sflag, size = 0x4, scoped, tag = 'scoped memory for tpu_custom_call.1']
    #allocation13 [shape = 'u8[65536]{0}', space=vmem, size = 0x10000, scoped, tag = 'input window, operand 8, single buffered']
    #allocation14 [shape = 'u8[65536]{0}', space=vmem, size = 0x10000, scoped, tag = 'input window, operand 10, single buffered']
    #allocation15 [shape = 's32[1]{0}', space=sflag, size = 0x4, scoped, tag = 'scoped memory for tpu_custom_call.1']
    #allocation16 [shape = 'u8[16384]{0}', space=vmem, size = 0x4000, scoped, tag = 'output window, operand 0']
    %19 = vsyncpa [#allocation6], 0
    %s20 = scalar_lea.sflag [#allocation6], 1
    %21 = vsyncpa %s20, 0
    %22 = vsyncpa [#allocation9], 0
    %s23 = scalar_lea.sflag [#allocation9], 1
    %24 = vsyncpa %s23, 0
    %25 = vsyncpa [#allocation12], 0
    %26 = vsyncpa [#allocation15], 0
    %27 = vsyncpa [#allocation7], 0
    %s28 = scalar_lea.sflag [#allocation7], 1
    %29 = vsyncpa %s28, 0
    loop: start=0, step=1, limit=4
    $region2: #{tpu_custom_call.1} parent=1 // loop_pre_header
      _
    $region3: #{tpu_custom_call.1} parent=1 // loop_header
      %s31 = sphi 0, %s35
      %p32 = scmp.ge.s32.totalorder %s31, 4
      %s38 = sphi 0, %s50
      %s39 = sphi 0, %s46
      %s40 = sphi 0, %s38
      %s41 = sphi 0, %s39
      %s42 = sphi 0, %s40
      %s43 = sphi 0, %s41
      %s55 = sphi 0, %s57
      %s58 = sphi 0, %s55
      %s59 = sphi 0, %s58
      %s75 = sphi 0, %s59
      %s81 = sphi 0, %s83
      %s84 = sphi 0, %s81
      %s85 = sphi 0, %s84
      %s101 = sphi 0, %s85
      %s105 = sphi 0, %s105
      %s107 = sphi 0, %s105
      %s108 = sphi 0, %s107
      %s122 = sphi 0, %s108
      %s126 = sphi 0, %s126
      %s128 = sphi 0, %s126
      %s129 = sphi 0, %s128
      %s143 = sphi 0, %s129
      %s147 = sphi 0, %s147
      %s149 = sphi 0, %s147
      %s150 = sphi 0, %s149
      %s164 = sphi 0, %s150
      %s168 = sphi 0, %s168
      %s170 = sphi 0, %s168
      %s171 = sphi 0, %s170
      %s185 = sphi 0, %s171
      %s189 = sphi 0, %s189
      %s191 = sphi 0, %s189
      %s192 = sphi 0, %s191
      %s206 = sphi 0, %s192
      %s210 = sphi 0, %s210
      %s212 = sphi 0, %s210
      %s213 = sphi 0, %s212
      %s227 = sphi 0, %s213
      %s231 = sphi 0, %s231
      %s233 = sphi 0, %s231
      %s234 = sphi 0, %s233
      %s248 = sphi 0, %s234
      %s252 = sphi 0, %s252
      %s254 = sphi 0, %s252
      %s255 = sphi 0, %s254
      %s269 = sphi 0, %s255
      %s273 = sphi 0, %s273
      %s275 = sphi 0, %s273
      %s276 = sphi 0, %s275
      %s290 = sphi 0, %s276
      %s294 = sphi 0, %s294
      %s296 = sphi 0, %s294
      %s297 = sphi 0, %s296
      %s311 = sphi 0, %s297
      %s315 = sphi 0, %s315
      %s317 = sphi 0, %s315
      %s318 = sphi 0, %s317
      %s332 = sphi 0, %s318
      %s336 = sphi 0, %s336
      %s338 = sphi 0, %s336
      %s339 = sphi 0, %s338
      %s353 = sphi 0, %s339
      %s361 = sphi 0, %s363
      %s364 = sphi 0, %s361
      %s365 = sphi 0, %s364
      %s381 = sphi 0, %s365
    $region4: #{tpu_custom_call.1} parent=1 // loop_header_branch
      %34 = sbr.rel (%p32) target = $region8
    $region5: #{tpu_custom_call.1} parent=1 // loop_body
      %s36 = ssub.s32 %s31, 1
      %s37 = ssub.s32 %s31, 2
      %s44 = sadd.s32 1, %s39
      %p45 = scmp.ge.s32.totalorder %s44, 1
      %s46 = scalar_select %p45, 0, %s44
      %s47 = sadd.s32 1, %s38
      %s48 = scalar_select %p45, %s47, %s38
      %p49 = scmp.ge.s32.totalorder %s48, 2
      %s50 = scalar_select %p49, 0, %s48
      %s51 = ssub.s32 %s38, %s50
      %s52 = ssub.s32 %s39, %s46
      %s53 = sor.u32 %s51, %s52
      %p54 = scmp.eq.s32.totalorder %s53, 0
      %s56 = sadd.s32 %s55, 1
      %s57 = scalar_select %p54, %s55, %s56
      %p60 = pneg %p54
      %p61 = scmp.eq.s32.totalorder %s31, 1
      %p62 = por %p60, %p61
      %p63 = scmp.ne.s32.totalorder %s55, %s58
      %p64 = scmp.eq.s32.totalorder %s31, 0
      %p65 = por %p63, %p64
      %p66 = scmp.ne.s32.totalorder %s55, %s58
      %p67 = scmp.eq.s32.totalorder %s36, 1
      %p68 = por %p66, %p67
      %p69 = scmp.ne.s32.totalorder %s58, %s59
      %p70 = scmp.eq.s32.totalorder %s36, 0
      %p71 = por %p69, %p70
      %p72 = scmp.ne.s32.totalorder %s58, %s59
      %p73 = scmp.eq.s32.totalorder %s37, 1
      %p74 = por %p72, %p73
      %p76 = scmp.ne.s32.totalorder %s59, %s75
      %p77 = scmp.eq.s32.totalorder %s37, 0
      %p78 = por %p76, %p77
      %s79 = ssub.s32 %s38, %s50
      %p80 = scmp.eq.s32.totalorder %s79, 0
      %s82 = sadd.s32 %s81, 1
      %s83 = scalar_select %p80, %s81, %s82
      %p86 = pneg %p80
      %p87 = scmp.eq.s32.totalorder %s31, 1
      %p88 = por %p86, %p87
      %p89 = scmp.ne.s32.totalorder %s81, %s84
      %p90 = scmp.eq.s32.totalorder %s31, 0
      %p91 = por %p89, %p90
      %p92 = scmp.ne.s32.totalorder %s81, %s84
      %p93 = scmp.eq.s32.totalorder %s36, 1
      %p94 = por %p92, %p93
      %p95 = scmp.ne.s32.totalorder %s84, %s85
      %p96 = scmp.eq.s32.totalorder %s36, 0
      %p97 = por %p95, %p96
      %p98 = scmp.ne.s32.totalorder %s84, %s85
      %p99 = scmp.eq.s32.totalorder %s37, 1
      %p100 = por %p98, %p99
      %p102 = scmp.ne.s32.totalorder %s85, %s101
      %p103 = scmp.eq.s32.totalorder %s37, 0
      %p104 = por %p102, %p103
      %s106 = sadd.s32 %s105, 1
      %p109 = scmp.eq.s32.totalorder %s31, 1
      %p110 = scmp.ne.s32.totalorder %s105, %s107
      %p111 = scmp.eq.s32.totalorder %s31, 0
      %p112 = por %p110, %p111
      %p113 = scmp.ne.s32.totalorder %s105, %s107
      %p114 = scmp.eq.s32.totalorder %s36, 1
      %p115 = por %p113, %p114
      %p116 = scmp.ne.s32.totalorder %s107, %s108
      %p117 = scmp.eq.s32.totalorder %s36, 0
      %p118 = por %p116, %p117
      %p119 = scmp.ne.s32.totalorder %s107, %s108
      %p120 = scmp.eq.s32.totalorder %s37, 1
      %p121 = por %p119, %p120
      %p123 = scmp.ne.s32.totalorder %s108, %s122
      %p124 = scmp.eq.s32.totalorder %s37, 0
      %p125 = por %p123, %p124
      %s127 = sadd.s32 %s126, 1
      %p130 = scmp.eq.s32.totalorder %s31, 1
      %p131 = scmp.ne.s32.totalorder %s126, %s128
      %p132 = scmp.eq.s32.totalorder %s31, 0
      %p133 = por %p131, %p132
      %p134 = scmp.ne.s32.totalorder %s126, %s128
      %p135 = scmp.eq.s32.totalorder %s36, 1
      %p136 = por %p134, %p135
      %p137 = scmp.ne.s32.totalorder %s128, %s129
      %p138 = scmp.eq.s32.totalorder %s36, 0
      %p139 = por %p137, %p138
      %p140 = scmp.ne.s32.totalorder %s128, %s129
      %p141 = scmp.eq.s32.totalorder %s37, 1
      %p142 = por %p140, %p141
      %p144 = scmp.ne.s32.totalorder %s129, %s143
      %p145 = scmp.eq.s32.totalorder %s37, 0
      %p146 = por %p144, %p145
      %s148 = sadd.s32 %s147, 1
      %p151 = scmp.eq.s32.totalorder %s31, 1
      %p152 = scmp.ne.s32.totalorder %s147, %s149
      %p153 = scmp.eq.s32.totalorder %s31, 0
      %p154 = por %p152, %p153
      %p155 = scmp.ne.s32.totalorder %s147, %s149
      %p156 = scmp.eq.s32.totalorder %s36, 1
      %p157 = por %p155, %p156
      %p158 = scmp.ne.s32.totalorder %s149, %s150
      %p159 = scmp.eq.s32.totalorder %s36, 0
      %p160 = por %p158, %p159
      %p161 = scmp.ne.s32.totalorder %s149, %s150
      %p162 = scmp.eq.s32.totalorder %s37, 1
      %p163 = por %p161, %p162
      %p165 = scmp.ne.s32.totalorder %s150, %s164
      %p166 = scmp.eq.s32.totalorder %s37, 0
      %p167 = por %p165, %p166
      %s169 = sadd.s32 %s168, 1
      %p172 = scmp.eq.s32.totalorder %s31, 1
      %p173 = scmp.ne.s32.totalorder %s168, %s170
      %p174 = scmp.eq.s32.totalorder %s31, 0
      %p175 = por %p173, %p174
      %p176 = scmp.ne.s32.totalorder %s168, %s170
      %p177 = scmp.eq.s32.totalorder %s36, 1
      %p178 = por %p176, %p177
      %p179 = scmp.ne.s32.totalorder %s170, %s171
      %p180 = scmp.eq.s32.totalorder %s36, 0
      %p181 = por %p179, %p180
      %p182 = scmp.ne.s32.totalorder %s170, %s171
      %p183 = scmp.eq.s32.totalorder %s37, 1
      %p184 = por %p182, %p183
      %p186 = scmp.ne.s32.totalorder %s171, %s185
      %p187 = scmp.eq.s32.totalorder %s37, 0
      %p188 = por %p186, %p187
      %s190 = sadd.s32 %s189, 1
      %p193 = scmp.eq.s32.totalorder %s31, 1
      %p194 = scmp.ne.s32.totalorder %s189, %s191
      %p195 = scmp.eq.s32.totalorder %s31, 0
      %p196 = por %p194, %p195
      %p197 = scmp.ne.s32.totalorder %s189, %s191
      %p198 = scmp.eq.s32.totalorder %s36, 1
      %p199 = por %p197, %p198
      %p200 = scmp.ne.s32.totalorder %s191, %s192
      %p201 = scmp.eq.s32.totalorder %s36, 0
      %p202 = por %p200, %p201
      %p203 = scmp.ne.s32.totalorder %s191, %s192
      %p204 = scmp.eq.s32.totalorder %s37, 1
      %p205 = por %p203, %p204
      %p207 = scmp.ne.s32.totalorder %s192, %s206
      %p208 = scmp.eq.s32.totalorder %s37, 0
      %p209 = por %p207, %p208
      %s211 = sadd.s32 %s210, 1
      %p214 = scmp.eq.s32.totalorder %s31, 1
      %p215 = scmp.ne.s32.totalorder %s210, %s212
      %p216 = scmp.eq.s32.totalorder %s31, 0
      %p217 = por %p215, %p216
      %p218 = scmp.ne.s32.totalorder %s210, %s212
      %p219 = scmp.eq.s32.totalorder %s36, 1
      %p220 = por %p218, %p219
      %p221 = scmp.ne.s32.totalorder %s212, %s213
      %p222 = scmp.eq.s32.totalorder %s36, 0
      %p223 = por %p221, %p222
      %p224 = scmp.ne.s32.totalorder %s212, %s213
      %p225 = scmp.eq.s32.totalorder %s37, 1
      %p226 = por %p224, %p225
      %p228 = scmp.ne.s32.totalorder %s213, %s227
      %p229 = scmp.eq.s32.totalorder %s37, 0
      %p230 = por %p228, %p229
      %s232 = sadd.s32 %s231, 1
      %p235 = scmp.eq.s32.totalorder %s31, 1
      %p236 = scmp.ne.s32.totalorder %s231, %s233
      %p237 = scmp.eq.s32.totalorder %s31, 0
      %p238 = por %p236, %p237
      %p239 = scmp.ne.s32.totalorder %s231, %s233
      %p240 = scmp.eq.s32.totalorder %s36, 1
      %p241 = por %p239, %p240
      %p242 = scmp.ne.s32.totalorder %s233, %s234
      %p243 = scmp.eq.s32.totalorder %s36, 0
      %p244 = por %p242, %p243
      %p245 = scmp.ne.s32.totalorder %s233, %s234
      %p246 = scmp.eq.s32.totalorder %s37, 1
      %p247 = por %p245, %p246
      %p249 = scmp.ne.s32.totalorder %s234, %s248
      %p250 = scmp.eq.s32.totalorder %s37, 0
      %p251 = por %p249, %p250
      %s253 = sadd.s32 %s252, 1
      %p256 = scmp.eq.s32.totalorder %s31, 1
      %p257 = scmp.ne.s32.totalorder %s252, %s254
      %p258 = scmp.eq.s32.totalorder %s31, 0
      %p259 = por %p257, %p258
      %p260 = scmp.ne.s32.totalorder %s252, %s254
      %p261 = scmp.eq.s32.totalorder %s36, 1
      %p262 = por %p260, %p261
      %p263 = scmp.ne.s32.totalorder %s254, %s255
      %p264 = scmp.eq.s32.totalorder %s36, 0
      %p265 = por %p263, %p264
      %p266 = scmp.ne.s32.totalorder %s254, %s255
      %p267 = scmp.eq.s32.totalorder %s37, 1
      %p268 = por %p266, %p267
      %p270 = scmp.ne.s32.totalorder %s255, %s269
      %p271 = scmp.eq.s32.totalorder %s37, 0
      %p272 = por %p270, %p271
      %s274 = sadd.s32 %s273, 1
      %p277 = scmp.eq.s32.totalorder %s31, 1
      %p278 = scmp.ne.s32.totalorder %s273, %s275
      %p279 = scmp.eq.s32.totalorder %s31, 0
      %p280 = por %p278, %p279
      %p281 = scmp.ne.s32.totalorder %s273, %s275
      %p282 = scmp.eq.s32.totalorder %s36, 1
      %p283 = por %p281, %p282
      %p284 = scmp.ne.s32.totalorder %s275, %s276
      %p285 = scmp.eq.s32.totalorder %s36, 0
      %p286 = por %p284, %p285
      %p287 = scmp.ne.s32.totalorder %s275, %s276
      %p288 = scmp.eq.s32.totalorder %s37, 1
      %p289 = por %p287, %p288
      %p291 = scmp.ne.s32.totalorder %s276, %s290
      %p292 = scmp.eq.s32.totalorder %s37, 0
      %p293 = por %p291, %p292
      %s295 = sadd.s32 %s294, 1
      %p298 = scmp.eq.s32.totalorder %s31, 1
      %p299 = scmp.ne.s32.totalorder %s294, %s296
      %p300 = scmp.eq.s32.totalorder %s31, 0
      %p301 = por %p299, %p300
      %p302 = scmp.ne.s32.totalorder %s294, %s296
      %p303 = scmp.eq.s32.totalorder %s36, 1
      %p304 = por %p302, %p303
      %p305 = scmp.ne.s32.totalorder %s296, %s297
      %p306 = scmp.eq.s32.totalorder %s36, 0
      %p307 = por %p305, %p306
      %p308 = scmp.ne.s32.totalorder %s296, %s297
      %p309 = scmp.eq.s32.totalorder %s37, 1
      %p310 = por %p308, %p309
      %p312 = scmp.ne.s32.totalorder %s297, %s311
      %p313 = scmp.eq.s32.totalorder %s37, 0
      %p314 = por %p312, %p313
      %s316 = sadd.s32 %s315, 1
      %p319 = scmp.eq.s32.totalorder %s31, 1
      %p320 = scmp.ne.s32.totalorder %s315, %s317
      %p321 = scmp.eq.s32.totalorder %s31, 0
      %p322 = por %p320, %p321
      %p323 = scmp.ne.s32.totalorder %s315, %s317
      %p324 = scmp.eq.s32.totalorder %s36, 1
      %p325 = por %p323, %p324
      %p326 = scmp.ne.s32.totalorder %s317, %s318
      %p327 = scmp.eq.s32.totalorder %s36, 0
      %p328 = por %p326, %p327
      %p329 = scmp.ne.s32.totalorder %s317, %s318
      %p330 = scmp.eq.s32.totalorder %s37, 1
      %p331 = por %p329, %p330
      %p333 = scmp.ne.s32.totalorder %s318, %s332
      %p334 = scmp.eq.s32.totalorder %s37, 0
      %p335 = por %p333, %p334
      %s337 = sadd.s32 %s336, 1
      %p340 = scmp.eq.s32.totalorder %s31, 1
      %p341 = scmp.ne.s32.totalorder %s336, %s338
      %p342 = scmp.eq.s32.totalorder %s31, 0
      %p343 = por %p341, %p342
      %p344 = scmp.ne.s32.totalorder %s336, %s338
      %p345 = scmp.eq.s32.totalorder %s36, 1
      %p346 = por %p344, %p345
      %p347 = scmp.ne.s32.totalorder %s338, %s339
      %p348 = scmp.eq.s32.totalorder %s36, 0
      %p349 = por %p347, %p348
      %p350 = scmp.ne.s32.totalorder %s338, %s339
      %p351 = scmp.eq.s32.totalorder %s37, 1
      %p352 = por %p350, %p351
      %p354 = scmp.ne.s32.totalorder %s339, %s353
      %p355 = scmp.eq.s32.totalorder %s37, 0
      %p356 = por %p354, %p355
      %s357 = ssub.s32 %s38, %s50
      %s358 = ssub.s32 %s39, %s46
      %s359 = sor.u32 %s357, %s358
      %p360 = scmp.eq.s32.totalorder %s359, 0
      %s362 = sadd.s32 %s361, 1
      %s363 = scalar_select %p360, %s361, %s362
      %p366 = pneg %p360
      %p367 = scmp.eq.s32.totalorder %s31, 1
      %p368 = por %p366, %p367
      %p369 = scmp.ne.s32.totalorder %s361, %s364
      %p370 = scmp.eq.s32.totalorder %s31, 0
      %p371 = por %p369, %p370
      %p372 = scmp.ne.s32.totalorder %s361, %s364
      %p373 = scmp.eq.s32.totalorder %s36, 1
      %p374 = por %p372, %p373
      %p375 = scmp.ne.s32.totalorder %s364, %s365
      %p376 = scmp.eq.s32.totalorder %s36, 0
      %p377 = por %p375, %p376
      %p378 = scmp.ne.s32.totalorder %s364, %s365
      %p379 = scmp.eq.s32.totalorder %s37, 1
      %p380 = por %p378, %p379
      %p382 = scmp.ne.s32.totalorder %s365, %s381
      %p383 = scmp.eq.s32.totalorder %s37, 0
      %p384 = por %p382, %p383
      %p385 = scmp.le.s32.totalorder 1, %s31
      %p386 = scmp.lt.s32.totalorder %s31, 3
      %p387 = pnand %p385, %p386
      %p388 = pneg %p387
      // Predicated region
      $region9: #{tpu_custom_call.1} parent=5 // pred_check
        _
      $region10: #{tpu_custom_call.1} parent=5 // pred_check_branch
        %390 = sbr.rel (%p387) target = $region12
      $region11: #{tpu_custom_call.1} parent=5 // pred_region
        %s391 = ssub.s32 %s31, 1
        // Predicated region
        $region13: #{tpu_custom_call.1} parent=11 // pred_check
          %p392 = pneg %p118
        $region14: #{tpu_custom_call.1} parent=11 // pred_check_branch
          %394 = sbr.rel (%p392) target = $region16
        $region15: #{tpu_custom_call.1} parent=11 // pred_region
          %s396 = ssub.s32 3072, 3072
          %397 = vsyncadd [#allocation9], %s396
          %s398 = sshll.u32 [#allocation10], 4
          %s399 = int_to_ptr.vmem [resolvable:$true] %s398
          %404 = dma.hbm_to_vmem [thread:$0]  %s2, 3072, %s399, [#allocation9], 192, 192, 12
        $region16: #{tpu_custom_call.1} parent=11 // pred_fallthru
          _
        // Predicated region
        $region17: #{tpu_custom_call.1} parent=11 // pred_check
          %p405 = pneg %p139
        $region18: #{tpu_custom_call.1} parent=11 // pred_check_branch
          %407 = sbr.rel (%p405) target = $region20
        $region19: #{tpu_custom_call.1} parent=11 // pred_region
          _
        $region20: #{tpu_custom_call.1} parent=11 // pred_fallthru
          _
        // Predicated region
        $region21: #{tpu_custom_call.1} parent=11 // pred_check
          %p408 = pneg %p160
        $region22: #{tpu_custom_call.1} parent=11 // pred_check_branch
          %410 = sbr.rel (%p408) target = $region24
        $region23: #{tpu_custom_call.1} parent=11 // pred_region
          %s412 = ssub.s32 1024, 1024
          %413 = vsyncadd [#allocation12], %s412
          %s414 = sshll.u32 [#allocation11], 4
          %s415 = int_to_ptr.vmem [resolvable:$true] %s414
          %420 = dma.hbm_to_vmem [thread:$0]  %s4, 1024, %s415, [#allocation12], 64, 64, 4
        $region24: #{tpu_custom_call.1} parent=11 // pred_fallthru
          _
        // Predicated region
        $region25: #{tpu_custom_call.1} parent=11 // pred_check
          %p421 = pneg %p181
        $region26: #{tpu_custom_call.1} parent=11 // pred_check_branch
          %423 = sbr.rel (%p421) target = $region28
        $region27: #{tpu_custom_call.1} parent=11 // pred_region
          _
        $region28: #{tpu_custom_call.1} parent=11 // pred_fallthru
          _
        // Predicated region
        $region29: #{tpu_custom_call.1} parent=11 // pred_check
          %p424 = pneg %p202
        $region30: #{tpu_custom_call.1} parent=11 // pred_check_branch
          %426 = sbr.rel (%p424) target = $region32
        $region31: #{tpu_custom_call.1} parent=11 // pred_region
          _
        $region32: #{tpu_custom_call.1} parent=11 // pred_fallthru
          _
        // Predicated region
        $region33: #{tpu_custom_call.1} parent=11 // pred_check
          %p427 = pneg %p223
        $region34: #{tpu_custom_call.1} parent=11 // pred_check_branch
          %429 = sbr.rel (%p427) target = $region36
        $region35: #{tpu_custom_call.1} parent=11 // pred_region
          _
        $region36: #{tpu_custom_call.1} parent=11 // pred_fallthru
          _
        // Predicated region
        $region37: #{tpu_custom_call.1} parent=11 // pred_check
          %p430 = pneg %p244
        $region38: #{tpu_custom_call.1} parent=11 // pred_check_branch
          %432 = sbr.rel (%p430) target = $region40
        $region39: #{tpu_custom_call.1} parent=11 // pred_region
          %s434 = ssub.s32 2048, 2048
          %435 = vsyncadd [#allocation12], %s434
          %s436 = sshll.u32 [#allocation13], 4
          %s437 = int_to_ptr.vmem [resolvable:$true] %s436
          %442 = dma.hbm_to_vmem [thread:$0]  %s8, 2048, %s437, [#allocation12], 128, 128, 8
        $region40: #{tpu_custom_call.1} parent=11 // pred_fallthru
          _
        // Predicated region
        $region41: #{tpu_custom_call.1} parent=11 // pred_check
          %p443 = pneg %p265
        $region42: #{tpu_custom_call.1} parent=11 // pred_check_branch
          %445 = sbr.rel (%p443) target = $region44
        $region43: #{tpu_custom_call.1} parent=11 // pred_region
          _
        $region44: #{tpu_custom_call.1} parent=11 // pred_fallthru
          _
        // Predicated region
        $region45: #{tpu_custom_call.1} parent=11 // pred_check
          %p446 = pneg %p286
        $region46: #{tpu_custom_call.1} parent=11 // pred_check_branch
          %448 = sbr.rel (%p446) target = $region48
        $region47: #{tpu_custom_call.1} parent=11 // pred_region
          %s450 = ssub.s32 2048, 2048
          %451 = vsyncadd [#allocation15], %s450
          %s452 = sshll.u32 [#allocation14], 4
          %s453 = int_to_ptr.vmem [resolvable:$true] %s452
          %458 = dma.hbm_to_vmem [thread:$0]  %s10, 2048, %s453, [#allocation15], 64, 64, 4
        $region48: #{tpu_custom_call.1} parent=11 // pred_fallthru
          _
        // Predicated region
        $region49: #{tpu_custom_call.1} parent=11 // pred_check
          %p459 = pneg %p307
        $region50: #{tpu_custom_call.1} parent=11 // pred_check_branch
          %461 = sbr.rel (%p459) target = $region52
        $region51: #{tpu_custom_call.1} parent=11 // pred_region
          _
        $region52: #{tpu_custom_call.1} parent=11 // pred_fallthru
          _
        // Predicated region
        $region53: #{tpu_custom_call.1} parent=11 // pred_check
          %p462 = pneg %p328
        $region54: #{tpu_custom_call.1} parent=11 // pred_check_branch
          %464 = sbr.rel (%p462) target = $region56
        $region55: #{tpu_custom_call.1} parent=11 // pred_region
          _
        $region56: #{tpu_custom_call.1} parent=11 // pred_fallthru
          _
        // Predicated region
        $region57: #{tpu_custom_call.1} parent=11 // pred_check
          %p465 = pneg %p349
        $region58: #{tpu_custom_call.1} parent=11 // pred_check_branch
          %467 = sbr.rel (%p465) target = $region60
        $region59: #{tpu_custom_call.1} parent=11 // pred_region
          _
        $region60: #{tpu_custom_call.1} parent=11 // pred_fallthru
          _
      $region12: #{tpu_custom_call.1} parent=5 // pred_fallthru
        _
      %p468 = scmp.lt.s32.totalorder %s31, 2
      // Predicated region
      $region61: #{tpu_custom_call.1} parent=5 // pred_check
        %p469 = pneg %p468
      $region62: #{tpu_custom_call.1} parent=5 // pred_check_branch
        %471 = sbr.rel (%p469) target = $region64
      $region63: #{tpu_custom_call.1} parent=5 // pred_region
        // Predicated region
        $region65: #{tpu_custom_call.1} parent=63 // pred_check
          %p472 = pneg %p65
        $region66: #{tpu_custom_call.1} parent=63 // pred_check_branch
          %474 = sbr.rel (%p472) target = $region68
        $region67: #{tpu_custom_call.1} parent=63 // pred_region
          %s475 = sand.u32 %s55, 1
          %s476 = scalar_lea.sflag [#allocation6], %s475
          %s477 = sand.u32 %s55, 1
          %s478 = smul.addr %s477, 16
          %s479 = scalar_lea.vmem [#allocation5], %s478
          %s480 = smul.u32 2, %s39
          %s482 = ssub.s32 256, 256
          %483 = vsyncadd %s476, %s482
          %s484 = smul.addr %s38, 2
          %s485 = sadd.s32 %s480, %s484
          %s486 = smul.addr %s485, 128
          %s487 = scalar_lea.hbm %s0, %s486
          %s488 = sshll.u32 %s479, 4
          %s489 = int_to_ptr.vmem [resolvable:$true] %s488
          %494 = dma.hbm_to_vmem [thread:$0]  %s487, 256, %s489, %s476, 128, 128, 8
        $region68: #{tpu_custom_call.1} parent=63 // pred_fallthru
          _
        // Predicated region
        $region69: #{tpu_custom_call.1} parent=63 // pred_check
          %p495 = pneg %p91
        $region70: #{tpu_custom_call.1} parent=63 // pred_check_branch
          %497 = sbr.rel (%p495) target = $region72
        $region71: #{tpu_custom_call.1} parent=63 // pred_region
          %s498 = sand.u32 %s31, 1
          %s499 = scalar_lea.sflag [#allocation9], %s498
          %s500 = sand.u32 %s81, 1
          %s501 = smul.addr %s500, 8
          %s502 = scalar_lea.vmem [#allocation8], %s501
          %s504 = ssub.s32 128, 128
          %505 = vsyncadd %s499, %s504
          %s506 = smul.addr %s38, 2
          %s507 = smul.addr %s506, 64
          %s508 = scalar_lea.hbm %s1, %s507
          %s509 = sshll.u32 %s502, 4
          %s510 = int_to_ptr.vmem [resolvable:$true] %s509
          %515 = dma.hbm_to_vmem [thread:$0]  %s508, 128, %s510, %s499, 64, 64, 4
        $region72: #{tpu_custom_call.1} parent=63 // pred_fallthru
          _
      $region64: #{tpu_custom_call.1} parent=5 // pred_fallthru
        _
      %p516 = scmp.le.s32.totalorder 1, %s31
      %p517 = scmp.lt.s32.totalorder %s31, 3
      %p518 = pnand %p516, %p517
      %p519 = pneg %p518
      // Predicated region
      $region73: #{tpu_custom_call.1} parent=5 // pred_check
        _
      $region74: #{tpu_custom_call.1} parent=5 // pred_check_branch
        %521 = sbr.rel (%p518) target = $region76
      $region75: #{tpu_custom_call.1} parent=5 // pred_region
        %s522 = ssub.s32 %s31, 1
        %s523 = sand.u32 %s58, 1
        %s524 = scalar_lea.sflag [#allocation6], %s523
        %s525 = sand.u32 %s58, 1
        %s526 = smul.addr %s525, 16
        %s527 = scalar_lea.vmem [#allocation5], %s526
        // Predicated region
        $region77: #{tpu_custom_call.1} parent=75 // pred_check
          %p528 = pneg %p71
        $region78: #{tpu_custom_call.1} parent=75 // pred_check_branch
          %530 = sbr.rel (%p528) target = $region80
        $region79: #{tpu_custom_call.1} parent=75 // pred_region
          %531 = dma.done %s524, 256
        $region80: #{tpu_custom_call.1} parent=75 // pred_fallthru
          _
        %s532 = sand.u32 %s36, 1
        %s533 = scalar_lea.sflag [#allocation9], %s532
        %s534 = sand.u32 %s84, 1
        %s535 = smul.addr %s534, 8
        %s536 = scalar_lea.vmem [#allocation8], %s535
        // Predicated region
        $region81: #{tpu_custom_call.1} parent=75 // pred_check
          %p537 = pneg %p97
        $region82: #{tpu_custom_call.1} parent=75 // pred_check_branch
          %539 = sbr.rel (%p537) target = $region84
        $region83: #{tpu_custom_call.1} parent=75 // pred_region
          %540 = dma.done %s533, 128
        $region84: #{tpu_custom_call.1} parent=75 // pred_fallthru
          _
        // Predicated region
        $region85: #{tpu_custom_call.1} parent=75 // pred_check
          %p541 = pneg %p118
        $region86: #{tpu_custom_call.1} parent=75 // pred_check_branch
          %543 = sbr.rel (%p541) target = $region88
        $region87: #{tpu_custom_call.1} parent=75 // pred_region
          %544 = dma.done [#allocation9], 3072
        $region88: #{tpu_custom_call.1} parent=75 // pred_fallthru
          _
        // Predicated region
        $region89: #{tpu_custom_call.1} parent=75 // pred_check
          %p545 = pneg %p160
        $region90: #{tpu_custom_call.1} parent=75 // pred_check_branch
          %547 = sbr.rel (%p545) target = $region92
        $region91: #{tpu_custom_call.1} parent=75 // pred_region
          %548 = dma.done [#allocation12], 1024
        $region92: #{tpu_custom_call.1} parent=75 // pred_fallthru
          _
        // Predicated region
        $region93: #{tpu_custom_call.1} parent=75 // pred_check
          %p549 = pneg %p244
        $region94: #{tpu_custom_call.1} parent=75 // pred_check_branch
          %551 = sbr.rel (%p549) target = $region96
        $region95: #{tpu_custom_call.1} parent=75 // pred_region
          %552 = dma.done [#allocation12], 2048
        $region96: #{tpu_custom_call.1} parent=75 // pred_fallthru
          _
        // Predicated region
        $region97: #{tpu_custom_call.1} parent=75 // pred_check
          %p553 = pneg %p286
        $region98: #{tpu_custom_call.1} parent=75 // pred_check_branch
          %555 = sbr.rel (%p553) target = $region100
        $region99: #{tpu_custom_call.1} parent=75 // pred_region
          %556 = dma.done [#allocation15], 2048
        $region100: #{tpu_custom_call.1} parent=75 // pred_fallthru
          _
        %s557 = sand.u32 %s58, 1
        %s558 = scalar_lea.sflag [#allocation6], %s557
        %s559 = sand.u32 %s58, 1
        %s560 = smul.addr %s559, 16
        %s561 = scalar_lea.vmem [#allocation5], %s560
        %p562 = pneg %p71
        %p563 = pneg %p68
        %s564 = sand.u32 %s36, 1
        %s565 = scalar_lea.sflag [#allocation9], %s564
        %s566 = sand.u32 %s84, 1
        %s567 = smul.addr %s566, 8
        %s568 = scalar_lea.vmem [#allocation8], %s567
        %p569 = pneg %p97
        %p570 = pneg %p94
        %p571 = pneg %p118
        %p572 = pneg %p115
        %p573 = pneg %p139
        %p574 = pneg %p136
        %p575 = pneg %p160
        %p576 = pneg %p157
        %p577 = pneg %p181
        %p578 = pneg %p178
        %p579 = pneg %p202
        %p580 = pneg %p199
        %p581 = pneg %p223
        %p582 = pneg %p220
        %p583 = pneg %p244
        %p584 = pneg %p241
        %p585 = pneg %p265
        %p586 = pneg %p262
        %p587 = pneg %p286
        %p588 = pneg %p283
        %p589 = pneg %p307
        %p590 = pneg %p304
        %p591 = pneg %p328
        %p592 = pneg %p325
        %p593 = pneg %p349
        %p594 = pneg %p346
        %p595 = pneg %p377
        %p596 = pneg %p374
        %s597 = sand.u32 %s364, 1
        %s598 = scalar_lea.sflag [#allocation7], %s597
        %s599 = sand.u32 %s364, 1
        %s600 = smul.addr %s599, 16
        %s601 = scalar_lea.vmem [#allocation16], %s600
        %s602 = smul.u32 2, %s41
        %s603 = smul.u32 2, %s41
        %p605 = scmp.eq.s32.totalorder %s41, 0
        // Predicated region
        $region101: #{tpu_custom_call.1} parent=75 // pred_check
          %p606 = pneg %p605
        $region102: #{tpu_custom_call.1} parent=75 // pred_check_branch
          %608 = sbr.rel (%p606) target = $region104
        $region103: #{tpu_custom_call.1} parent=75 // pred_region
          %v609 = vld [vmem:[%s536] sm:$0xf]
          %v610 = vld [vmem:[%s536 + $0x4] sm:$0xf]
          %v611 = vld [vmem:[#allocation10] sm:$0xff]
          %v612 = vld [vmem:[#allocation10 + $0x8] sm:$0xf]
          %v613 = vld [vmem:[#allocation10 + $0xc] sm:$0xff]
          %v614 = vld [vmem:[#allocation10 + $0x14] sm:$0xf]
          %v615 = vld [vmem:[#allocation10 + $0x18] sm:$0xff]
          %v616 = vld [vmem:[#allocation10 + $0x20] sm:$0xf]
          %v617 = vld [vmem:[#allocation10 + $0x24] sm:$0xff]
          %v618 = vld [vmem:[#allocation10 + $0x2c] sm:$0xf]
          %v619 = vld [vmem:[#allocation10 + $0x30] sm:$0xff]
          %v620 = vld [vmem:[#allocation10 + $0x38] sm:$0xf]
          %v621 = vld [vmem:[#allocation10 + $0x3c] sm:$0xff]
          %v622 = vld [vmem:[#allocation10 + $0x44] sm:$0xf]
          %v623 = vld [vmem:[#allocation10 + $0x48] sm:$0xff]
          %v624 = vld [vmem:[#allocation10 + $0x50] sm:$0xf]
          %v625 = vld [vmem:[#allocation10 + $0x54] sm:$0xff]
          %v626 = vld [vmem:[#allocation10 + $0x5c] sm:$0xf]
          %v627 = vld [vmem:[#allocation10 + $0x60] sm:$0xff]
          %v628 = vld [vmem:[#allocation10 + $0x68] sm:$0xf]
          %v629 = vld [vmem:[#allocation10 + $0x6c] sm:$0xff]
          %v630 = vld [vmem:[#allocation10 + $0x74] sm:$0xf]
          %v631 = vld [vmem:[#allocation10 + $0x78] sm:$0xff]
          %v632 = vld [vmem:[#allocation10 + $0x80] sm:$0xf]
          %v633 = vld [vmem:[#allocation10 + $0x84] sm:$0xff]
          %v634 = vld [vmem:[#allocation10 + $0x8c] sm:$0xf]
          %v635 = vld [vmem:[#allocation10 + $0x90] sm:$0xff]
          %v636 = vld [vmem:[#allocation10 + $0x98] sm:$0xf]
          %v637 = vld [vmem:[#allocation10 + $0x9c] sm:$0xff]
          %v638 = vld [vmem:[#allocation10 + $0xa4] sm:$0xf]
          %v639 = vld [vmem:[#allocation10 + $0xa8] sm:$0xff]
          %v640 = vld [vmem:[#allocation10 + $0xb0] sm:$0xf]
          %v641 = vld [vmem:[#allocation10 + $0xb4] sm:$0xff]
          %v642 = vld [vmem:[#allocation10 + $0xbc] sm:$0xf]
          %v643 = vld [vmem:[%s3] sm:$0x7]
          %v645 = vlaneseq
          %v646 = vshrl.u32 %v645, 7
          %v647 = vsub.s32 0, %v646
          %v648 = vrot.slane %v643, %v647
          %v649 = vlaneseq
          %v650 = vshrl.u32 %v649, 7
          %v651 = vsub.s32 1, %v650
          %v652 = vrot.slane %v643, %v651
          %v653 = vlaneseq
          %v654 = vshrl.u32 %v653, 7
          %v655 = vsub.s32 2, %v654
          %v656 = vrot.slane %v643, %v655
          %v662 = vunpack.c.l.b16 %v609
          %v663 = vunpack.c.l.b16 %v610
          %v664 = vpack.c.b16 %v663, %v662
          %v698 = vunpack.c.l.b16 %v611
          %v699 = vunpack.c.h.b16 %v611
          %v700 = vunpack.c.l.b16 %v612
          %v701 = vunpack.c.l.b16 %v613
          %v702 = vunpack.c.h.b16 %v613
          %v703 = vunpack.c.l.b16 %v614
          %v704 = vunpack.c.l.b16 %v615
          %v705 = vunpack.c.h.b16 %v615
          %v706 = vunpack.c.l.b16 %v616
          %v707 = vunpack.c.l.b16 %v617
          %v708 = vunpack.c.h.b16 %v617
          %v709 = vunpack.c.l.b16 %v618
          %v710 = vunpack.c.l.b16 %v619
          %v711 = vunpack.c.h.b16 %v619
          %v712 = vunpack.c.l.b16 %v620
          %v713 = vunpack.c.l.b16 %v621
          %v714 = vunpack.c.h.b16 %v621
          %v715 = vunpack.c.l.b16 %v622
          %v716 = vunpack.c.l.b16 %v623
          %v717 = vunpack.c.h.b16 %v623
          %v718 = vunpack.c.l.b16 %v624
          %v719 = vunpack.c.l.b16 %v625
          %v720 = vunpack.c.h.b16 %v625
          %v721 = vunpack.c.l.b16 %v626
          %v722 = vunpack.c.l.b16 %v627
          %v723 = vunpack.c.h.b16 %v627
          %v724 = vunpack.c.l.b16 %v628
          %v725 = vunpack.c.l.b16 %v629
          %v726 = vunpack.c.h.b16 %v629
          %v727 = vunpack.c.l.b16 %v630
          %v728 = vunpack.c.l.b16 %v631
          %v729 = vunpack.c.h.b16 %v631
          %v730 = vunpack.c.l.b16 %v632
          %v731 = vunpack.c.l.b16 %v633
          %v732 = vunpack.c.h.b16 %v633
          %v733 = vunpack.c.l.b16 %v634
          %v734 = vunpack.c.l.b16 %v635
          %v735 = vunpack.c.h.b16 %v635
          %v736 = vunpack.c.l.b16 %v636
          %v737 = vunpack.c.l.b16 %v637
          %v738 = vunpack.c.h.b16 %v637
          %v739 = vunpack.c.l.b16 %v638
          %v740 = vunpack.c.l.b16 %v639
          %v741 = vunpack.c.h.b16 %v639
          %v742 = vunpack.c.l.b16 %v640
          %v743 = vunpack.c.l.b16 %v641
          %v744 = vunpack.c.h.b16 %v641
          %v745 = vunpack.c.l.b16 %v642
          %v746 = vpack.c.b16 %v701, %v698
          %v747 = vpack.c.b16 %v702, %v699
          %v748 = vpack.c.b16 %v703, %v700
          %v749 = vpack.c.b16 %v707, %v704
          %v750 = vpack.c.b16 %v708, %v705
          %v751 = vpack.c.b16 %v709, %v706
          %v752 = vpack.c.b16 %v713, %v710
          %v753 = vpack.c.b16 %v714, %v711
          %v754 = vpack.c.b16 %v715, %v712
          %v755 = vpack.c.b16 %v719, %v716
          %v756 = vpack.c.b16 %v720, %v717
          %v757 = vpack.c.b16 %v721, %v718
          %v758 = vpack.c.b16 %v725, %v722
          %v759 = vpack.c.b16 %v726, %v723
          %v760 = vpack.c.b16 %v727, %v724
          %v761 = vpack.c.b16 %v731, %v728
          %v762 = vpack.c.b16 %v732, %v729
          %v763 = vpack.c.b16 %v733, %v730
          %v764 = vpack.c.b16 %v737, %v734
          %v765 = vpack.c.b16 %v738, %v735
          %v766 = vpack.c.b16 %v739, %v736
          %v767 = vpack.c.b16 %v743, %v740
          %v768 = vpack.c.b16 %v744, %v741
          %v769 = vpack.c.b16 %v745, %v742
          %794 = vmatprep.subr.bf16.mxu0 %v747
          %795 = vmatpush1.bf16.msra.mxu0 %v746
          %796 = vmatprep.subr.bf16.mxu0 %v750
          %797 = vmatpush1.bf16.msra.mxu0 %v749
          %798 = vmatprep.subr.bf16.mxu0 %v753
          %799 = vmatpush1.bf16.msra.mxu0 %v752
          %800 = vmatprep.subr.bf16.mxu0 %v756
          %801 = vmatpush1.bf16.msra.mxu0 %v755
          %802 = vmatprep.subr.bf16.mxu0 %v759
          %803 = vmatpush1.bf16.msra.mxu0 %v758
          %804 = vmatprep.subr.bf16.mxu0 %v762
          %805 = vmatpush1.bf16.msra.mxu0 %v761
          %806 = vmatprep.subr.bf16.mxu0 %v765
          %807 = vmatpush1.bf16.msra.mxu0 %v764
          %808 = vmatprep.subr.bf16.mxu0 %v768
          %809 = vmatpush1.bf16.msra.mxu0 %v767
          %810 = vmatprep.subr.bf16.mxu0 0
          %811 = vmatpush1.bf16.msra.mxu0 0
          %812 = vmatprep.subr.bf16.mxu0 0
          %813 = vmatpush1.bf16.msra.mxu0 0
          %814 = vmatprep.subr.bf16.mxu0 0
          %815 = vmatpush1.bf16.msra.mxu0 0
          %816 = vmatprep.subr.bf16.mxu0 0
          %817 = vmatpush1.bf16.msra.mxu0 0
          %818 = vmatprep.subr.bf16.mxu0 0
          %819 = vmatpush1.bf16.msra.mxu0 0
          %820 = vmatprep.subr.bf16.mxu0 0
          %821 = vmatpush1.bf16.msra.mxu0 0
          %822 = vmatprep.subr.bf16.mxu0 0
          %823 = vmatpush1.bf16.msra.mxu0 0
          %824 = vmatprep.subr.bf16.mxu0 0
          %825 = vmatpush1.bf16.msra.mxu0 0
          %826 = vmatprep.mubr.bf16.mxu0 0
          %827 = vmatmul.mubr.bf16.gmra.mrb[0].mxu0 %v664
          %v828 = vpop.f32.mrb[0].mxu0
          %v829 = vadd.f32 %v648, %v828
          %v830 = vpop.f32.mrb[0].mxu0
          %v831 = vadd.f32 %v652, %v830
          %v832 = vpop.f32.mrb[0].mxu0
          %v833 = vadd.f32 %v648, %v832
          %v834 = vpop.f32.mrb[0].mxu0
          %v835 = vadd.f32 %v652, %v834
          %836 = vdwg.mxu0
          %837 = vmatprep.subr.bf16.mxu0 0
          %838 = vmatpush1.bf16.msra.mxu0 %v748
          %839 = vmatprep.subr.bf16.mxu0 0
          %840 = vmatpush1.bf16.msra.mxu0 %v751
          %841 = vmatprep.subr.bf16.mxu0 0
          %842 = vmatpush1.bf16.msra.mxu0 %v754
          %843 = vmatprep.subr.bf16.mxu0 0
          %844 = vmatpush1.bf16.msra.mxu0 %v757
          %845 = vmatprep.subr.bf16.mxu0 0
          %846 = vmatpush1.bf16.msra.mxu0 %v760
          %847 = vmatprep.subr.bf16.mxu0 0
          %848 = vmatpush1.bf16.msra.mxu0 %v763
          %849 = vmatprep.subr.bf16.mxu0 0
          %850 = vmatpush1.bf16.msra.mxu0 %v766
          %851 = vmatprep.subr.bf16.mxu0 0
          %852 = vmatpush1.bf16.msra.mxu0 %v769
          %853 = vmatprep.subr.bf16.mxu0 0
          %854 = vmatpush1.bf16.msra.mxu0 0
          %855 = vmatprep.subr.bf16.mxu0 0
          %856 = vmatpush1.bf16.msra.mxu0 0
          %857 = vmatprep.subr.bf16.mxu0 0
          %858 = vmatpush1.bf16.msra.mxu0 0
          %859 = vmatprep.subr.bf16.mxu0 0
          %860 = vmatpush1.bf16.msra.mxu0 0
          %861 = vmatprep.subr.bf16.mxu0 0
          %862 = vmatpush1.bf16.msra.mxu0 0
          %863 = vmatprep.subr.bf16.mxu0 0
          %864 = vmatpush1.bf16.msra.mxu0 0
          %865 = vmatprep.subr.bf16.mxu0 0
          %866 = vmatpush1.bf16.msra.mxu0 0
          %867 = vmatprep.subr.bf16.mxu0 0
          %868 = vmatpush1.bf16.msra.mxu0 0
          %869 = vmatprep.mubr.bf16.mxu0 0
          %870 = vmatmul.mubr.bf16.gmra.mrb[0].mxu0 %v664
          %v871 = vpop.f32.mrb[0].mxu0
          %v872 = vadd.f32 %v656, %v871
          %v873 = vpop.f32.mrb[0].mxu0
          %v874 = vpop.f32.mrb[0].mxu0
          %v875 = vadd.f32 %v656, %v874
          %v876 = vpop.f32.mrb[0].mxu0
          %877 = vdwg.mxu0
          %v878 = vmul.f32 %v829, 0.17677669
          %v879 = vmul.f32 %v833, 0.17677669
          %v880 = vpack.c.bf16 %v879, %v878
          %881 = vst [vmem:[#allocation2] sm:$0xff] %v880
          %v882 = vpack.c.bf16 %v835, %v831
          %v883 = vpack.c.bf16 %v875, %v872
          %884 = vst [vmem:[#allocation3] sm:$0xff] %v882
          %885 = vst [vmem:[#allocation3 + $0x8] sm:$0xff] %v883
        $region104: #{tpu_custom_call.1} parent=75 // pred_fallthru
          _
        %v886 = vld [vmem:[%s527] sm:$0xff]
        %v887 = vld [vmem:[%s527 + $0x8] sm:$0xff]
        %s888 = smul.u32 %s41, 16
        %s889 = sshra.s32 %s888, 4
        %s890 = sand.u32 %s888, 15
        %s891 = smul.addr %s889, 8
        %s892 = scalar_lea.vmem [#allocation2], %s891
        %v893 = vld [vmem:[%s892] sm:$0xff]
        %v894 = vld [vmem:[#allocation3] sm:$0xff]
        %v895 = vld [vmem:[#allocation3 + $0x8] sm:$0xff]
        %vm896 = vcmask 261120
        %v898 = vsel %vm896, %v893, 0
        %v901 = vsel %vm896, %v894, 0
        %903 = vmatprep.subr.bf16.mxu0 0
        %904 = vmatpush1.bf16.xpose.msra.mxu0 %v901
        %905 = vmatprep.subr.bf16.mxu0 0
        %906 = vmatpush1.bf16.xpose.msra.mxu0 0
        %907 = vmatprep.subr.bf16.mxu0 0
        %908 = vmatpush1.bf16.xpose.msra.mxu0 0
        %909 = vmatprep.subr.bf16.mxu0 0
        %910 = vmatpush1.bf16.xpose.msra.mxu0 0
        %911 = vmatprep.subr.bf16.mxu0 0
        %912 = vmatpush1.bf16.xpose.msra.mxu0 0
        %913 = vmatprep.subr.bf16.mxu0 0
        %914 = vmatpush1.bf16.xpose.msra.mxu0 0
        %915 = vmatprep.subr.bf16.mxu0 0
        %916 = vmatpush1.bf16.xpose.msra.mxu0 0
        %917 = vmatprep.subr.bf16.mxu0 0
        %918 = vmatpush1.bf16.xpose.msra.mxu0 0
        %919 = vmatprep.subr.bf16.mxu0 0
        %920 = vmatpush1.bf16.xpose.msra.mxu0 0
        %921 = vmatprep.subr.bf16.mxu0 0
        %922 = vmatpush1.bf16.xpose.msra.mxu0 0
        %923 = vmatprep.subr.bf16.mxu0 0
        %924 = vmatpush1.bf16.xpose.msra.mxu0 0
        %925 = vmatprep.subr.bf16.mxu0 0
        %926 = vmatpush1.bf16.xpose.msra.mxu0 0
        %927 = vmatprep.subr.bf16.mxu0 0
        %928 = vmatpush1.bf16.xpose.msra.mxu0 0
        %929 = vmatprep.subr.bf16.mxu0 0
        %930 = vmatpush1.bf16.xpose.msra.mxu0 0
        %931 = vmatprep.subr.bf16.mxu0 0
        %932 = vmatpush1.bf16.xpose.msra.mxu0 0
        %933 = vmatprep.subr.bf16.mxu0 0
        %934 = vmatpush1.bf16.xpose.msra.mxu0 0
        %935 = vmatprep.mubr.bf16.mxu0 0
        %936 = vmatmul.mubr.bf16.gmra.mrb[0].mxu0 %v898
        %v937 = vpop.f32.mrb[0].mxu0
        %v938 = vadd.f32 0.0, %v937
        %v939 = vpop.f32.mrb[0].mxu0
        %v940 = vpop.f32.mrb[0].mxu0
        %v941 = vadd.f32 0.0, %v940
        %v942 = vpop.f32.mrb[0].mxu0
        %943 = vdwg.mxu0
        %vm944 = vcmask 130048
        %v945 = vsel %vm944, %v938, -inf
        %946 = vmax.xlane.f32.xlu0 %v945
        %v947 = vpop.xlane.xlu0 %946
        %v948 = vsel %vm944, %v941, -inf
        %949 = vmax.xlane.f32.xlu0 %v948
        %v950 = vpop.xlane.xlu0 %949
        %v951 = vsub.f32 %v938, %v947
        %v952 = vsub.f32 %v941, %v950
        %v953 = vmul.f32 %v951, 1.442695
        %v954 = vpow.pop %v953
        %v955 = vmul.f32 %v952, 1.442695
        %v956 = vpow.pop %v955
        %v957 = vsel %vm944, %v954, 0.0
        %958 = vadd.xlane.f32.xlu0 %v957
        %v959 = vpop.xlane.xlu0 %958
        %v960 = vsel %vm944, %v956, 0.0
        %961 = vadd.xlane.f32.xlu0 %v960
        %v962 = vpop.xlane.xlu0 %961
        %v963 = vpack.c.bf16 %v956, %v954
        %v965 = vsel %vm944, %v963, 0
        %967 = vmatprep.subr.bf16.mxu0 0
        %968 = vmatpush1.bf16.msra.mxu0 %v895
        %969 = vmatprep.subr.bf16.mxu0 0
        %970 = vmatpush1.bf16.msra.mxu0 0
        %971 = vmatprep.subr.bf16.mxu0 0
        %972 = vmatpush1.bf16.msra.mxu0 0
        %973 = vmatprep.subr.bf16.mxu0 0
        %974 = vmatpush1.bf16.msra.mxu0 0
        %975 = vmatprep.subr.bf16.mxu0 0
        %976 = vmatpush1.bf16.msra.mxu0 0
        %977 = vmatprep.subr.bf16.mxu0 0
        %978 = vmatpush1.bf16.msra.mxu0 0
        %979 = vmatprep.subr.bf16.mxu0 0
        %980 = vmatpush1.bf16.msra.mxu0 0
        %981 = vmatprep.subr.bf16.mxu0 0
        %982 = vmatpush1.bf16.msra.mxu0 0
        %983 = vmatprep.subr.bf16.mxu0 0
        %984 = vmatpush1.bf16.msra.mxu0 0
        %985 = vmatprep.subr.bf16.mxu0 0
        %986 = vmatpush1.bf16.msra.mxu0 0
        %987 = vmatprep.subr.bf16.mxu0 0
        %988 = vmatpush1.bf16.msra.mxu0 0
        %989 = vmatprep.subr.bf16.mxu0 0
        %990 = vmatpush1.bf16.msra.mxu0 0
        %991 = vmatprep.subr.bf16.mxu0 0
        %992 = vmatpush1.bf16.msra.mxu0 0
        %993 = vmatprep.subr.bf16.mxu0 0
        %994 = vmatpush1.bf16.msra.mxu0 0
        %995 = vmatprep.subr.bf16.mxu0 0
        %996 = vmatpush1.bf16.msra.mxu0 0
        %997 = vmatprep.subr.bf16.mxu0 0
        %998 = vmatpush1.bf16.msra.mxu0 0
        %999 = vmatprep.mubr.bf16.mxu0 0
        %1000 = vmatmul.mubr.bf16.gmra.mrb[0].mxu0 %v965
        %v1001 = vpop.f32.mrb[0].mxu0
        %v1002 = vadd.f32 0.0, %v1001
        %v1003 = vpop.f32.mrb[0].mxu0
        %v1004 = vpop.f32.mrb[0].mxu0
        %v1005 = vadd.f32 0.0, %v1004
        %v1006 = vpop.f32.mrb[0].mxu0
        %1007 = vdwg.mxu0
        %v1008 = vrcp.pop %v959
        %v1009 = vrcp.pop %v962
        %v1010 = vmul.f32 %v1002, %v1008
        %v1011 = vmul.f32 %v1005, %v1009
        %v1012 = vpack.c.bf16 %v1011, %v1010
        %1013 = vst.msk [vmem:[#allocation4] sm:$0xff] %vm896, %v1012
        %v1014 = vld [vmem:[#allocation3] sm:$0xff]
        %v1015 = vld [vmem:[#allocation3 + $0x8] sm:$0xff]
        %1017 = vrot.lane.b32.xlu0 %v893, 96
        %v1018 = vpop.permute.xlu0 %1017
        %1020 = vrot.lane.b32.xlu0 %v1014, 96
        %v1021 = vpop.permute.xlu0 %1020
        %v1023 = vsel %vm896, %v1018, 0
        %v1026 = vsel %vm896, %v1021, 0
        %1028 = vmatprep.subr.bf16.mxu0 0
        %1029 = vmatpush1.bf16.xpose.msra.mxu0 %v1026
        %1030 = vmatprep.subr.bf16.mxu0 0
        %1031 = vmatpush1.bf16.xpose.msra.mxu0 0
        %1032 = vmatprep.subr.bf16.mxu0 0
        %1033 = vmatpush1.bf16.xpose.msra.mxu0 0
        %1034 = vmatprep.subr.bf16.mxu0 0
        %1035 = vmatpush1.bf16.xpose.msra.mxu0 0
        %1036 = vmatprep.subr.bf16.mxu0 0
        %1037 = vmatpush1.bf16.xpose.msra.mxu0 0
        %1038 = vmatprep.subr.bf16.mxu0 0
        %1039 = vmatpush1.bf16.xpose.msra.mxu0 0
        %1040 = vmatprep.subr.bf16.mxu0 0
        %1041 = vmatpush1.bf16.xpose.msra.mxu0 0
        %1042 = vmatprep.subr.bf16.mxu0 0
        %1043 = vmatpush1.bf16.xpose.msra.mxu0 0
        %1044 = vmatprep.subr.bf16.mxu0 0
        %1045 = vmatpush1.bf16.xpose.msra.mxu0 0
        %1046 = vmatprep.subr.bf16.mxu0 0
        %1047 = vmatpush1.bf16.xpose.msra.mxu0 0
        %1048 = vmatprep.subr.bf16.mxu0 0
        %1049 = vmatpush1.bf16.xpose.msra.mxu0 0
        %1050 = vmatprep.subr.bf16.mxu0 0
        %1051 = vmatpush1.bf16.xpose.msra.mxu0 0
        %1052 = vmatprep.subr.bf16.mxu0 0
        %1053 = vmatpush1.bf16.xpose.msra.mxu0 0
        %1054 = vmatprep.subr.bf16.mxu0 0
        %1055 = vmatpush1.bf16.xpose.msra.mxu0 0
        %1056 = vmatprep.subr.bf16.mxu0 0
        %1057 = vmatpush1.bf16.xpose.msra.mxu0 0
        %1058 = vmatprep.subr.bf16.mxu0 0
        %1059 = vmatpush1.bf16.xpose.msra.mxu0 0
        %1060 = vmatprep.mubr.bf16.mxu0 0
        %1061 = vmatmul.mubr.bf16.gmra.mrb[0].mxu0 %v1023
        %v1062 = vpop.f32.mrb[0].mxu0
        %v1063 = vadd.f32 0.0, %v1062
        %v1064 = vpop.f32.mrb[0].mxu0
        %v1065 = vpop.f32.mrb[0].mxu0
        %v1066 = vadd.f32 0.0, %v1065
        %v1067 = vpop.f32.mrb[0].mxu0
        %1068 = vdwg.mxu0
        %v1069 = vsel %vm944, %v1063, -inf
        %1070 = vmax.xlane.f32.xlu0 %v1069
        %v1071 = vpop.xlane.xlu0 %1070
        %v1072 = vsel %vm944, %v1066, -inf
        %1073 = vmax.xlane.f32.xlu0 %v1072
        %v1074 = vpop.xlane.xlu0 %1073
        %v1075 = vsub.f32 %v1063, %v1071
        %v1076 = vsub.f32 %v1066, %v1074
        %v1077 = vmul.f32 %v1075, 1.442695
        %v1078 = vpow.pop %v1077
        %v1079 = vmul.f32 %v1076, 1.442695
        %v1080 = vpow.pop %v1079
        %v1081 = vsel %vm944, %v1078, 0.0
        %1082 = vadd.xlane.f32.xlu0 %v1081
        %v1083 = vpop.xlane.xlu0 %1082
        %v1084 = vsel %vm944, %v1080, 0.0
        %1085 = vadd.xlane.f32.xlu0 %v1084
        %v1086 = vpop.xlane.xlu0 %1085
        %v1087 = vpack.c.bf16 %v1080, %v1078
        %1089 = vrot.lane.b32.xlu0 %v1015, 96
        %v1090 = vpop.permute.xlu0 %1089
        %v1093 = vsel %vm944, %v1087, 0
        %1095 = vmatprep.subr.bf16.mxu0 0
        %1096 = vmatpush1.bf16.msra.mxu0 %v1090
        %1097 = vmatprep.subr.bf16.mxu0 0
        %1098 = vmatpush1.bf16.msra.mxu0 0
        %1099 = vmatprep.subr.bf16.mxu0 0
        %1100 = vmatpush1.bf16.msra.mxu0 0
        %1101 = vmatprep.subr.bf16.mxu0 0
        %1102 = vmatpush1.bf16.msra.mxu0 0
        %1103 = vmatprep.subr.bf16.mxu0 0
        %1104 = vmatpush1.bf16.msra.mxu0 0
        %1105 = vmatprep.subr.bf16.mxu0 0
        %1106 = vmatpush1.bf16.msra.mxu0 0
        %1107 = vmatprep.subr.bf16.mxu0 0
        %1108 = vmatpush1.bf16.msra.mxu0 0
        %1109 = vmatprep.subr.bf16.mxu0 0
        %1110 = vmatpush1.bf16.msra.mxu0 0
        %1111 = vmatprep.subr.bf16.mxu0 0
        %1112 = vmatpush1.bf16.msra.mxu0 0
        %1113 = vmatprep.subr.bf16.mxu0 0
        %1114 = vmatpush1.bf16.msra.mxu0 0
        %1115 = vmatprep.subr.bf16.mxu0 0
        %1116 = vmatpush1.bf16.msra.mxu0 0
        %1117 = vmatprep.subr.bf16.mxu0 0
        %1118 = vmatpush1.bf16.msra.mxu0 0
        %1119 = vmatprep.subr.bf16.mxu0 0
        %1120 = vmatpush1.bf16.msra.mxu0 0
        %1121 = vmatprep.subr.bf16.mxu0 0
        %1122 = vmatpush1.bf16.msra.mxu0 0
        %1123 = vmatprep.subr.bf16.mxu0 0
        %1124 = vmatpush1.bf16.msra.mxu0 0
        %1125 = vmatprep.subr.bf16.mxu0 0
        %1126 = vmatpush1.bf16.msra.mxu0 0
        %1127 = vmatprep.mubr.bf16.mxu0 0
        %1128 = vmatmul.mubr.bf16.gmra.mrb[0].mxu0 %v1093
        %v1129 = vpop.f32.mrb[0].mxu0
        %v1130 = vadd.f32 0.0, %v1129
        %v1131 = vpop.f32.mrb[0].mxu0
        %v1132 = vpop.f32.mrb[0].mxu0
        %v1133 = vadd.f32 0.0, %v1132
        %v1134 = vpop.f32.mrb[0].mxu0
        %1135 = vdwg.mxu0
        %v1136 = vrcp.pop %v1083
        %v1137 = vrcp.pop %v1086
        %v1138 = vmul.f32 %v1130, %v1136
        %v1139 = vmul.f32 %v1133, %v1137
        %v1140 = vpack.c.bf16 %v1139, %v1138
        %1142 = vrot.lane.b32.xlu0 %v1140, 32
        %v1143 = vpop.permute.xlu0 %1142
        %vm1145 = vcmask 523520
        %1146 = vst.msk [vmem:[#allocation4] sm:$0xff] %vm1145, %v1143
        %v1147 = vld [vmem:[#allocation3] sm:$0xff]
        %v1148 = vld [vmem:[#allocation3 + $0x8] sm:$0xff]
        %1149 = vrot.lane.b32.xlu0 %v893, 64
        %v1150 = vpop.permute.xlu0 %1149
        %1152 = vrot.lane.b32.xlu0 %v1147, 64
        %v1153 = vpop.permute.xlu0 %1152
        %v1155 = vsel %vm896, %v1150, 0
        %v1158 = vsel %vm896, %v1153, 0
        %1160 = vmatprep.subr.bf16.mxu0 0
        %1161 = vmatpush1.bf16.xpose.msra.mxu0 %v1158
        %1162 = vmatprep.subr.bf16.mxu0 0
        %1163 = vmatpush1.bf16.xpose.msra.mxu0 0
        %1164 = vmatprep.subr.bf16.mxu0 0
        %1165 = vmatpush1.bf16.xpose.msra.mxu0 0
        %1166 = vmatprep.subr.bf16.mxu0 0
        %1167 = vmatpush1.bf16.xpose.msra.mxu0 0
        %1168 = vmatprep.subr.bf16.mxu0 0
        %1169 = vmatpush1.bf16.xpose.msra.mxu0 0
        %1170 = vmatprep.subr.bf16.mxu0 0
        %1171 = vmatpush1.bf16.xpose.msra.mxu0 0
        %1172 = vmatprep.subr.bf16.mxu0 0
        %1173 = vmatpush1.bf16.xpose.msra.mxu0 0
        %1174 = vmatprep.subr.bf16.mxu0 0
        %1175 = vmatpush1.bf16.xpose.msra.mxu0 0
        %1176 = vmatprep.subr.bf16.mxu0 0
        %1177 = vmatpush1.bf16.xpose.msra.mxu0 0
        %1178 = vmatprep.subr.bf16.mxu0 0
        %1179 = vmatpush1.bf16.xpose.msra.mxu0 0
        %1180 = vmatprep.subr.bf16.mxu0 0
        %1181 = vmatpush1.bf16.xpose.msra.mxu0 0
        %1182 = vmatprep.subr.bf16.mxu0 0
        %1183 = vmatpush1.bf16.xpose.msra.mxu0 0
        %1184 = vmatprep.subr.bf16.mxu0 0
        %1185 = vmatpush1.bf16.xpose.msra.mxu0 0
        %1186 = vmatprep.subr.bf16.mxu0 0
        %1187 = vmatpush1.bf16.xpose.msra.mxu0 0
        %1188 = vmatprep.subr.bf16.mxu0 0
        %1189 = vmatpush1.bf16.xpose.msra.mxu0 0
        %1190 = vmatprep.subr.bf16.mxu0 0
        %1191 = vmatpush1.bf16.xpose.msra.mxu0 0
        %1192 = vmatprep.mubr.bf16.mxu0 0
        %1193 = vmatmul.mubr.bf16.gmra.mrb[0].mxu0 %v1155
        %v1194 = vpop.f32.mrb[0].mxu0
        %v1195 = vadd.f32 0.0, %v1194
        %v1196 = vpop.f32.mrb[0].mxu0
        %v1197 = vpop.f32.mrb[0].mxu0
        %v1198 = vadd.f32 0.0, %v1197
        %v1199 = vpop.f32.mrb[0].mxu0
        %1200 = vdwg.mxu0
        %v1201 = vsel %vm944, %v1195, -inf
        %1202 = vmax.xlane.f32.xlu0 %v1201
        %v1203 = vpop.xlane.xlu0 %1202
        %v1204 = vsel %vm944, %v1198, -inf
        %1205 = vmax.xlane.f32.xlu0 %v1204
        %v1206 = vpop.xlane.xlu0 %1205
        %v1207 = vsub.f32 %v1195, %v1203
        %v1208 = vsub.f32 %v1198, %v1206
        %v1209 = vmul.f32 %v1207, 1.442695
        %v1210 = vpow.pop %v1209
        %v1211 = vmul.f32 %v1208, 1.442695
        %v1212 = vpow.pop %v1211
        %v1213 = vsel %vm944, %v1210, 0.0
        %1214 = vadd.xlane.f32.xlu0 %v1213
        %v1215 = vpop.xlane.xlu0 %1214
        %v1216 = vsel %vm944, %v1212, 0.0
        %1217 = vadd.xlane.f32.xlu0 %v1216
        %v1218 = vpop.xlane.xlu0 %1217
        %v1219 = vpack.c.bf16 %v1212, %v1210
        %1221 = vrot.lane.b32.xlu0 %v1148, 64
        %v1222 = vpop.permute.xlu0 %1221
        %v1225 = vsel %vm944, %v1219, 0
        %1227 = vmatprep.subr.bf16.mxu0 0
        %1228 = vmatpush1.bf16.msra.mxu0 %v1222
        %1229 = vmatprep.subr.bf16.mxu0 0
        %1230 = vmatpush1.bf16.msra.mxu0 0
        %1231 = vmatprep.subr.bf16.mxu0 0
        %1232 = vmatpush1.bf16.msra.mxu0 0
        %1233 = vmatprep.subr.bf16.mxu0 0
        %1234 = vmatpush1.bf16.msra.mxu0 0
        %1235 = vmatprep.subr.bf16.mxu0 0
        %1236 = vmatpush1.bf16.msra.mxu0 0
        %1237 = vmatprep.subr.bf16.mxu0 0
        %1238 = vmatpush1.bf16.msra.mxu0 0
        %1239 = vmatprep.subr.bf16.mxu0 0
        %1240 = vmatpush1.bf16.msra.mxu0 0
        %1241 = vmatprep.subr.bf16.mxu0 0
        %1242 = vmatpush1.bf16.msra.mxu0 0
        %1243 = vmatprep.subr.bf16.mxu0 0
        %1244 = vmatpush1.bf16.msra.mxu0 0
        %1245 = vmatprep.subr.bf16.mxu0 0
        %1246 = vmatpush1.bf16.msra.mxu0 0
        %1247 = vmatprep.subr.bf16.mxu0 0
        %1248 = vmatpush1.bf16.msra.mxu0 0
        %1249 = vmatprep.subr.bf16.mxu0 0
        %1250 = vmatpush1.bf16.msra.mxu0 0
        %1251 = vmatprep.subr.bf16.mxu0 0
        %1252 = vmatpush1.bf16.msra.mxu0 0
        %1253 = vmatprep.subr.bf16.mxu0 0
        %1254 = vmatpush1.bf16.msra.mxu0 0
        %1255 = vmatprep.subr.bf16.mxu0 0
        %1256 = vmatpush1.bf16.msra.mxu0 0
        %1257 = vmatprep.subr.bf16.mxu0 0
        %1258 = vmatpush1.bf16.msra.mxu0 0
        %1259 = vmatprep.mubr.bf16.mxu0 0
        %1260 = vmatmul.mubr.bf16.gmra.mrb[0].mxu0 %v1225
        %v1261 = vpop.f32.mrb[0].mxu0
        %v1262 = vadd.f32 0.0, %v1261
        %v1263 = vpop.f32.mrb[0].mxu0
        %v1264 = vpop.f32.mrb[0].mxu0
        %v1265 = vadd.f32 0.0, %v1264
        %v1266 = vpop.f32.mrb[0].mxu0
        %1267 = vdwg.mxu0
        %v1268 = vrcp.pop %v1215
        %v1269 = vrcp.pop %v1218
        %v1270 = vmul.f32 %v1262, %v1268
        %v1271 = vmul.f32 %v1265, %v1269
        %v1272 = vpack.c.bf16 %v1271, %v1270
        %1274 = vrot.lane.b32.xlu0 %v1272, 64
        %v1275 = vpop.permute.xlu0 %1274
        %vm1277 = vcmask 785920
        %1278 = vst.msk [vmem:[#allocation4] sm:$0xff] %vm1277, %v1275
        %v1279 = vld [vmem:[#allocation3] sm:$0xff]
        %v1280 = vld [vmem:[#allocation3 + $0x8] sm:$0xff]
        %1281 = vrot.lane.b32.xlu0 %v893, 32
        %v1282 = vpop.permute.xlu0 %1281
        %1284 = vrot.lane.b32.xlu0 %v1279, 32
        %v1285 = vpop.permute.xlu0 %1284
        %v1287 = vsel %vm896, %v1282, 0
        %v1290 = vsel %vm896, %v1285, 0
        %1292 = vmatprep.subr.bf16.mxu0 0
        %1293 = vmatpush1.bf16.xpose.msra.mxu0 %v1290
        %1294 = vmatprep.subr.bf16.mxu0 0
        %1295 = vmatpush1.bf16.xpose.msra.mxu0 0
        %1296 = vmatprep.subr.bf16.mxu0 0
        %1297 = vmatpush1.bf16.xpose.msra.mxu0 0
        %1298 = vmatprep.subr.bf16.mxu0 0
        %1299 = vmatpush1.bf16.xpose.msra.mxu0 0
        %1300 = vmatprep.subr.bf16.mxu0 0
        %1301 = vmatpush1.bf16.xpose.msra.mxu0 0
        %1302 = vmatprep.subr.bf16.mxu0 0
        %1303 = vmatpush1.bf16.xpose.msra.mxu0 0
        %1304 = vmatprep.subr.bf16.mxu0 0
        %1305 = vmatpush1.bf16.xpose.msra.mxu0 0
        %1306 = vmatprep.subr.bf16.mxu0 0
        %1307 = vmatpush1.bf16.xpose.msra.mxu0 0
        %1308 = vmatprep.subr.bf16.mxu0 0
        %1309 = vmatpush1.bf16.xpose.msra.mxu0 0
        %1310 = vmatprep.subr.bf16.mxu0 0
        %1311 = vmatpush1.bf16.xpose.msra.mxu0 0
        %1312 = vmatprep.subr.bf16.mxu0 0
        %1313 = vmatpush1.bf16.xpose.msra.mxu0 0
        %1314 = vmatprep.subr.bf16.mxu0 0
        %1315 = vmatpush1.bf16.xpose.msra.mxu0 0
        %1316 = vmatprep.subr.bf16.mxu0 0
        %1317 = vmatpush1.bf16.xpose.msra.mxu0 0
        %1318 = vmatprep.subr.bf16.mxu0 0
        %1319 = vmatpush1.bf16.xpose.msra.mxu0 0
        %1320 = vmatprep.subr.bf16.mxu0 0
        %1321 = vmatpush1.bf16.xpose.msra.mxu0 0
        %1322 = vmatprep.subr.bf16.mxu0 0
        %1323 = vmatpush1.bf16.xpose.msra.mxu0 0
        %1324 = vmatprep.mubr.bf16.mxu0 0
        %1325 = vmatmul.mubr.bf16.gmra.mrb[0].mxu0 %v1287
        %v1326 = vpop.f32.mrb[0].mxu0
        %v1327 = vadd.f32 0.0, %v1326
        %v1328 = vpop.f32.mrb[0].mxu0
        %v1329 = vpop.f32.mrb[0].mxu0
        %v1330 = vadd.f32 0.0, %v1329
        %v1331 = vpop.f32.mrb[0].mxu0
        %1332 = vdwg.mxu0
        %v1333 = vsel %vm944, %v1327, -inf
        %1334 = vmax.xlane.f32.xlu0 %v1333
        %v1335 = vpop.xlane.xlu0 %1334
        %v1336 = vsel %vm944, %v1330, -inf
        %1337 = vmax.xlane.f32.xlu0 %v1336
        %v1338 = vpop.xlane.xlu0 %1337
        %v1339 = vsub.f32 %v1327, %v1335
        %v1340 = vsub.f32 %v1330, %v1338
        %v1341 = vmul.f32 %v1339, 1.442695
        %v1342 = vpow.pop %v1341
        %v1343 = vmul.f32 %v1340, 1.442695
        %v1344 = vpow.pop %v1343
        %v1345 = vsel %vm944, %v1342, 0.0
        %1346 = vadd.xlane.f32.xlu0 %v1345
        %v1347 = vpop.xlane.xlu0 %1346
        %v1348 = vsel %vm944, %v1344, 0.0
        %1349 = vadd.xlane.f32.xlu0 %v1348
        %v1350 = vpop.xlane.xlu0 %1349
        %v1351 = vpack.c.bf16 %v1344, %v1342
        %1353 = vrot.lane.b32.xlu0 %v1280, 32
        %v1354 = vpop.permute.xlu0 %1353
        %v1357 = vsel %vm944, %v1351, 0
        %1359 = vmatprep.subr.bf16.mxu0 0
        %1360 = vmatpush1.bf16.msra.mxu0 %v1354
        %1361 = vmatprep.subr.bf16.mxu0 0
        %1362 = vmatpush1.bf16.msra.mxu0 0
        %1363 = vmatprep.subr.bf16.mxu0 0
        %1364 = vmatpush1.bf16.msra.mxu0 0
        %1365 = vmatprep.subr.bf16.mxu0 0
        %1366 = vmatpush1.bf16.msra.mxu0 0
        %1367 = vmatprep.subr.bf16.mxu0 0
        %1368 = vmatpush1.bf16.msra.mxu0 0
        %1369 = vmatprep.subr.bf16.mxu0 0
        %1370 = vmatpush1.bf16.msra.mxu0 0
        %1371 = vmatprep.subr.bf16.mxu0 0
        %1372 = vmatpush1.bf16.msra.mxu0 0
        %1373 = vmatprep.subr.bf16.mxu0 0
        %1374 = vmatpush1.bf16.msra.mxu0 0
        %1375 = vmatprep.subr.bf16.mxu0 0
        %1376 = vmatpush1.bf16.msra.mxu0 0
        %1377 = vmatprep.subr.bf16.mxu0 0
        %1378 = vmatpush1.bf16.msra.mxu0 0
        %1379 = vmatprep.subr.bf16.mxu0 0
        %1380 = vmatpush1.bf16.msra.mxu0 0
        %1381 = vmatprep.subr.bf16.mxu0 0
        %1382 = vmatpush1.bf16.msra.mxu0 0
        %1383 = vmatprep.subr.bf16.mxu0 0
        %1384 = vmatpush1.bf16.msra.mxu0 0
        %1385 = vmatprep.subr.bf16.mxu0 0
        %1386 = vmatpush1.bf16.msra.mxu0 0
        %1387 = vmatprep.subr.bf16.mxu0 0
        %1388 = vmatpush1.bf16.msra.mxu0 0
        %1389 = vmatprep.subr.bf16.mxu0 0
        %1390 = vmatpush1.bf16.msra.mxu0 0
        %1391 = vmatprep.mubr.bf16.mxu0 0
        %1392 = vmatmul.mubr.bf16.gmra.mrb[0].mxu0 %v1357
        %v1393 = vpop.f32.mrb[0].mxu0
        %v1394 = vadd.f32 0.0, %v1393
        %v1395 = vpop.f32.mrb[0].mxu0
        %v1396 = vpop.f32.mrb[0].mxu0
        %v1397 = vadd.f32 0.0, %v1396
        %v1398 = vpop.f32.mrb[0].mxu0
        %1399 = vdwg.mxu0
        %v1400 = vrcp.pop %v1347
        %v1401 = vrcp.pop %v1350
        %v1402 = vmul.f32 %v1394, %v1400
        %v1403 = vmul.f32 %v1397, %v1401
        %v1404 = vpack.c.bf16 %v1403, %v1402
        %1406 = vrot.lane.b32.xlu0 %v1404, 96
        %v1407 = vpop.permute.xlu0 %1406
        %vm1409 = vcmask 1048320
        %1410 = vst.msk [vmem:[#allocation4] sm:$0xff] %vm1409, %v1407
        %v1411 = vld [vmem:[#allocation4] sm:$0xff]
        %v1412 = vld [vmem:[#allocation11] sm:$0xf]
        %v1413 = vld [vmem:[#allocation11 + $0x4] sm:$0xf]
        %v1414 = vld [vmem:[#allocation11 + $0x8] sm:$0xf]
        %v1415 = vld [vmem:[#allocation11 + $0xc] sm:$0xf]
        %v1416 = vld [vmem:[#allocation11 + $0x10] sm:$0xf]
        %v1417 = vld [vmem:[#allocation11 + $0x14] sm:$0xf]
        %v1418 = vld [vmem:[#allocation11 + $0x18] sm:$0xf]
        %v1419 = vld [vmem:[#allocation11 + $0x1c] sm:$0xf]
        %v1420 = vld [vmem:[#allocation11 + $0x20] sm:$0xf]
        %v1421 = vld [vmem:[#allocation11 + $0x24] sm:$0xf]
        %v1422 = vld [vmem:[#allocation11 + $0x28] sm:$0xf]
        %v1423 = vld [vmem:[#allocation11 + $0x2c] sm:$0xf]
        %v1424 = vld [vmem:[#allocation11 + $0x30] sm:$0xf]
        %v1425 = vld [vmem:[#allocation11 + $0x34] sm:$0xf]
        %v1426 = vld [vmem:[#allocation11 + $0x38] sm:$0xf]
        %v1427 = vld [vmem:[#allocation11 + $0x3c] sm:$0xf]
        %v1428 = vld [vmem:[%s5] sm:$0x1]
        %v1430 = vlaneseq
        %v1431 = vshrl.u32 %v1430, 7
        %v1432 = vsub.s32 0, %v1431
        %v1433 = vrot.slane %v1428, %v1432
        %v1451 = vunpack.c.l.b16 %v1412
        %v1452 = vunpack.c.l.b16 %v1413
        %v1453 = vunpack.c.l.b16 %v1414
        %v1454 = vunpack.c.l.b16 %v1415
        %v1455 = vunpack.c.l.b16 %v1416
        %v1456 = vunpack.c.l.b16 %v1417
        %v1457 = vunpack.c.l.b16 %v1418
        %v1458 = vunpack.c.l.b16 %v1419
        %v1459 = vunpack.c.l.b16 %v1420
        %v1460 = vunpack.c.l.b16 %v1421
        %v1461 = vunpack.c.l.b16 %v1422
        %v1462 = vunpack.c.l.b16 %v1423
        %v1463 = vunpack.c.l.b16 %v1424
        %v1464 = vunpack.c.l.b16 %v1425
        %v1465 = vunpack.c.l.b16 %v1426
        %v1466 = vunpack.c.l.b16 %v1427
        %v1467 = vpack.c.b16 %v1452, %v1451
        %v1468 = vpack.c.b16 %v1454, %v1453
        %v1469 = vpack.c.b16 %v1456, %v1455
        %v1470 = vpack.c.b16 %v1458, %v1457
        %v1471 = vpack.c.b16 %v1460, %v1459
        %v1472 = vpack.c.b16 %v1462, %v1461
        %v1473 = vpack.c.b16 %v1464, %v1463
        %v1474 = vpack.c.b16 %v1466, %v1465
        %1483 = vmatprep.subr.bf16.mxu0 0
        %1484 = vmatpush1.bf16.msra.mxu0 %v1467
        %1485 = vmatprep.subr.bf16.mxu0 0
        %1486 = vmatpush1.bf16.msra.mxu0 %v1468
        %1487 = vmatprep.subr.bf16.mxu0 0
        %1488 = vmatpush1.bf16.msra.mxu0 %v1469
        %1489 = vmatprep.subr.bf16.mxu0 0
        %1490 = vmatpush1.bf16.msra.mxu0 %v1470
        %1491 = vmatprep.subr.bf16.mxu0 0
        %1492 = vmatpush1.bf16.msra.mxu0 %v1471
        %1493 = vmatprep.subr.bf16.mxu0 0
        %1494 = vmatpush1.bf16.msra.mxu0 %v1472
        %1495 = vmatprep.subr.bf16.mxu0 0
        %1496 = vmatpush1.bf16.msra.mxu0 %v1473
        %1497 = vmatprep.subr.bf16.mxu0 0
        %1498 = vmatpush1.bf16.msra.mxu0 %v1474
        %1499 = vmatprep.subr.bf16.mxu0 0
        %1500 = vmatpush1.bf16.msra.mxu0 0
        %1501 = vmatprep.subr.bf16.mxu0 0
        %1502 = vmatpush1.bf16.msra.mxu0 0
        %1503 = vmatprep.subr.bf16.mxu0 0
        %1504 = vmatpush1.bf16.msra.mxu0 0
        %1505 = vmatprep.subr.bf16.mxu0 0
        %1506 = vmatpush1.bf16.msra.mxu0 0
        %1507 = vmatprep.subr.bf16.mxu0 0
        %1508 = vmatpush1.bf16.msra.mxu0 0
        %1509 = vmatprep.subr.bf16.mxu0 0
        %1510 = vmatpush1.bf16.msra.mxu0 0
        %1511 = vmatprep.subr.bf16.mxu0 0
        %1512 = vmatpush1.bf16.msra.mxu0 0
        %1513 = vmatprep.subr.bf16.mxu0 0
        %1514 = vmatpush1.bf16.msra.mxu0 0
        %1515 = vmatprep.mubr.bf16.mxu0 0
        %1516 = vmatmul.mubr.bf16.gmra.mrb[0].mxu0 %v1411
        %v1517 = vpop.f32.mrb[0].mxu0
        %v1518 = vadd.f32 %v1433, %v1517
        %v1519 = vpop.f32.mrb[0].mxu0
        %v1520 = vpop.f32.mrb[0].mxu0
        %v1521 = vadd.f32 %v1433, %v1520
        %v1522 = vpop.f32.mrb[0].mxu0
        %1523 = vdwg.mxu0
        %v1524 = vadd.f32 %v886, %v1518
        %v1525 = vadd.f32 %v887, %v1521
        %v1526 = vld [vmem:[%s6] sm:$0x1]
        %v1527 = vld [vmem:[%s7] sm:$0x1]
        %1528 = vadd.xlane.f32.xlu0 %v1524
        %v1529 = vpop.xlane.xlu0 %1528
        %1530 = vadd.xlane.f32.xlu0 %v1525
        %v1531 = vpop.xlane.xlu0 %1530
        %v1532 = vrcp.pop 128.0
        %v1533 = vmul.f32 %v1529, %v1532
        %v1534 = vmul.f32 %v1531, %v1532
        %v1535 = vsub.f32 %v1524, %v1533
        %v1536 = vsub.f32 %v1525, %v1534
        %v1537 = vmul.f32 %v1535, %v1535
        %v1538 = vmul.f32 %v1536, %v1536
        %1539 = vadd.xlane.f32.xlu0 %v1537
        %v1540 = vpop.xlane.xlu0 %1539
        %1541 = vadd.xlane.f32.xlu0 %v1538
        %v1542 = vpop.xlane.xlu0 %1541
        %v1543 = vmul.f32 %v1540, %v1532
        %v1544 = vmul.f32 %v1542, %v1532
        %v1545 = vadd.f32 %v1543, 1e-06
        %v1546 = vadd.f32 %v1544, 1e-06
        %v1547 = vrsqrt.pop %v1545
        %v1548 = vrsqrt.pop %v1546
        %v1549 = vmul.f32 %v1535, %v1547
        %v1550 = vmul.f32 %v1536, %v1548
        %v1552 = vlaneseq
        %v1553 = vshrl.u32 %v1552, 7
        %v1554 = vsub.s32 0, %v1553
        %v1555 = vrot.slane %v1526, %v1554
        %v1557 = vmul.f32 %v1549, %v1555
        %v1558 = vmul.f32 %v1550, %v1555
        %v1560 = vlaneseq
        %v1561 = vshrl.u32 %v1560, 7
        %v1562 = vsub.s32 0, %v1561
        %v1563 = vrot.slane %v1527, %v1562
        %v1565 = vadd.f32 %v1557, %v1563
        %v1566 = vadd.f32 %v1558, %v1563
        %v1567 = vpack.c.bf16 %v1566, %v1565
        %v1568 = vld [vmem:[#allocation13] sm:$0xff]
        %v1569 = vld [vmem:[#allocation13 + $0x8] sm:$0xff]
        %v1570 = vld [vmem:[#allocation13 + $0x10] sm:$0xff]
        %v1571 = vld [vmem:[#allocation13 + $0x18] sm:$0xff]
        %v1572 = vld [vmem:[#allocation13 + $0x20] sm:$0xff]
        %v1573 = vld [vmem:[#allocation13 + $0x28] sm:$0xff]
        %v1574 = vld [vmem:[#allocation13 + $0x30] sm:$0xff]
        %v1575 = vld [vmem:[#allocation13 + $0x38] sm:$0xff]
        %v1576 = vld [vmem:[#allocation13 + $0x40] sm:$0xff]
        %v1577 = vld [vmem:[#allocation13 + $0x48] sm:$0xff]
        %v1578 = vld [vmem:[#allocation13 + $0x50] sm:$0xff]
        %v1579 = vld [vmem:[#allocation13 + $0x58] sm:$0xff]
        %v1580 = vld [vmem:[#allocation13 + $0x60] sm:$0xff]
        %v1581 = vld [vmem:[#allocation13 + $0x68] sm:$0xff]
        %v1582 = vld [vmem:[#allocation13 + $0x70] sm:$0xff]
        %v1583 = vld [vmem:[#allocation13 + $0x78] sm:$0xff]
        %v1584 = vld [vmem:[%s9] sm:$0x3]
        %v1586 = vlaneseq
        %v1587 = vshrl.u32 %v1586, 7
        %v1588 = vsub.s32 0, %v1587
        %v1589 = vrot.slane %v1584, %v1588
        %v1590 = vlaneseq
        %v1591 = vshrl.u32 %v1590, 7
        %v1592 = vsub.s32 1, %v1591
        %v1593 = vrot.slane %v1584, %v1592
        %v1612 = vunpack.c.l.b16 %v1568
        %v1613 = vunpack.c.h.b16 %v1568
        %v1614 = vunpack.c.l.b16 %v1569
        %v1615 = vunpack.c.h.b16 %v1569
        %v1616 = vunpack.c.l.b16 %v1570
        %v1617 = vunpack.c.h.b16 %v1570
        %v1618 = vunpack.c.l.b16 %v1571
        %v1619 = vunpack.c.h.b16 %v1571
        %v1620 = vunpack.c.l.b16 %v1572
        %v1621 = vunpack.c.h.b16 %v1572
        %v1622 = vunpack.c.l.b16 %v1573
        %v1623 = vunpack.c.h.b16 %v1573
        %v1624 = vunpack.c.l.b16 %v1574
        %v1625 = vunpack.c.h.b16 %v1574
        %v1626 = vunpack.c.l.b16 %v1575
        %v1627 = vunpack.c.h.b16 %v1575
        %v1628 = vunpack.c.l.b16 %v1576
        %v1629 = vunpack.c.h.b16 %v1576
        %v1630 = vunpack.c.l.b16 %v1577
        %v1631 = vunpack.c.h.b16 %v1577
        %v1632 = vunpack.c.l.b16 %v1578
        %v1633 = vunpack.c.h.b16 %v1578
        %v1634 = vunpack.c.l.b16 %v1579
        %v1635 = vunpack.c.h.b16 %v1579
        %v1636 = vunpack.c.l.b16 %v1580
        %v1637 = vunpack.c.h.b16 %v1580
        %v1638 = vunpack.c.l.b16 %v1581
        %v1639 = vunpack.c.h.b16 %v1581
        %v1640 = vunpack.c.l.b16 %v1582
        %v1641 = vunpack.c.h.b16 %v1582
        %v1642 = vunpack.c.l.b16 %v1583
        %v1643 = vunpack.c.h.b16 %v1583
        %v1644 = vpack.c.b16 %v1614, %v1612
        %v1645 = vpack.c.b16 %v1615, %v1613
        %v1646 = vpack.c.b16 %v1618, %v1616
        %v1647 = vpack.c.b16 %v1619, %v1617
        %v1648 = vpack.c.b16 %v1622, %v1620
        %v1649 = vpack.c.b16 %v1623, %v1621
        %v1650 = vpack.c.b16 %v1626, %v1624
        %v1651 = vpack.c.b16 %v1627, %v1625
        %v1652 = vpack.c.b16 %v1630, %v1628
        %v1653 = vpack.c.b16 %v1631, %v1629
        %v1654 = vpack.c.b16 %v1634, %v1632
        %v1655 = vpack.c.b16 %v1635, %v1633
        %v1656 = vpack.c.b16 %v1638, %v1636
        %v1657 = vpack.c.b16 %v1639, %v1637
        %v1658 = vpack.c.b16 %v1642, %v1640
        %v1659 = vpack.c.b16 %v1643, %v1641
        %1676 = vmatprep.subr.bf16.mxu0 %v1645
        %1677 = vmatpush1.bf16.msra.mxu0 %v1644
        %1678 = vmatprep.subr.bf16.mxu0 %v1647
        %1679 = vmatpush1.bf16.msra.mxu0 %v1646
        %1680 = vmatprep.subr.bf16.mxu0 %v1649
        %1681 = vmatpush1.bf16.msra.mxu0 %v1648
        %1682 = vmatprep.subr.bf16.mxu0 %v1651
        %1683 = vmatpush1.bf16.msra.mxu0 %v1650
        %1684 = vmatprep.subr.bf16.mxu0 %v1653
        %1685 = vmatpush1.bf16.msra.mxu0 %v1652
        %1686 = vmatprep.subr.bf16.mxu0 %v1655
        %1687 = vmatpush1.bf16.msra.mxu0 %v1654
        %1688 = vmatprep.subr.bf16.mxu0 %v1657
        %1689 = vmatpush1.bf16.msra.mxu0 %v1656
        %1690 = vmatprep.subr.bf16.mxu0 %v1659
        %1691 = vmatpush1.bf16.msra.mxu0 %v1658
        %1692 = vmatprep.subr.bf16.mxu0 0
        %1693 = vmatpush1.bf16.msra.mxu0 0
        %1694 = vmatprep.subr.bf16.mxu0 0
        %1695 = vmatpush1.bf16.msra.mxu0 0
        %1696 = vmatprep.subr.bf16.mxu0 0
        %1697 = vmatpush1.bf16.msra.mxu0 0
        %1698 = vmatprep.subr.bf16.mxu0 0
        %1699 = vmatpush1.bf16.msra.mxu0 0
        %1700 = vmatprep.subr.bf16.mxu0 0
        %1701 = vmatpush1.bf16.msra.mxu0 0
        %1702 = vmatprep.subr.bf16.mxu0 0
        %1703 = vmatpush1.bf16.msra.mxu0 0
        %1704 = vmatprep.subr.bf16.mxu0 0
        %1705 = vmatpush1.bf16.msra.mxu0 0
        %1706 = vmatprep.subr.bf16.mxu0 0
        %1707 = vmatpush1.bf16.msra.mxu0 0
        %1708 = vmatprep.mubr.bf16.mxu0 0
        %1709 = vmatmul.mubr.bf16.gmra.mrb[0].mxu0 %v1567
        %v1710 = vpop.f32.mrb[0].mxu0
        %v1711 = vadd.f32 %v1589, %v1710
        %v1712 = vpop.f32.mrb[0].mxu0
        %v1713 = vadd.f32 %v1593, %v1712
        %v1714 = vpop.f32.mrb[0].mxu0
        %v1715 = vadd.f32 %v1589, %v1714
        %v1716 = vpop.f32.mrb[0].mxu0
        %v1717 = vadd.f32 %v1593, %v1716
        %1718 = vdwg.mxu0
        %v1719 = vmax.f32 %v1711, 0.0
        %v1720 = vmax.f32 %v1713, 0.0
        %v1721 = vmax.f32 %v1715, 0.0
        %v1722 = vmax.f32 %v1717, 0.0
        %v1723 = vpack.c.bf16 %v1721, %v1719
        %v1724 = vpack.c.bf16 %v1722, %v1720
        %v1725 = vld [vmem:[#allocation14] sm:$0xf]
        %v1726 = vld [vmem:[#allocation14 + $0x4] sm:$0xf]
        %v1727 = vld [vmem:[#allocation14 + $0x8] sm:$0xf]
        %v1728 = vld [vmem:[#allocation14 + $0xc] sm:$0xf]
        %v1729 = vld [vmem:[#allocation14 + $0x10] sm:$0xf]
        %v1730 = vld [vmem:[#allocation14 + $0x14] sm:$0xf]
        %v1731 = vld [vmem:[#allocation14 + $0x18] sm:$0xf]
        %v1732 = vld [vmem:[#allocation14 + $0x1c] sm:$0xf]
        %v1733 = vld [vmem:[#allocation14 + $0x20] sm:$0xf]
        %v1734 = vld [vmem:[#allocation14 + $0x24] sm:$0xf]
        %v1735 = vld [vmem:[#allocation14 + $0x28] sm:$0xf]
        %v1736 = vld [vmem:[#allocation14 + $0x2c] sm:$0xf]
        %v1737 = vld [vmem:[#allocation14 + $0x30] sm:$0xf]
        %v1738 = vld [vmem:[#allocation14 + $0x34] sm:$0xf]
        %v1739 = vld [vmem:[#allocation14 + $0x38] sm:$0xf]
        %v1740 = vld [vmem:[#allocation14 + $0x3c] sm:$0xf]
        %v1741 = vld [vmem:[#allocation14 + $0x40] sm:$0xf]
        %v1742 = vld [vmem:[#allocation14 + $0x44] sm:$0xf]
        %v1743 = vld [vmem:[#allocation14 + $0x48] sm:$0xf]
        %v1744 = vld [vmem:[#allocation14 + $0x4c] sm:$0xf]
        %v1745 = vld [vmem:[#allocation14 + $0x50] sm:$0xf]
        %v1746 = vld [vmem:[#allocation14 + $0x54] sm:$0xf]
        %v1747 = vld [vmem:[#allocation14 + $0x58] sm:$0xf]
        %v1748 = vld [vmem:[#allocation14 + $0x5c] sm:$0xf]
        %v1749 = vld [vmem:[#allocation14 + $0x60] sm:$0xf]
        %v1750 = vld [vmem:[#allocation14 + $0x64] sm:$0xf]
        %v1751 = vld [vmem:[#allocation14 + $0x68] sm:$0xf]
        %v1752 = vld [vmem:[#allocation14 + $0x6c] sm:$0xf]
        %v1753 = vld [vmem:[#allocation14 + $0x70] sm:$0xf]
        %v1754 = vld [vmem:[#allocation14 + $0x74] sm:$0xf]
        %v1755 = vld [vmem:[#allocation14 + $0x78] sm:$0xf]
        %v1756 = vld [vmem:[#allocation14 + $0x7c] sm:$0xf]
        %v1757 = vld [vmem:[%s11] sm:$0x1]
        %v1759 = vlaneseq
        %v1760 = vshrl.u32 %v1759, 7
        %v1761 = vsub.s32 0, %v1760
        %v1762 = vrot.slane %v1757, %v1761
        %v1796 = vunpack.c.l.b16 %v1725
        %v1797 = vunpack.c.l.b16 %v1726
        %v1798 = vunpack.c.l.b16 %v1727
        %v1799 = vunpack.c.l.b16 %v1728
        %v1800 = vunpack.c.l.b16 %v1729
        %v1801 = vunpack.c.l.b16 %v1730
        %v1802 = vunpack.c.l.b16 %v1731
        %v1803 = vunpack.c.l.b16 %v1732
        %v1804 = vunpack.c.l.b16 %v1733
        %v1805 = vunpack.c.l.b16 %v1734
        %v1806 = vunpack.c.l.b16 %v1735
        %v1807 = vunpack.c.l.b16 %v1736
        %v1808 = vunpack.c.l.b16 %v1737
        %v1809 = vunpack.c.l.b16 %v1738
        %v1810 = vunpack.c.l.b16 %v1739
        %v1811 = vunpack.c.l.b16 %v1740
        %v1812 = vunpack.c.l.b16 %v1741
        %v1813 = vunpack.c.l.b16 %v1742
        %v1814 = vunpack.c.l.b16 %v1743
        %v1815 = vunpack.c.l.b16 %v1744
        %v1816 = vunpack.c.l.b16 %v1745
        %v1817 = vunpack.c.l.b16 %v1746
        %v1818 = vunpack.c.l.b16 %v1747
        %v1819 = vunpack.c.l.b16 %v1748
        %v1820 = vunpack.c.l.b16 %v1749
        %v1821 = vunpack.c.l.b16 %v1750
        %v1822 = vunpack.c.l.b16 %v1751
        %v1823 = vunpack.c.l.b16 %v1752
        %v1824 = vunpack.c.l.b16 %v1753
        %v1825 = vunpack.c.l.b16 %v1754
        %v1826 = vunpack.c.l.b16 %v1755
        %v1827 = vunpack.c.l.b16 %v1756
        %v1828 = vpack.c.b16 %v1797, %v1796
        %v1829 = vpack.c.b16 %v1799, %v1798
        %v1830 = vpack.c.b16 %v1801, %v1800
        %v1831 = vpack.c.b16 %v1803, %v1802
        %v1832 = vpack.c.b16 %v1805, %v1804
        %v1833 = vpack.c.b16 %v1807, %v1806
        %v1834 = vpack.c.b16 %v1809, %v1808
        %v1835 = vpack.c.b16 %v1811, %v1810
        %v1836 = vpack.c.b16 %v1813, %v1812
        %v1837 = vpack.c.b16 %v1815, %v1814
        %v1838 = vpack.c.b16 %v1817, %v1816
        %v1839 = vpack.c.b16 %v1819, %v1818
        %v1840 = vpack.c.b16 %v1821, %v1820
        %v1841 = vpack.c.b16 %v1823, %v1822
        %v1842 = vpack.c.b16 %v1825, %v1824
        %v1843 = vpack.c.b16 %v1827, %v1826
        %1860 = vmatprep.subr.bf16.mxu0 0
        %1861 = vmatpush1.bf16.msra.mxu0 %v1828
        %1862 = vmatprep.subr.bf16.mxu0 0
        %1863 = vmatpush1.bf16.msra.mxu0 %v1829
        %1864 = vmatprep.subr.bf16.mxu0 0
        %1865 = vmatpush1.bf16.msra.mxu0 %v1830
        %1866 = vmatprep.subr.bf16.mxu0 0
        %1867 = vmatpush1.bf16.msra.mxu0 %v1831
        %1868 = vmatprep.subr.bf16.mxu0 0
        %1869 = vmatpush1.bf16.msra.mxu0 %v1832
        %1870 = vmatprep.subr.bf16.mxu0 0
        %1871 = vmatpush1.bf16.msra.mxu0 %v1833
        %1872 = vmatprep.subr.bf16.mxu0 0
        %1873 = vmatpush1.bf16.msra.mxu0 %v1834
        %1874 = vmatprep.subr.bf16.mxu0 0
        %1875 = vmatpush1.bf16.msra.mxu0 %v1835
        %1876 = vmatprep.subr.bf16.mxu0 0
        %1877 = vmatpush1.bf16.msra.mxu0 %v1836
        %1878 = vmatprep.subr.bf16.mxu0 0
        %1879 = vmatpush1.bf16.msra.mxu0 %v1837
        %1880 = vmatprep.subr.bf16.mxu0 0
        %1881 = vmatpush1.bf16.msra.mxu0 %v1838
        %1882 = vmatprep.subr.bf16.mxu0 0
        %1883 = vmatpush1.bf16.msra.mxu0 %v1839
        %1884 = vmatprep.subr.bf16.mxu0 0
        %1885 = vmatpush1.bf16.msra.mxu0 %v1840
        %1886 = vmatprep.subr.bf16.mxu0 0
        %1887 = vmatpush1.bf16.msra.mxu0 %v1841
        %1888 = vmatprep.subr.bf16.mxu0 0
        %1889 = vmatpush1.bf16.msra.mxu0 %v1842
        %1890 = vmatprep.subr.bf16.mxu0 0
        %1891 = vmatpush1.bf16.msra.mxu0 %v1843
        %1892 = vmatprep.mubr.bf16.mxu0 %v1724
        %1893 = vmatmul.mubr.bf16.gmra.mrb[0].mxu0 %v1723
        %v1894 = vpop.f32.mrb[0].mxu0
        %v1895 = vadd.f32 %v1762, %v1894
        %v1896 = vpop.f32.mrb[0].mxu0
        %v1897 = vpop.f32.mrb[0].mxu0
        %v1898 = vadd.f32 %v1762, %v1897
        %v1899 = vpop.f32.mrb[0].mxu0
        %1900 = vdwg.mxu0
        %v1901 = vadd.f32 %v1565, %v1895
        %v1902 = vadd.f32 %v1566, %v1898
        %v1903 = vld [vmem:[%s12] sm:$0x1]
        %v1904 = vld [vmem:[%s13] sm:$0x1]
        %1905 = vadd.xlane.f32.xlu0 %v1901
        %v1906 = vpop.xlane.xlu0 %1905
        %1907 = vadd.xlane.f32.xlu0 %v1902
        %v1908 = vpop.xlane.xlu0 %1907
        %v1909 = vmul.f32 %v1906, %v1532
        %v1910 = vmul.f32 %v1908, %v1532
        %v1911 = vsub.f32 %v1901, %v1909
        %v1912 = vsub.f32 %v1902, %v1910
        %v1913 = vmul.f32 %v1911, %v1911
        %v1914 = vmul.f32 %v1912, %v1912
        %1915 = vadd.xlane.f32.xlu0 %v1913
        %v1916 = vpop.xlane.xlu0 %1915
        %1917 = vadd.xlane.f32.xlu0 %v1914
        %v1918 = vpop.xlane.xlu0 %1917
        %v1919 = vmul.f32 %v1916, %v1532
        %v1920 = vmul.f32 %v1918, %v1532
        %v1921 = vadd.f32 %v1919, 1e-06
        %v1922 = vadd.f32 %v1920, 1e-06
        %v1923 = vrsqrt.pop %v1921
        %v1924 = vrsqrt.pop %v1922
        %v1925 = vmul.f32 %v1911, %v1923
        %v1926 = vmul.f32 %v1912, %v1924
        %v1928 = vlaneseq
        %v1929 = vshrl.u32 %v1928, 7
        %v1930 = vsub.s32 0, %v1929
        %v1931 = vrot.slane %v1903, %v1930
        %v1933 = vmul.f32 %v1925, %v1931
        %v1934 = vmul.f32 %v1926, %v1931
        %v1936 = vlaneseq
        %v1937 = vshrl.u32 %v1936, 7
        %v1938 = vsub.s32 0, %v1937
        %v1939 = vrot.slane %v1904, %v1938
        %v1941 = vadd.f32 %v1933, %v1939
        %v1942 = vadd.f32 %v1934, %v1939
        %1943 = vst [vmem:[%s601] sm:$0xff] %v1941
        %1944 = vst [vmem:[%s601 + $0x8] sm:$0xff] %v1942
        %s1945 = sand.u32 %s364, 1
        %s1946 = scalar_lea.sflag [#allocation7], %s1945
        %s1947 = sand.u32 %s364, 1
        %s1948 = smul.addr %s1947, 16
        %s1949 = scalar_lea.vmem [#allocation16], %s1948
        // Predicated region
        $region105: #{tpu_custom_call.1} parent=75 // pred_check
          %p1950 = pneg %p374
        $region106: #{tpu_custom_call.1} parent=75 // pred_check_branch
          %1952 = sbr.rel (%p1950) target = $region108
        $region107: #{tpu_custom_call.1} parent=75 // pred_region
          %s1953 = smul.u32 2, %s41
          %s1955 = ssub.s32 256, 256
          %1956 = vsyncadd %s1946, %s1955
          %s1957 = smul.addr %s40, 2
          %s1958 = sadd.s32 %s1953, %s1957
          %s1959 = smul.addr %s1958, 128
          %s1960 = scalar_lea.hbm %s14, %s1959
          %s1961 = sshll.u32 %s1949, 4
          %s1962 = int_to_ptr.vmem [resolvable:$true] %s1961
          %1967 = dma.vmem_to_hbm [thread:$0]  %s1962, 256, %s1960, %s1946, 128, 128, 8
        $region108: #{tpu_custom_call.1} parent=75 // pred_fallthru
          _
      $region76: #{tpu_custom_call.1} parent=5 // pred_fallthru
        _
      %p1968 = scmp.le.s32.totalorder 2, %s31
      // Predicated region
      $region109: #{tpu_custom_call.1} parent=5 // pred_check
        %p1969 = pneg %p1968
      $region110: #{tpu_custom_call.1} parent=5 // pred_check_branch
        %1971 = sbr.rel (%p1969) target = $region112
      $region111: #{tpu_custom_call.1} parent=5 // pred_region
        %s1972 = ssub.s32 %s31, 2
        // Predicated region
        $region113: #{tpu_custom_call.1} parent=111 // pred_check
          %p1973 = pneg %p380
        $region114: #{tpu_custom_call.1} parent=111 // pred_check_branch
          %1975 = sbr.rel (%p1973) target = $region116
        $region115: #{tpu_custom_call.1} parent=111 // pred_region
          %s1976 = sand.u32 %s365, 1
          %s1977 = scalar_lea.sflag [#allocation7], %s1976
          %s1978 = sand.u32 %s365, 1
          %s1979 = smul.addr %s1978, 16
          %s1980 = scalar_lea.vmem [#allocation16], %s1979
          %1981 = dma.done %s1977, 256
        $region116: #{tpu_custom_call.1} parent=111 // pred_fallthru
          _
      $region112: #{tpu_custom_call.1} parent=5 // pred_fallthru
        _
    $region6: #{tpu_custom_call.1} parent=1 // loop_footer
      %s35 = sadd.s32 1, %s31
    $region7: #{tpu_custom_call.1} parent=1 // loop_footer_branch
      %30 = sbr.rel target = $region3
    $region8: #{tpu_custom_call.1} parent=1 // loop_exit
      _
    %1982 = vsyncpa [#allocation6], 1
    %s1983 = scalar_lea.sflag [#allocation6], 1
    %1984 = vsyncpa %s1983, 1
    %1985 = vsyncpa [#allocation9], 1
    %s1986 = scalar_lea.sflag [#allocation9], 1
    %1987 = vsyncpa %s1986, 1
    %1988 = vsyncpa [#allocation12], 1
    %1989 = vsyncpa [#allocation15], 1
    %1990 = vsyncpa [#allocation7], 1
    %s1991 = scalar_lea.sflag [#allocation7], 1
    %1992 = vsyncpa %s1991, 1

</llo_original>
